<compile_context>
chip_gen: v6e
topology: v6e:2x2x1
jax: 0.10.0
libtpu: 0.0.40
codegen_flags: <defaults>
</compile_context>

<pallas_src>
import math
from functools import partial

import jax
import jax.numpy as jnp
from jax import lax
from jax.experimental import pallas as pl
from jax.experimental.pallas import tpu as pltpu

EPS = 1e-6
NEG_FILL = -10000.0


# ----------------------------- in-kernel helpers ----------------------------

def _layer_norm(x, alpha, bias):
    d = x.shape[-1]
    mean = jnp.mean(x, axis=-1, keepdims=True)
    xc = x - mean
    # torch.std default is unbiased (divisor N-1); eps added to std, not var.
    var = jnp.sum(xc * xc, axis=-1, keepdims=True) / (d - 1)
    std = jnp.sqrt(var)
    return alpha * xc / (EPS + std) + bias


def _mha(q, k, v, neg_mask, wo, bo, num_heads, dk):
    """Multi-head attention with the output projection folded into the
    per-head accumulation:   sum_h softmax(q_h @ k_h^T) @ (v_h @ Wo_h) + bo.
    q is pre-scaled by 1/sqrt(dk).  No lane-concatenate of head outputs.
    q/k/v: (S*, D) f32;  wo: (D, D) bf16;  bo: (1, D) f32;  neg_mask bool."""
    Sq, D = q.shape
    q_bf = q.astype(jnp.bfloat16)
    k_bf = k.astype(jnp.bfloat16)
    v_bf = v.astype(jnp.bfloat16)
    out = jnp.zeros((Sq, D), jnp.float32)
    for h in range(num_heads):
        sl = slice(h * dk, (h + 1) * dk)
        s = lax.dot_general(q_bf[:, sl], k_bf[:, sl],
                            (((1,), (1,)), ((), ())),
                            preferred_element_type=jnp.float32)
        s = jnp.where(neg_mask, NEG_FILL, s)
        s = s - jnp.max(s, axis=-1, keepdims=True)
        p = jnp.exp(s)
        p = p / jnp.sum(p, axis=-1, keepdims=True)          # exact softmax
        vo = jnp.dot(v_bf[:, sl], wo[sl, :], preferred_element_type=jnp.float32)
        out = out + jnp.dot(p.astype(jnp.bfloat16), vo.astype(jnp.bfloat16),
                            preferred_element_type=jnp.float32)
    return out + bo


# ----------------------------- fused decoder kernel -------------------------

def _decoder_kernel(ln_ref, x_ref, enc_ref, tgtm_ref, srcm_ref,
                    swqkv_ref, sbqkv_ref, swo_ref, sbo_ref,
                    cwq_ref, cbq_ref, cwkv_ref, cbkv_ref, cwo_ref, cbo_ref,
                    fw1_ref, fb1_ref, fw2_ref, fb2_ref,
                    o_ref, x_scr, *, num_layers, num_heads):
    l = pl.program_id(1)
    S_tgt, D = x_ref.shape
    S_src = enc_ref.shape[0]
    dk = D // num_heads
    scale = 1.0 / math.sqrt(dk)

    # load the fresh input into the carried activation at the first layer
    @pl.when(l == 0)
    def _():
        x_scr[...] = x_ref[...]

    x = x_scr[...]                                           # (S_tgt, D) f32
    enc_bf = enc_ref[...].astype(jnp.bfloat16)               # (S_src, D)
    tgt_neg = tgtm_ref[...] == 0.0                           # (S_tgt, S_tgt)
    src_neg = srcm_ref[...] == 0.0                           # (1, S_src), broadcasts

    # per-layer LayerNorm scalars (SMEM, dynamic index by layer)
    a_self = ln_ref[6 * l + 0]
    b_self = ln_ref[6 * l + 1]
    # ln_ref[6*l+2], ln_ref[6*l+3] are norm_cross params: the reference
    # computes norm_cross(x) and discards the result, so it is skipped.
    a_ffn = ln_ref[6 * l + 4]
    b_ffn = ln_ref[6 * l + 5]

    # ---- self attention (pre-norm), fused QKV projection ----
    xn = _layer_norm(x, a_self, b_self).astype(jnp.bfloat16)
    qkv = (jnp.dot(xn, swqkv_ref[...], preferred_element_type=jnp.float32)
           + sbqkv_ref[...])                                 # (S_tgt, 3D) f32
    q = qkv[:, :D] * scale                                   # scale q once
    x = x + _mha(q, qkv[:, D:2 * D], qkv[:, 2 * D:], tgt_neg,
                 swo_ref[...], sbo_ref[...], num_heads, dk)

    # ---- cross attention: query is the UN-normalized residual x (reference
    #      behavior, reproduced); K/V from encoder output, fused KV proj ----
    q = (jnp.dot(x.astype(jnp.bfloat16), cwq_ref[...],
                 preferred_element_type=jnp.float32) + cbq_ref[...]) * scale
    kv = (jnp.dot(enc_bf, cwkv_ref[...], preferred_element_type=jnp.float32)
          + cbkv_ref[...])                                   # (S_src, 2D) f32
    x = x + _mha(q, kv[:, :D], kv[:, D:], src_neg,
                 cwo_ref[...], cbo_ref[...], num_heads, dk)

    # ---- feed-forward (pre-norm) ----
    xn = _layer_norm(x, a_ffn, b_ffn).astype(jnp.bfloat16)
    h = jnp.maximum(
        jnp.dot(xn, fw1_ref[...], preferred_element_type=jnp.float32)
        + fb1_ref[...], 0.0)
    x = x + (jnp.dot(h.astype(jnp.bfloat16), fw2_ref[...],
                     preferred_element_type=jnp.float32) + fb2_ref[...])

    x_scr[...] = x

    # final LayerNorm + output store on the last layer only
    @pl.when(l == num_layers - 1)
    def _():
        a_fin = ln_ref[6 * num_layers + 0]
        b_fin = ln_ref[6 * num_layers + 1]
        o_ref[...] = _layer_norm(x, a_fin, b_fin)


# ----------------------------- wrapper ---------------------------------------

def decoder_forward(params, x, encoder_output, src_mask, tgt_mask, *, num_heads):
    """x: (B, S_tgt, D), encoder_output: (B, S_src, D),
       src_mask: (B, 1, 1, S_src), tgt_mask: (B, 1, S_tgt, S_tgt)."""
    B, S_tgt, D = x.shape
    S_src = encoder_output.shape[1]
    L = int(params["num_layers"])
    d_ff = int(params["d_ff"])

    # TODO(synk): if tgt_mask is known causal, generate it in-kernel with
    # broadcasted_iota instead of DMA-ing a (B, S_tgt, S_tgt) mask.
    tgtm = tgt_mask.reshape(B, S_tgt, S_tgt).astype(jnp.float32)
    srcm = src_mask.reshape(B, 1, S_src).astype(jnp.float32)

    batch_map = lambda b, l: (b, 0, 0)   # constant in l -> no re-DMA per layer
    layer_map = lambda b, l: (l, 0, 0)   # per-layer streamed weights

    kernel = partial(_decoder_kernel, num_layers=L, num_heads=num_heads)

    # VMEM budget: one layer of double-buffered bf16 weights + f32 activations.
    layer_w_bytes = 2 * (8 * D * D + 2 * D * d_ff)
    act_bytes = 4 * (8 * S_tgt * D + 4 * S_src * D
                     + 3 * S_tgt * S_tgt + 2 * S_tgt * S_src
                     + 2 * S_tgt * max(3 * D, d_ff))
    vmem_limit = int(max(32 << 20, min(64 << 20,
                                       2 * layer_w_bytes + act_bytes + (4 << 20))))

    flops_layer = (2 * S_tgt * D * 3 * D                    # self QKV
                   + 2 * S_tgt * S_tgt * D                  # self scores
                   + 2 * S_tgt * D * D                      # self v@Wo
                   + 2 * num_heads * S_tgt * S_tgt * D      # self p@(v@Wo)
                   + 2 * S_tgt * D * D                      # cross q
                   + 2 * S_src * D * 2 * D                  # cross KV
                   + 2 * S_tgt * S_src * D                  # cross scores
                   + 2 * S_src * D * D                      # cross v@Wo
                   + 2 * num_heads * S_tgt * S_src * D      # cross p@(v@Wo)
                   + 4 * S_tgt * D * d_ff)                  # FFN
    cost = pl.CostEstimate(
        flops=int(B * L * flops_layer),
        transcendentals=int(B * L * num_heads * (S_tgt * S_tgt + S_tgt * S_src)),
        bytes_accessed=int(B * L * layer_w_bytes
                           + B * 4 * (2 * S_tgt * D + S_src * D
                                      + S_tgt * S_tgt + S_src)),
    )

    return pl.pallas_call(
        kernel,
        out_shape=jax.ShapeDtypeStruct((B, S_tgt, D), jnp.float32),
        grid=(B, L),
        in_specs=[
            pl.BlockSpec(memory_space=pltpu.MemorySpace.SMEM),   # LN scalars
            pl.BlockSpec((None, S_tgt, D), batch_map),           # x
            pl.BlockSpec((None, S_src, D), batch_map),           # encoder out
            pl.BlockSpec((None, S_tgt, S_tgt), batch_map),       # tgt mask
            pl.BlockSpec((None, 1, S_src), batch_map),           # src mask
            # per-layer streamed weights (bf16) / biases (f32)
            pl.BlockSpec((None, D, 3 * D), layer_map),           # self wqkv
            pl.BlockSpec((None, 1, 3 * D), layer_map),           # self bqkv
            pl.BlockSpec((None, D, D), layer_map),               # self wo
            pl.BlockSpec((None, 1, D), layer_map),               # self bo
            pl.BlockSpec((None, D, D), layer_map),               # cross wq
            pl.BlockSpec((None, 1, D), layer_map),               # cross bq
            pl.BlockSpec((None, D, 2 * D), layer_map),           # cross wkv
            pl.BlockSpec((None, 1, 2 * D), layer_map),           # cross bkv
            pl.BlockSpec((None, D, D), layer_map),               # cross wo
            pl.BlockSpec((None, 1, D), layer_map),               # cross bo
            pl.BlockSpec((None, D, d_ff), layer_map),            # ffn w1
            pl.BlockSpec((None, 1, d_ff), layer_map),            # ffn b1
            pl.BlockSpec((None, d_ff, D), layer_map),            # ffn w2
            pl.BlockSpec((None, 1, D), layer_map),               # ffn b2
        ],
        out_specs=pl.BlockSpec((None, S_tgt, D), batch_map),
        scratch_shapes=[pltpu.VMEM((S_tgt, D), jnp.float32)],    # carried x
        compiler_params=pltpu.CompilerParams(
            dimension_semantics=("parallel", "arbitrary"),
            vmem_limit_bytes=vmem_limit),
        cost_estimate=cost,
    )(
        params["ln"], x, encoder_output, tgtm, srcm,
        params["self_wqkv"], params["self_bqkv"], params["self_wo"], params["self_bo"],
        params["cross_wq"], params["cross_bq"], params["cross_wkv"], params["cross_bkv"],
        params["cross_wo"], params["cross_bo"],
        params["ffn_w1"], params["ffn_b1"], params["ffn_w2"], params["ffn_b2"],
    )


# ----------------------------- parameter init -------------------------------

def init_decoder_params(key, *, dim_model, num_layers, num_heads, d_ff):
    D = dim_model
    keys = iter(jax.random.split(key, num_layers * 12 + 4))

    def lin(k, fan_in, fan_out):
        # nn.Linear default init: U(-1/sqrt(fan_in), 1/sqrt(fan_in))
        limit = 1.0 / math.sqrt(fan_in)
        kw, kb = jax.random.split(k)
        w = jax.random.uniform(kw, (fan_in, fan_out), jnp.float32, -limit, limit)
        b = jax.random.uniform(kb, (fan_out,), jnp.float32, -limit, limit)
        return w, b

    self_wqkv, self_bqkv, self_wo, self_bo = [], [], [], []
    cross_wq, cross_bq, cross_wkv, cross_bkv, cross_wo, cross_bo = [], [], [], [], [], []
    ffn_w1, ffn_b1, ffn_w2, ffn_b2 = [], [], [], []
    ln_vals = []

    for _ in range(num_layers):
        wq, bq = lin(next(keys), D, D)
        wk, bk = lin(next(keys), D, D)
        wv, bv = lin(next(keys), D, D)
        wo, bo = lin(next(keys), D, D)
        self_wqkv.append(jnp.concatenate([wq, wk, wv], axis=1))
        self_bqkv.append(jnp.concatenate([bq, bk, bv])[None, :])
        self_wo.append(wo)
        self_bo.append(bo[None, :])

        wq, bq = lin(next(keys), D, D)
        wk, bk = lin(next(keys), D, D)
        wv, bv = lin(next(keys), D, D)
        wo, bo = lin(next(keys), D, D)
        cross_wq.append(wq)
        cross_bq.append(bq[None, :])
        cross_wkv.append(jnp.concatenate([wk, wv], axis=1))
        cross_bkv.append(jnp.concatenate([bk, bv])[None, :])
        cross_wo.append(wo)
        cross_bo.append(bo[None, :])

        w1, b1 = lin(next(keys), D, d_ff)
        w2, b2 = lin(next(keys), d_ff, D)
        ffn_w1.append(w1); ffn_b1.append(b1[None, :])
        ffn_w2.append(w2); ffn_b2.append(b2[None, :])

        # [a_self, b_self, a_cross, b_cross, a_ffn, b_ffn]
        ln_vals.extend([1.0, 0.0, 1.0, 0.0, 1.0, 0.0])

    ln_vals.extend([1.0, 0.0])  # final LayerNorm (alpha, bias)

    stack_w = lambda xs: jnp.stack(xs, axis=0).astype(jnp.bfloat16)  # weights bf16
    stack_b = lambda xs: jnp.stack(xs, axis=0).astype(jnp.float32)   # biases  f32
    return {
        "num_layers": num_layers, "d_ff": d_ff, "dim_model": D,
        "ln": jnp.asarray(ln_vals, jnp.float32),
        "self_wqkv": stack_w(self_wqkv), "self_bqkv": stack_b(self_bqkv),
        "self_wo": stack_w(self_wo), "self_bo": stack_b(self_bo),
        "cross_wq": stack_w(cross_wq), "cross_bq": stack_b(cross_bq),
        "cross_wkv": stack_w(cross_wkv), "cross_bkv": stack_b(cross_bkv),
        "cross_wo": stack_w(cross_wo), "cross_bo": stack_b(cross_bo),
        "ffn_w1": stack_w(ffn_w1), "ffn_b1": stack_b(ffn_b1),
        "ffn_w2": stack_w(ffn_w2), "ffn_b2": stack_b(ffn_b2),
    }


# ----------------------------- main ------------------------------------------

if __name__ == "__main__":
    B = 2        # divisible by 2 -> both v7x TensorCores busy on the parallel axis
    DIM = 32
    HEADS = 4
    LAYERS = 2
    DFF = 64
    S_TGT = 8
    S_SRC = 16

    key = jax.random.PRNGKey(0)
    k_param, k_x, k_enc = jax.random.split(key, 3)

    params = init_decoder_params(
        k_param, dim_model=DIM, num_layers=LAYERS, num_heads=HEADS, d_ff=DFF)

    x = jax.random.normal(k_x, (B, S_TGT, DIM), jnp.float32)       # decoder input
    enc = jax.random.normal(k_enc, (B, S_SRC, DIM), jnp.float32)   # encoder output

    # masks: nonzero => attend; zero => masked with -10000 before softmax
    src_mask = jnp.ones((B, 1, 1, S_SRC), jnp.float32)
    tgt_mask = jnp.broadcast_to(
        jnp.tril(jnp.ones((S_TGT, S_TGT), jnp.float32))[None, None, :, :],
        (B, 1, S_TGT, S_TGT))

    out = decoder_forward(params, x, enc, src_mask, tgt_mask, num_heads=HEADS)
    out = jax.block_until_ready(out)

    assert out.shape == (B, S_TGT, DIM), out.shape
    assert bool(jnp.all(jnp.isfinite(out)))
    print("KERNEL_OK")
</pallas_src>

<mosaic_0001>
module attributes {stable_mosaic.version = 11 : i64} {
  func.func @_decoder_kernel(%arg0: i32, %arg1: i32, %arg2: memref<14xf32, #tpu.memory_space<smem>>, %arg3: memref<1x8x32xf32, #tpu.memory_space<vmem>>, %arg4: memref<1x16x32xf32, #tpu.memory_space<vmem>>, %arg5: memref<1x8x8xf32, #tpu.memory_space<vmem>>, %arg6: memref<1x1x16xf32, #tpu.memory_space<vmem>>, %arg7: memref<1x32x96xbf16, #tpu.memory_space<vmem>>, %arg8: memref<1x1x96xf32, #tpu.memory_space<vmem>>, %arg9: memref<1x32x32xbf16, #tpu.memory_space<vmem>>, %arg10: memref<1x1x32xf32, #tpu.memory_space<vmem>>, %arg11: memref<1x32x32xbf16, #tpu.memory_space<vmem>>, %arg12: memref<1x1x32xf32, #tpu.memory_space<vmem>>, %arg13: memref<1x32x64xbf16, #tpu.memory_space<vmem>>, %arg14: memref<1x1x64xf32, #tpu.memory_space<vmem>>, %arg15: memref<1x32x32xbf16, #tpu.memory_space<vmem>>, %arg16: memref<1x1x32xf32, #tpu.memory_space<vmem>>, %arg17: memref<1x32x64xbf16, #tpu.memory_space<vmem>>, %arg18: memref<1x1x64xf32, #tpu.memory_space<vmem>>, %arg19: memref<1x64x32xbf16, #tpu.memory_space<vmem>>, %arg20: memref<1x1x32xf32, #tpu.memory_space<vmem>>, %arg21: memref<1x8x32xf32, #tpu.memory_space<vmem>>, %arg22: memref<8x32xf32, #tpu.memory_space<vmem>>) attributes {dimension_semantics = [#tpu.dimension_semantics<parallel>, #tpu.dimension_semantics<arbitrary>], iteration_bounds = array<i64: 2, 2>, scalar_prefetch = 0 : i64, scratch_operands = 1 : i64, tpu.core_type = #tpu.core_type<tc>, window_params = [{transform_indices = @transform_0, window_bounds = array<i64: 14>}, {transform_indices = @transform_1, window_bounds = array<i64: 1, 8, 32>}, {transform_indices = @transform_2, window_bounds = array<i64: 1, 16, 32>}, {transform_indices = @transform_3, window_bounds = array<i64: 1, 8, 8>}, {transform_indices = @transform_4, window_bounds = array<i64: 1, 1, 16>}, {transform_indices = @transform_5, window_bounds = array<i64: 1, 32, 96>}, {transform_indices = @transform_6, window_bounds = array<i64: 1, 1, 96>}, {transform_indices = @transform_7, window_bounds = array<i64: 1, 32, 32>}, {transform_indices = @transform_8, window_bounds = array<i64: 1, 1, 32>}, {transform_indices = @transform_9, window_bounds = array<i64: 1, 32, 32>}, {transform_indices = @transform_10, window_bounds = array<i64: 1, 1, 32>}, {transform_indices = @transform_11, window_bounds = array<i64: 1, 32, 64>}, {transform_indices = @transform_12, window_bounds = array<i64: 1, 1, 64>}, {transform_indices = @transform_13, window_bounds = array<i64: 1, 32, 32>}, {transform_indices = @transform_14, window_bounds = array<i64: 1, 1, 32>}, {transform_indices = @transform_15, window_bounds = array<i64: 1, 32, 64>}, {transform_indices = @transform_16, window_bounds = array<i64: 1, 1, 64>}, {transform_indices = @transform_17, window_bounds = array<i64: 1, 64, 32>}, {transform_indices = @transform_18, window_bounds = array<i64: 1, 1, 32>}, {transform_indices = @transform_19, window_bounds = array<i64: 1, 8, 32>}]} {
    %c0_i32 = arith.constant 0 : i32
    %0 = arith.cmpi eq, %arg1, %c0_i32 : i32
    %1 = arith.extui %0 : i1 to i32
    %c0_i32_0 = arith.constant 0 : i32
    %2 = arith.cmpi ne, %1, %c0_i32_0 : i32
    scf.if %2 {
      %c0_130 = arith.constant 0 : index
      %c0_131 = arith.constant 0 : index
      %c0_132 = arith.constant 0 : index
      %324 = vector.load %arg3[%c0_130, %c0_131, %c0_132] : memref<1x8x32xf32, #tpu.memory_space<vmem>>, vector<1x8x32xf32>
      %325 = vector.shape_cast %324 : vector<1x8x32xf32> to vector<8x32xf32>
      %c0_133 = arith.constant 0 : index
      %c0_134 = arith.constant 0 : index
      %326 = vector.load %arg22[%c0_133, %c0_134] : memref<8x32xf32, #tpu.memory_space<vmem>>, vector<8x32xf32>
      tpu.vector_store %arg22[%c0_133, %c0_134], %325 {strides = array<i32>} : memref<8x32xf32, #tpu.memory_space<vmem>>, vector<8x32xf32>,
    } else {
    }
    %c0 = arith.constant 0 : index
    %c0_1 = arith.constant 0 : index
    %3 = vector.load %arg22[%c0, %c0_1] : memref<8x32xf32, #tpu.memory_space<vmem>>, vector<8x32xf32>
    %c0_2 = arith.constant 0 : index
    %c0_3 = arith.constant 0 : index
    %c0_4 = arith.constant 0 : index
    %4 = vector.load %arg4[%c0_2, %c0_3, %c0_4] : memref<1x16x32xf32, #tpu.memory_space<vmem>>, vector<1x16x32xf32>
    %5 = vector.shape_cast %4 : vector<1x16x32xf32> to vector<16x32xf32>
    %6 = arith.truncf %5 : vector<16x32xf32> to vector<16x32xbf16>
    %c0_5 = arith.constant 0 : index
    %c0_6 = arith.constant 0 : index
    %c0_7 = arith.constant 0 : index
    %7 = vector.load %arg5[%c0_5, %c0_6, %c0_7] : memref<1x8x8xf32, #tpu.memory_space<vmem>>, vector<1x8x8xf32>
    %8 = vector.shape_cast %7 : vector<1x8x8xf32> to vector<8x8xf32>
    %cst = arith.constant 0.000000e+00 : f32
    %9 = vector.broadcast %cst : f32 to vector<8x8xf32>
    %10 = arith.cmpf oeq, %8, %9 : vector<8x8xf32>
    %c0_8 = arith.constant 0 : index
    %c0_9 = arith.constant 0 : index
    %c0_10 = arith.constant 0 : index
    %11 = vector.load %arg6[%c0_8, %c0_9, %c0_10] : memref<1x1x16xf32, #tpu.memory_space<vmem>>, vector<1x1x16xf32>
    %12 = vector.shape_cast %11 : vector<1x1x16xf32> to vector<1x16xf32>
    %cst_11 = arith.constant 0.000000e+00 : f32
    %13 = vector.broadcast %cst_11 : f32 to vector<1x16xf32>
    %14 = arith.cmpf oeq, %12, %13 : vector<1x16xf32>
    %c6_i32 = arith.constant 6 : i32
    %15 = arith.muli %c6_i32, %arg1 : i32
    %c0_i32_12 = arith.constant 0 : i32
    %16 = arith.addi %15, %c0_i32_12 : i32
    %17 = arith.index_cast %16 : i32 to index
    %18 = memref.load %arg2[%17] : memref<14xf32, #tpu.memory_space<smem>>
    %c6_i32_13 = arith.constant 6 : i32
    %19 = arith.muli %c6_i32_13, %arg1 : i32
    %c1_i32 = arith.constant 1 : i32
    %20 = arith.addi %19, %c1_i32 : i32
    %21 = arith.index_cast %20 : i32 to index
    %22 = memref.load %arg2[%21] : memref<14xf32, #tpu.memory_space<smem>>
    %c6_i32_14 = arith.constant 6 : i32
    %23 = arith.muli %c6_i32_14, %arg1 : i32
    %c4_i32 = arith.constant 4 : i32
    %24 = arith.addi %23, %c4_i32 : i32
    %25 = arith.index_cast %24 : i32 to index
    %26 = memref.load %arg2[%25] : memref<14xf32, #tpu.memory_space<smem>>
    %c6_i32_15 = arith.constant 6 : i32
    %27 = arith.muli %c6_i32_15, %arg1 : i32
    %c5_i32 = arith.constant 5 : i32
    %28 = arith.addi %27, %c5_i32 : i32
    %29 = arith.index_cast %28 : i32 to index
    %30 = memref.load %arg2[%29] : memref<14xf32, #tpu.memory_space<smem>>
    %cst_16 = arith.constant dense<0.000000e+00> : vector<8xf32>
    %31 = vector.multi_reduction <add>, %3, %cst_16 [1] : vector<8x32xf32> to vector<8xf32>
    %32 = vector.shape_cast %31 : vector<8xf32> to vector<8x1xf32>
    %cst_17 = arith.constant 3.200000e+01 : f32
    %33 = vector.broadcast %cst_17 : f32 to vector<8x1xf32>
    %34 = arith.divf %32, %33 : vector<8x1xf32>
    %35 = vector.broadcast %34 : vector<8x1xf32> to vector<8x32xf32>
    %36 = arith.subf %3, %35 : vector<8x32xf32>
    %37 = arith.mulf %36, %36 : vector<8x32xf32>
    %cst_18 = arith.constant dense<0.000000e+00> : vector<8xf32>
    %38 = vector.multi_reduction <add>, %37, %cst_18 [1] : vector<8x32xf32> to vector<8xf32>
    %39 = vector.shape_cast %38 : vector<8xf32> to vector<8x1xf32>
    %cst_19 = arith.constant 3.100000e+01 : f32
    %40 = vector.broadcast %cst_19 : f32 to vector<8x1xf32>
    %41 = arith.divf %39, %40 : vector<8x1xf32>
    %42 = math.sqrt %41 : vector<8x1xf32>
    %43 = vector.broadcast %18 : f32 to vector<8x32xf32>
    %44 = arith.mulf %43, %36 : vector<8x32xf32>
    %cst_20 = arith.constant 9.99999997E-7 : f32
    %45 = vector.broadcast %cst_20 : f32 to vector<8x1xf32>
    %46 = arith.addf %45, %42 : vector<8x1xf32>
    %47 = vector.broadcast %46 : vector<8x1xf32> to vector<8x32xf32>
    %48 = arith.divf %44, %47 : vector<8x32xf32>
    %49 = vector.broadcast %22 : f32 to vector<8x32xf32>
    %50 = arith.addf %48, %49 : vector<8x32xf32>
    %51 = arith.truncf %50 : vector<8x32xf32> to vector<8x32xbf16>
    %c0_21 = arith.constant 0 : index
    %c0_22 = arith.constant 0 : index
    %c0_23 = arith.constant 0 : index
    %52 = vector.load %arg7[%c0_21, %c0_22, %c0_23] : memref<1x32x96xbf16, #tpu.memory_space<vmem>>, vector<1x32x96xbf16>
    %53 = vector.shape_cast %52 : vector<1x32x96xbf16> to vector<32x96xbf16>
    %cst_24 = arith.constant dense<0.000000e+00> : vector<8x96xf32>
    %54 = tpu.matmul %51, %53, %cst_24 {dimension_numbers = #tpu.dot_dimension_numbers<[1], [0], [0], [1], [0, 0, 1, 1], [], []>} : vector<8x32xbf16>, vector<32x96xbf16>, vector<8x96xf32> -> vector<8x96xf32>
    %c0_25 = arith.constant 0 : index
    %c0_26 = arith.constant 0 : index
    %c0_27 = arith.constant 0 : index
    %55 = vector.load %arg8[%c0_25, %c0_26, %c0_27] : memref<1x1x96xf32, #tpu.memory_space<vmem>>, vector<1x1x96xf32>
    %56 = vector.shape_cast %55 : vector<1x1x96xf32> to vector<1x96xf32>
    %57 = vector.broadcast %56 : vector<1x96xf32> to vector<8x96xf32>
    %58 = arith.addf %54, %57 : vector<8x96xf32>
    %59 = vector.extract_strided_slice %58 {offsets = [0, 0], sizes = [8, 32], strides = [1, 1]} : vector<8x96xf32> to vector<8x32xf32>
    %cst_28 = arith.constant 0.353553385 : f32
    %60 = vector.broadcast %cst_28 : f32 to vector<8x32xf32>
    %61 = arith.mulf %59, %60 : vector<8x32xf32>
    %62 = vector.extract_strided_slice %58 {offsets = [0, 32], sizes = [8, 32], strides = [1, 1]} : vector<8x96xf32> to vector<8x32xf32>
    %63 = vector.extract_strided_slice %58 {offsets = [0, 64], sizes = [8, 32], strides = [1, 1]} : vector<8x96xf32> to vector<8x32xf32>
    %c0_29 = arith.constant 0 : index
    %c0_30 = arith.constant 0 : index
    %c0_31 = arith.constant 0 : index
    %64 = vector.load %arg9[%c0_29, %c0_30, %c0_31] : memref<1x32x32xbf16, #tpu.memory_space<vmem>>, vector<1x32x32xbf16>
    %65 = vector.shape_cast %64 : vector<1x32x32xbf16> to vector<32x32xbf16>
    %c0_32 = arith.constant 0 : index
    %c0_33 = arith.constant 0 : index
    %c0_34 = arith.constant 0 : index
    %66 = vector.load %arg10[%c0_32, %c0_33, %c0_34] : memref<1x1x32xf32, #tpu.memory_space<vmem>>, vector<1x1x32xf32>
    %67 = vector.shape_cast %66 : vector<1x1x32xf32> to vector<1x32xf32>
    %68 = arith.truncf %61 : vector<8x32xf32> to vector<8x32xbf16>
    %69 = arith.truncf %62 : vector<8x32xf32> to vector<8x32xbf16>
    %70 = arith.truncf %63 : vector<8x32xf32> to vector<8x32xbf16>
    %cst_35 = arith.constant 0.000000e+00 : f32
    %71 = vector.broadcast %cst_35 : f32 to vector<8x32xf32>
    %72 = vector.extract_strided_slice %68 {offsets = [0, 0], sizes = [8, 8], strides = [1, 1]} : vector<8x32xbf16> to vector<8x8xbf16>
    %73 = vector.extract_strided_slice %69 {offsets = [0, 0], sizes = [8, 8], strides = [1, 1]} : vector<8x32xbf16> to vector<8x8xbf16>
    %cst_36 = arith.constant dense<0.000000e+00> : vector<8x8xf32>
    %74 = tpu.matmul %72, %73, %cst_36 {dimension_numbers = #tpu.dot_dimension_numbers<[1], [1], [0], [0], [0, 0, 1, 0], [], []>} : vector<8x8xbf16>, vector<8x8xbf16>, vector<8x8xf32> -> vector<8x8xf32>
    %cst_37 = arith.constant -1.000000e+04 : f32
    %75 = vector.broadcast %cst_37 : f32 to vector<8x8xf32>
    %76 = arith.select %10, %75, %74 : vector<8x8xi1>, vector<8x8xf32>
    %cst_38 = arith.constant dense<0xFF800000> : vector<8xf32>
    %77 = vector.multi_reduction <maximumf>, %76, %cst_38 [1] : vector<8x8xf32> to vector<8xf32>
    %78 = vector.shape_cast %77 : vector<8xf32> to vector<8x1xf32>
    %79 = vector.broadcast %78 : vector<8x1xf32> to vector<8x8xf32>
    %80 = arith.subf %76, %79 : vector<8x8xf32>
    %81 = math.exp %80 : vector<8x8xf32>
    %cst_39 = arith.constant dense<0.000000e+00> : vector<8xf32>
    %82 = vector.multi_reduction <add>, %81, %cst_39 [1] : vector<8x8xf32> to vector<8xf32>
    %83 = vector.shape_cast %82 : vector<8xf32> to vector<8x1xf32>
    %84 = vector.broadcast %83 : vector<8x1xf32> to vector<8x8xf32>
    %85 = arith.divf %81, %84 : vector<8x8xf32>
    %86 = vector.extract_strided_slice %70 {offsets = [0, 0], sizes = [8, 8], strides = [1, 1]} : vector<8x32xbf16> to vector<8x8xbf16>
    %87 = vector.extract_strided_slice %65 {offsets = [0, 0], sizes = [8, 32], strides = [1, 1]} : vector<32x32xbf16> to vector<8x32xbf16>
    %cst_40 = arith.constant dense<0.000000e+00> : vector<8x32xf32>
    %88 = tpu.matmul %86, %87, %cst_40 {dimension_numbers = #tpu.dot_dimension_numbers<[1], [0], [0], [1], [0, 0, 1, 1], [], []>} : vector<8x8xbf16>, vector<8x32xbf16>, vector<8x32xf32> -> vector<8x32xf32>
    %89 = arith.truncf %85 : vector<8x8xf32> to vector<8x8xbf16>
    %90 = arith.truncf %88 : vector<8x32xf32> to vector<8x32xbf16>
    %cst_41 = arith.constant dense<0.000000e+00> : vector<8x32xf32>
    %91 = tpu.matmul %89, %90, %cst_41 {dimension_numbers = #tpu.dot_dimension_numbers<[1], [0], [0], [1], [0, 0, 1, 1], [], []>} : vector<8x8xbf16>, vector<8x32xbf16>, vector<8x32xf32> -> vector<8x32xf32>
    %92 = arith.addf %71, %91 : vector<8x32xf32>
    %93 = vector.extract_strided_slice %68 {offsets = [0, 8], sizes = [8, 8], strides = [1, 1]} : vector<8x32xbf16> to vector<8x8xbf16>
    %94 = vector.extract_strided_slice %69 {offsets = [0, 8], sizes = [8, 8], strides = [1, 1]} : vector<8x32xbf16> to vector<8x8xbf16>
    %cst_42 = arith.constant dense<0.000000e+00> : vector<8x8xf32>
    %95 = tpu.matmul %93, %94, %cst_42 {dimension_numbers = #tpu.dot_dimension_numbers<[1], [1], [0], [0], [0, 0, 1, 0], [], []>} : vector<8x8xbf16>, vector<8x8xbf16>, vector<8x8xf32> -> vector<8x8xf32>
    %cst_43 = arith.constant -1.000000e+04 : f32
    %96 = vector.broadcast %cst_43 : f32 to vector<8x8xf32>
    %97 = arith.select %10, %96, %95 : vector<8x8xi1>, vector<8x8xf32>
    %cst_44 = arith.constant dense<0xFF800000> : vector<8xf32>
    %98 = vector.multi_reduction <maximumf>, %97, %cst_44 [1] : vector<8x8xf32> to vector<8xf32>
    %99 = vector.shape_cast %98 : vector<8xf32> to vector<8x1xf32>
    %100 = vector.broadcast %99 : vector<8x1xf32> to vector<8x8xf32>
    %101 = arith.subf %97, %100 : vector<8x8xf32>
    %102 = math.exp %101 : vector<8x8xf32>
    %cst_45 = arith.constant dense<0.000000e+00> : vector<8xf32>
    %103 = vector.multi_reduction <add>, %102, %cst_45 [1] : vector<8x8xf32> to vector<8xf32>
    %104 = vector.shape_cast %103 : vector<8xf32> to vector<8x1xf32>
    %105 = vector.broadcast %104 : vector<8x1xf32> to vector<8x8xf32>
    %106 = arith.divf %102, %105 : vector<8x8xf32>
    %107 = vector.extract_strided_slice %70 {offsets = [0, 8], sizes = [8, 8], strides = [1, 1]} : vector<8x32xbf16> to vector<8x8xbf16>
    %108 = vector.extract_strided_slice %65 {offsets = [8, 0], sizes = [8, 32], strides = [1, 1]} : vector<32x32xbf16> to vector<8x32xbf16>
    %cst_46 = arith.constant dense<0.000000e+00> : vector<8x32xf32>
    %109 = tpu.matmul %107, %108, %cst_46 {dimension_numbers = #tpu.dot_dimension_numbers<[1], [0], [0], [1], [0, 0, 1, 1], [], []>} : vector<8x8xbf16>, vector<8x32xbf16>, vector<8x32xf32> -> vector<8x32xf32>
    %110 = arith.truncf %106 : vector<8x8xf32> to vector<8x8xbf16>
    %111 = arith.truncf %109 : vector<8x32xf32> to vector<8x32xbf16>
    %cst_47 = arith.constant dense<0.000000e+00> : vector<8x32xf32>
    %112 = tpu.matmul %110, %111, %cst_47 {dimension_numbers = #tpu.dot_dimension_numbers<[1], [0], [0], [1], [0, 0, 1, 1], [], []>} : vector<8x8xbf16>, vector<8x32xbf16>, vector<8x32xf32> -> vector<8x32xf32>
    %113 = arith.addf %92, %112 : vector<8x32xf32>
    %114 = vector.extract_strided_slice %68 {offsets = [0, 16], sizes = [8, 8], strides = [1, 1]} : vector<8x32xbf16> to vector<8x8xbf16>
    %115 = vector.extract_strided_slice %69 {offsets = [0, 16], sizes = [8, 8], strides = [1, 1]} : vector<8x32xbf16> to vector<8x8xbf16>
    %cst_48 = arith.constant dense<0.000000e+00> : vector<8x8xf32>
    %116 = tpu.matmul %114, %115, %cst_48 {dimension_numbers = #tpu.dot_dimension_numbers<[1], [1], [0], [0], [0, 0, 1, 0], [], []>} : vector<8x8xbf16>, vector<8x8xbf16>, vector<8x8xf32> -> vector<8x8xf32>
    %cst_49 = arith.constant -1.000000e+04 : f32
    %117 = vector.broadcast %cst_49 : f32 to vector<8x8xf32>
    %118 = arith.select %10, %117, %116 : vector<8x8xi1>, vector<8x8xf32>
    %cst_50 = arith.constant dense<0xFF800000> : vector<8xf32>
    %119 = vector.multi_reduction <maximumf>, %118, %cst_50 [1] : vector<8x8xf32> to vector<8xf32>
    %120 = vector.shape_cast %119 : vector<8xf32> to vector<8x1xf32>
    %121 = vector.broadcast %120 : vector<8x1xf32> to vector<8x8xf32>
    %122 = arith.subf %118, %121 : vector<8x8xf32>
    %123 = math.exp %122 : vector<8x8xf32>
    %cst_51 = arith.constant dense<0.000000e+00> : vector<8xf32>
    %124 = vector.multi_reduction <add>, %123, %cst_51 [1] : vector<8x8xf32> to vector<8xf32>
    %125 = vector.shape_cast %124 : vector<8xf32> to vector<8x1xf32>
    %126 = vector.broadcast %125 : vector<8x1xf32> to vector<8x8xf32>
    %127 = arith.divf %123, %126 : vector<8x8xf32>
    %128 = vector.extract_strided_slice %70 {offsets = [0, 16], sizes = [8, 8], strides = [1, 1]} : vector<8x32xbf16> to vector<8x8xbf16>
    %129 = vector.extract_strided_slice %65 {offsets = [16, 0], sizes = [8, 32], strides = [1, 1]} : vector<32x32xbf16> to vector<8x32xbf16>
    %cst_52 = arith.constant dense<0.000000e+00> : vector<8x32xf32>
    %130 = tpu.matmul %128, %129, %cst_52 {dimension_numbers = #tpu.dot_dimension_numbers<[1], [0], [0], [1], [0, 0, 1, 1], [], []>} : vector<8x8xbf16>, vector<8x32xbf16>, vector<8x32xf32> -> vector<8x32xf32>
    %131 = arith.truncf %127 : vector<8x8xf32> to vector<8x8xbf16>
    %132 = arith.truncf %130 : vector<8x32xf32> to vector<8x32xbf16>
    %cst_53 = arith.constant dense<0.000000e+00> : vector<8x32xf32>
    %133 = tpu.matmul %131, %132, %cst_53 {dimension_numbers = #tpu.dot_dimension_numbers<[1], [0], [0], [1], [0, 0, 1, 1], [], []>} : vector<8x8xbf16>, vector<8x32xbf16>, vector<8x32xf32> -> vector<8x32xf32>
    %134 = arith.addf %113, %133 : vector<8x32xf32>
    %135 = vector.extract_strided_slice %68 {offsets = [0, 24], sizes = [8, 8], strides = [1, 1]} : vector<8x32xbf16> to vector<8x8xbf16>
    %136 = vector.extract_strided_slice %69 {offsets = [0, 24], sizes = [8, 8], strides = [1, 1]} : vector<8x32xbf16> to vector<8x8xbf16>
    %cst_54 = arith.constant dense<0.000000e+00> : vector<8x8xf32>
    %137 = tpu.matmul %135, %136, %cst_54 {dimension_numbers = #tpu.dot_dimension_numbers<[1], [1], [0], [0], [0, 0, 1, 0], [], []>} : vector<8x8xbf16>, vector<8x8xbf16>, vector<8x8xf32> -> vector<8x8xf32>
    %cst_55 = arith.constant -1.000000e+04 : f32
    %138 = vector.broadcast %cst_55 : f32 to vector<8x8xf32>
    %139 = arith.select %10, %138, %137 : vector<8x8xi1>, vector<8x8xf32>
    %cst_56 = arith.constant dense<0xFF800000> : vector<8xf32>
    %140 = vector.multi_reduction <maximumf>, %139, %cst_56 [1] : vector<8x8xf32> to vector<8xf32>
    %141 = vector.shape_cast %140 : vector<8xf32> to vector<8x1xf32>
    %142 = vector.broadcast %141 : vector<8x1xf32> to vector<8x8xf32>
    %143 = arith.subf %139, %142 : vector<8x8xf32>
    %144 = math.exp %143 : vector<8x8xf32>
    %cst_57 = arith.constant dense<0.000000e+00> : vector<8xf32>
    %145 = vector.multi_reduction <add>, %144, %cst_57 [1] : vector<8x8xf32> to vector<8xf32>
    %146 = vector.shape_cast %145 : vector<8xf32> to vector<8x1xf32>
    %147 = vector.broadcast %146 : vector<8x1xf32> to vector<8x8xf32>
    %148 = arith.divf %144, %147 : vector<8x8xf32>
    %149 = vector.extract_strided_slice %70 {offsets = [0, 24], sizes = [8, 8], strides = [1, 1]} : vector<8x32xbf16> to vector<8x8xbf16>
    %150 = vector.extract_strided_slice %65 {offsets = [24, 0], sizes = [8, 32], strides = [1, 1]} : vector<32x32xbf16> to vector<8x32xbf16>
    %cst_58 = arith.constant dense<0.000000e+00> : vector<8x32xf32>
    %151 = tpu.matmul %149, %150, %cst_58 {dimension_numbers = #tpu.dot_dimension_numbers<[1], [0], [0], [1], [0, 0, 1, 1], [], []>} : vector<8x8xbf16>, vector<8x32xbf16>, vector<8x32xf32> -> vector<8x32xf32>
    %152 = arith.truncf %148 : vector<8x8xf32> to vector<8x8xbf16>
    %153 = arith.truncf %151 : vector<8x32xf32> to vector<8x32xbf16>
    %cst_59 = arith.constant dense<0.000000e+00> : vector<8x32xf32>
    %154 = tpu.matmul %152, %153, %cst_59 {dimension_numbers = #tpu.dot_dimension_numbers<[1], [0], [0], [1], [0, 0, 1, 1], [], []>} : vector<8x8xbf16>, vector<8x32xbf16>, vector<8x32xf32> -> vector<8x32xf32>
    %155 = arith.addf %134, %154 : vector<8x32xf32>
    %156 = vector.broadcast %67 : vector<1x32xf32> to vector<8x32xf32>
    %157 = arith.addf %155, %156 : vector<8x32xf32>
    %158 = arith.addf %3, %157 : vector<8x32xf32>
    %159 = arith.truncf %158 : vector<8x32xf32> to vector<8x32xbf16>
    %c0_60 = arith.constant 0 : index
    %c0_61 = arith.constant 0 : index
    %c0_62 = arith.constant 0 : index
    %160 = vector.load %arg11[%c0_60, %c0_61, %c0_62] : memref<1x32x32xbf16, #tpu.memory_space<vmem>>, vector<1x32x32xbf16>
    %161 = vector.shape_cast %160 : vector<1x32x32xbf16> to vector<32x32xbf16>
    %cst_63 = arith.constant dense<0.000000e+00> : vector<8x32xf32>
    %162 = tpu.matmul %159, %161, %cst_63 {dimension_numbers = #tpu.dot_dimension_numbers<[1], [0], [0], [1], [0, 0, 1, 1], [], []>} : vector<8x32xbf16>, vector<32x32xbf16>, vector<8x32xf32> -> vector<8x32xf32>
    %c0_64 = arith.constant 0 : index
    %c0_65 = arith.constant 0 : index
    %c0_66 = arith.constant 0 : index
    %163 = vector.load %arg12[%c0_64, %c0_65, %c0_66] : memref<1x1x32xf32, #tpu.memory_space<vmem>>, vector<1x1x32xf32>
    %164 = vector.shape_cast %163 : vector<1x1x32xf32> to vector<1x32xf32>
    %165 = vector.broadcast %164 : vector<1x32xf32> to vector<8x32xf32>
    %166 = arith.addf %162, %165 : vector<8x32xf32>
    %cst_67 = arith.constant 0.353553385 : f32
    %167 = vector.broadcast %cst_67 : f32 to vector<8x32xf32>
    %168 = arith.mulf %166, %167 : vector<8x32xf32>
    %c0_68 = arith.constant 0 : index
    %c0_69 = arith.constant 0 : index
    %c0_70 = arith.constant 0 : index
    %169 = vector.load %arg13[%c0_68, %c0_69, %c0_70] : memref<1x32x64xbf16, #tpu.memory_space<vmem>>, vector<1x32x64xbf16>
    %170 = vector.shape_cast %169 : vector<1x32x64xbf16> to vector<32x64xbf16>
    %cst_71 = arith.constant dense<0.000000e+00> : vector<16x64xf32>
    %171 = tpu.matmul %6, %170, %cst_71 {dimension_numbers = #tpu.dot_dimension_numbers<[1], [0], [0], [1], [0, 0, 1, 1], [], []>} : vector<16x32xbf16>, vector<32x64xbf16>, vector<16x64xf32> -> vector<16x64xf32>
    %c0_72 = arith.constant 0 : index
    %c0_73 = arith.constant 0 : index
    %c0_74 = arith.constant 0 : index
    %172 = vector.load %arg14[%c0_72, %c0_73, %c0_74] : memref<1x1x64xf32, #tpu.memory_space<vmem>>, vector<1x1x64xf32>
    %173 = vector.shape_cast %172 : vector<1x1x64xf32> to vector<1x64xf32>
    %174 = vector.broadcast %173 : vector<1x64xf32> to vector<16x64xf32>
    %175 = arith.addf %171, %174 : vector<16x64xf32>
    %176 = vector.extract_strided_slice %175 {offsets = [0, 0], sizes = [16, 32], strides = [1, 1]} : vector<16x64xf32> to vector<16x32xf32>
    %177 = vector.extract_strided_slice %175 {offsets = [0, 32], sizes = [16, 32], strides = [1, 1]} : vector<16x64xf32> to vector<16x32xf32>
    %c0_75 = arith.constant 0 : index
    %c0_76 = arith.constant 0 : index
    %c0_77 = arith.constant 0 : index
    %178 = vector.load %arg15[%c0_75, %c0_76, %c0_77] : memref<1x32x32xbf16, #tpu.memory_space<vmem>>, vector<1x32x32xbf16>
    %179 = vector.shape_cast %178 : vector<1x32x32xbf16> to vector<32x32xbf16>
    %c0_78 = arith.constant 0 : index
    %c0_79 = arith.constant 0 : index
    %c0_80 = arith.constant 0 : index
    %180 = vector.load %arg16[%c0_78, %c0_79, %c0_80] : memref<1x1x32xf32, #tpu.memory_space<vmem>>, vector<1x1x32xf32>
    %181 = vector.shape_cast %180 : vector<1x1x32xf32> to vector<1x32xf32>
    %182 = arith.truncf %168 : vector<8x32xf32> to vector<8x32xbf16>
    %183 = arith.truncf %176 : vector<16x32xf32> to vector<16x32xbf16>
    %184 = arith.truncf %177 : vector<16x32xf32> to vector<16x32xbf16>
    %cst_81 = arith.constant 0.000000e+00 : f32
    %185 = vector.broadcast %cst_81 : f32 to vector<8x32xf32>
    %186 = vector.extract_strided_slice %182 {offsets = [0, 0], sizes = [8, 8], strides = [1, 1]} : vector<8x32xbf16> to vector<8x8xbf16>
    %187 = vector.extract_strided_slice %183 {offsets = [0, 0], sizes = [16, 8], strides = [1, 1]} : vector<16x32xbf16> to vector<16x8xbf16>
    %cst_82 = arith.constant dense<0.000000e+00> : vector<8x16xf32>
    %188 = tpu.matmul %186, %187, %cst_82 {dimension_numbers = #tpu.dot_dimension_numbers<[1], [1], [0], [0], [0, 0, 1, 0], [], []>} : vector<8x8xbf16>, vector<16x8xbf16>, vector<8x16xf32> -> vector<8x16xf32>
    %cst_83 = arith.constant -1.000000e+04 : f32
    %189 = vector.shape_cast %14 : vector<1x16xi1> to vector<1x16xi1>
    %190 = vector.broadcast %189 : vector<1x16xi1> to vector<8x16xi1>
    %191 = vector.broadcast %cst_83 : f32 to vector<8x16xf32>
    %192 = arith.select %190, %191, %188 : vector<8x16xi1>, vector<8x16xf32>
    %cst_84 = arith.constant dense<0xFF800000> : vector<8xf32>
    %193 = vector.multi_reduction <maximumf>, %192, %cst_84 [1] : vector<8x16xf32> to vector<8xf32>
    %194 = vector.shape_cast %193 : vector<8xf32> to vector<8x1xf32>
    %195 = vector.broadcast %194 : vector<8x1xf32> to vector<8x16xf32>
    %196 = arith.subf %192, %195 : vector<8x16xf32>
    %197 = math.exp %196 : vector<8x16xf32>
    %cst_85 = arith.constant dense<0.000000e+00> : vector<8xf32>
    %198 = vector.multi_reduction <add>, %197, %cst_85 [1] : vector<8x16xf32> to vector<8xf32>
    %199 = vector.shape_cast %198 : vector<8xf32> to vector<8x1xf32>
    %200 = vector.broadcast %199 : vector<8x1xf32> to vector<8x16xf32>
    %201 = arith.divf %197, %200 : vector<8x16xf32>
    %202 = vector.extract_strided_slice %184 {offsets = [0, 0], sizes = [16, 8], strides = [1, 1]} : vector<16x32xbf16> to vector<16x8xbf16>
    %203 = vector.extract_strided_slice %179 {offsets = [0, 0], sizes = [8, 32], strides = [1, 1]} : vector<32x32xbf16> to vector<8x32xbf16>
    %cst_86 = arith.constant dense<0.000000e+00> : vector<16x32xf32>
    %204 = tpu.matmul %202, %203, %cst_86 {dimension_numbers = #tpu.dot_dimension_numbers<[1], [0], [0], [1], [0, 0, 1, 1], [], []>} : vector<16x8xbf16>, vector<8x32xbf16>, vector<16x32xf32> -> vector<16x32xf32>
    %205 = arith.truncf %201 : vector<8x16xf32> to vector<8x16xbf16>
    %206 = arith.truncf %204 : vector<16x32xf32> to vector<16x32xbf16>
    %cst_87 = arith.constant dense<0.000000e+00> : vector<8x32xf32>
    %207 = tpu.matmul %205, %206, %cst_87 {dimension_numbers = #tpu.dot_dimension_numbers<[1], [0], [0], [1], [0, 0, 1, 1], [], []>} : vector<8x16xbf16>, vector<16x32xbf16>, vector<8x32xf32> -> vector<8x32xf32>
    %208 = arith.addf %185, %207 : vector<8x32xf32>
    %209 = vector.extract_strided_slice %182 {offsets = [0, 8], sizes = [8, 8], strides = [1, 1]} : vector<8x32xbf16> to vector<8x8xbf16>
    %210 = vector.extract_strided_slice %183 {offsets = [0, 8], sizes = [16, 8], strides = [1, 1]} : vector<16x32xbf16> to vector<16x8xbf16>
    %cst_88 = arith.constant dense<0.000000e+00> : vector<8x16xf32>
    %211 = tpu.matmul %209, %210, %cst_88 {dimension_numbers = #tpu.dot_dimension_numbers<[1], [1], [0], [0], [0, 0, 1, 0], [], []>} : vector<8x8xbf16>, vector<16x8xbf16>, vector<8x16xf32> -> vector<8x16xf32>
    %cst_89 = arith.constant -1.000000e+04 : f32
    %212 = vector.shape_cast %14 : vector<1x16xi1> to vector<1x16xi1>
    %213 = vector.broadcast %212 : vector<1x16xi1> to vector<8x16xi1>
    %214 = vector.broadcast %cst_89 : f32 to vector<8x16xf32>
    %215 = arith.select %213, %214, %211 : vector<8x16xi1>, vector<8x16xf32>
    %cst_90 = arith.constant dense<0xFF800000> : vector<8xf32>
    %216 = vector.multi_reduction <maximumf>, %215, %cst_90 [1] : vector<8x16xf32> to vector<8xf32>
    %217 = vector.shape_cast %216 : vector<8xf32> to vector<8x1xf32>
    %218 = vector.broadcast %217 : vector<8x1xf32> to vector<8x16xf32>
    %219 = arith.subf %215, %218 : vector<8x16xf32>
    %220 = math.exp %219 : vector<8x16xf32>
    %cst_91 = arith.constant dense<0.000000e+00> : vector<8xf32>
    %221 = vector.multi_reduction <add>, %220, %cst_91 [1] : vector<8x16xf32> to vector<8xf32>
    %222 = vector.shape_cast %221 : vector<8xf32> to vector<8x1xf32>
    %223 = vector.broadcast %222 : vector<8x1xf32> to vector<8x16xf32>
    %224 = arith.divf %220, %223 : vector<8x16xf32>
    %225 = vector.extract_strided_slice %184 {offsets = [0, 8], sizes = [16, 8], strides = [1, 1]} : vector<16x32xbf16> to vector<16x8xbf16>
    %226 = vector.extract_strided_slice %179 {offsets = [8, 0], sizes = [8, 32], strides = [1, 1]} : vector<32x32xbf16> to vector<8x32xbf16>
    %cst_92 = arith.constant dense<0.000000e+00> : vector<16x32xf32>
    %227 = tpu.matmul %225, %226, %cst_92 {dimension_numbers = #tpu.dot_dimension_numbers<[1], [0], [0], [1], [0, 0, 1, 1], [], []>} : vector<16x8xbf16>, vector<8x32xbf16>, vector<16x32xf32> -> vector<16x32xf32>
    %228 = arith.truncf %224 : vector<8x16xf32> to vector<8x16xbf16>
    %229 = arith.truncf %227 : vector<16x32xf32> to vector<16x32xbf16>
    %cst_93 = arith.constant dense<0.000000e+00> : vector<8x32xf32>
    %230 = tpu.matmul %228, %229, %cst_93 {dimension_numbers = #tpu.dot_dimension_numbers<[1], [0], [0], [1], [0, 0, 1, 1], [], []>} : vector<8x16xbf16>, vector<16x32xbf16>, vector<8x32xf32> -> vector<8x32xf32>
    %231 = arith.addf %208, %230 : vector<8x32xf32>
    %232 = vector.extract_strided_slice %182 {offsets = [0, 16], sizes = [8, 8], strides = [1, 1]} : vector<8x32xbf16> to vector<8x8xbf16>
    %233 = vector.extract_strided_slice %183 {offsets = [0, 16], sizes = [16, 8], strides = [1, 1]} : vector<16x32xbf16> to vector<16x8xbf16>
    %cst_94 = arith.constant dense<0.000000e+00> : vector<8x16xf32>
    %234 = tpu.matmul %232, %233, %cst_94 {dimension_numbers = #tpu.dot_dimension_numbers<[1], [1], [0], [0], [0, 0, 1, 0], [], []>} : vector<8x8xbf16>, vector<16x8xbf16>, vector<8x16xf32> -> vector<8x16xf32>
    %cst_95 = arith.constant -1.000000e+04 : f32
    %235 = vector.shape_cast %14 : vector<1x16xi1> to vector<1x16xi1>
    %236 = vector.broadcast %235 : vector<1x16xi1> to vector<8x16xi1>
    %237 = vector.broadcast %cst_95 : f32 to vector<8x16xf32>
    %238 = arith.select %236, %237, %234 : vector<8x16xi1>, vector<8x16xf32>
    %cst_96 = arith.constant dense<0xFF800000> : vector<8xf32>
    %239 = vector.multi_reduction <maximumf>, %238, %cst_96 [1] : vector<8x16xf32> to vector<8xf32>
    %240 = vector.shape_cast %239 : vector<8xf32> to vector<8x1xf32>
    %241 = vector.broadcast %240 : vector<8x1xf32> to vector<8x16xf32>
    %242 = arith.subf %238, %241 : vector<8x16xf32>
    %243 = math.exp %242 : vector<8x16xf32>
    %cst_97 = arith.constant dense<0.000000e+00> : vector<8xf32>
    %244 = vector.multi_reduction <add>, %243, %cst_97 [1] : vector<8x16xf32> to vector<8xf32>
    %245 = vector.shape_cast %244 : vector<8xf32> to vector<8x1xf32>
    %246 = vector.broadcast %245 : vector<8x1xf32> to vector<8x16xf32>
    %247 = arith.divf %243, %246 : vector<8x16xf32>
    %248 = vector.extract_strided_slice %184 {offsets = [0, 16], sizes = [16, 8], strides = [1, 1]} : vector<16x32xbf16> to vector<16x8xbf16>
    %249 = vector.extract_strided_slice %179 {offsets = [16, 0], sizes = [8, 32], strides = [1, 1]} : vector<32x32xbf16> to vector<8x32xbf16>
    %cst_98 = arith.constant dense<0.000000e+00> : vector<16x32xf32>
    %250 = tpu.matmul %248, %249, %cst_98 {dimension_numbers = #tpu.dot_dimension_numbers<[1], [0], [0], [1], [0, 0, 1, 1], [], []>} : vector<16x8xbf16>, vector<8x32xbf16>, vector<16x32xf32> -> vector<16x32xf32>
    %251 = arith.truncf %247 : vector<8x16xf32> to vector<8x16xbf16>
    %252 = arith.truncf %250 : vector<16x32xf32> to vector<16x32xbf16>
    %cst_99 = arith.constant dense<0.000000e+00> : vector<8x32xf32>
    %253 = tpu.matmul %251, %252, %cst_99 {dimension_numbers = #tpu.dot_dimension_numbers<[1], [0], [0], [1], [0, 0, 1, 1], [], []>} : vector<8x16xbf16>, vector<16x32xbf16>, vector<8x32xf32> -> vector<8x32xf32>
    %254 = arith.addf %231, %253 : vector<8x32xf32>
    %255 = vector.extract_strided_slice %182 {offsets = [0, 24], sizes = [8, 8], strides = [1, 1]} : vector<8x32xbf16> to vector<8x8xbf16>
    %256 = vector.extract_strided_slice %183 {offsets = [0, 24], sizes = [16, 8], strides = [1, 1]} : vector<16x32xbf16> to vector<16x8xbf16>
    %cst_100 = arith.constant dense<0.000000e+00> : vector<8x16xf32>
    %257 = tpu.matmul %255, %256, %cst_100 {dimension_numbers = #tpu.dot_dimension_numbers<[1], [1], [0], [0], [0, 0, 1, 0], [], []>} : vector<8x8xbf16>, vector<16x8xbf16>, vector<8x16xf32> -> vector<8x16xf32>
    %cst_101 = arith.constant -1.000000e+04 : f32
    %258 = vector.shape_cast %14 : vector<1x16xi1> to vector<1x16xi1>
    %259 = vector.broadcast %258 : vector<1x16xi1> to vector<8x16xi1>
    %260 = vector.broadcast %cst_101 : f32 to vector<8x16xf32>
    %261 = arith.select %259, %260, %257 : vector<8x16xi1>, vector<8x16xf32>
    %cst_102 = arith.constant dense<0xFF800000> : vector<8xf32>
    %262 = vector.multi_reduction <maximumf>, %261, %cst_102 [1] : vector<8x16xf32> to vector<8xf32>
    %263 = vector.shape_cast %262 : vector<8xf32> to vector<8x1xf32>
    %264 = vector.broadcast %263 : vector<8x1xf32> to vector<8x16xf32>
    %265 = arith.subf %261, %264 : vector<8x16xf32>
    %266 = math.exp %265 : vector<8x16xf32>
    %cst_103 = arith.constant dense<0.000000e+00> : vector<8xf32>
    %267 = vector.multi_reduction <add>, %266, %cst_103 [1] : vector<8x16xf32> to vector<8xf32>
    %268 = vector.shape_cast %267 : vector<8xf32> to vector<8x1xf32>
    %269 = vector.broadcast %268 : vector<8x1xf32> to vector<8x16xf32>
    %270 = arith.divf %266, %269 : vector<8x16xf32>
    %271 = vector.extract_strided_slice %184 {offsets = [0, 24], sizes = [16, 8], strides = [1, 1]} : vector<16x32xbf16> to vector<16x8xbf16>
    %272 = vector.extract_strided_slice %179 {offsets = [24, 0], sizes = [8, 32], strides = [1, 1]} : vector<32x32xbf16> to vector<8x32xbf16>
    %cst_104 = arith.constant dense<0.000000e+00> : vector<16x32xf32>
    %273 = tpu.matmul %271, %272, %cst_104 {dimension_numbers = #tpu.dot_dimension_numbers<[1], [0], [0], [1], [0, 0, 1, 1], [], []>} : vector<16x8xbf16>, vector<8x32xbf16>, vector<16x32xf32> -> vector<16x32xf32>
    %274 = arith.truncf %270 : vector<8x16xf32> to vector<8x16xbf16>
    %275 = arith.truncf %273 : vector<16x32xf32> to vector<16x32xbf16>
    %cst_105 = arith.constant dense<0.000000e+00> : vector<8x32xf32>
    %276 = tpu.matmul %274, %275, %cst_105 {dimension_numbers = #tpu.dot_dimension_numbers<[1], [0], [0], [1], [0, 0, 1, 1], [], []>} : vector<8x16xbf16>, vector<16x32xbf16>, vector<8x32xf32> -> vector<8x32xf32>
    %277 = arith.addf %254, %276 : vector<8x32xf32>
    %278 = vector.broadcast %181 : vector<1x32xf32> to vector<8x32xf32>
    %279 = arith.addf %277, %278 : vector<8x32xf32>
    %280 = arith.addf %158, %279 : vector<8x32xf32>
    %cst_106 = arith.constant dense<0.000000e+00> : vector<8xf32>
    %281 = vector.multi_reduction <add>, %280, %cst_106 [1] : vector<8x32xf32> to vector<8xf32>
    %282 = vector.shape_cast %281 : vector<8xf32> to vector<8x1xf32>
    %cst_107 = arith.constant 3.200000e+01 : f32
    %283 = vector.broadcast %cst_107 : f32 to vector<8x1xf32>
    %284 = arith.divf %282, %283 : vector<8x1xf32>
    %285 = vector.broadcast %284 : vector<8x1xf32> to vector<8x32xf32>
    %286 = arith.subf %280, %285 : vector<8x32xf32>
    %287 = arith.mulf %286, %286 : vector<8x32xf32>
    %cst_108 = arith.constant dense<0.000000e+00> : vector<8xf32>
    %288 = vector.multi_reduction <add>, %287, %cst_108 [1] : vector<8x32xf32> to vector<8xf32>
    %289 = vector.shape_cast %288 : vector<8xf32> to vector<8x1xf32>
    %cst_109 = arith.constant 3.100000e+01 : f32
    %290 = vector.broadcast %cst_109 : f32 to vector<8x1xf32>
    %291 = arith.divf %289, %290 : vector<8x1xf32>
    %292 = math.sqrt %291 : vector<8x1xf32>
    %293 = vector.broadcast %26 : f32 to vector<8x32xf32>
    %294 = arith.mulf %293, %286 : vector<8x32xf32>
    %cst_110 = arith.constant 9.99999997E-7 : f32
    %295 = vector.broadcast %cst_110 : f32 to vector<8x1xf32>
    %296 = arith.addf %295, %292 : vector<8x1xf32>
    %297 = vector.broadcast %296 : vector<8x1xf32> to vector<8x32xf32>
    %298 = arith.divf %294, %297 : vector<8x32xf32>
    %299 = vector.broadcast %30 : f32 to vector<8x32xf32>
    %300 = arith.addf %298, %299 : vector<8x32xf32>
    %301 = arith.truncf %300 : vector<8x32xf32> to vector<8x32xbf16>
    %c0_111 = arith.constant 0 : index
    %c0_112 = arith.constant 0 : index
    %c0_113 = arith.constant 0 : index
    %302 = vector.load %arg17[%c0_111, %c0_112, %c0_113] : memref<1x32x64xbf16, #tpu.memory_space<vmem>>, vector<1x32x64xbf16>
    %303 = vector.shape_cast %302 : vector<1x32x64xbf16> to vector<32x64xbf16>
    %cst_114 = arith.constant dense<0.000000e+00> : vector<8x64xf32>
    %304 = tpu.matmul %301, %303, %cst_114 {dimension_numbers = #tpu.dot_dimension_numbers<[1], [0], [0], [1], [0, 0, 1, 1], [], []>} : vector<8x32xbf16>, vector<32x64xbf16>, vector<8x64xf32> -> vector<8x64xf32>
    %c0_115 = arith.constant 0 : index
    %c0_116 = arith.constant 0 : index
    %c0_117 = arith.constant 0 : index
    %305 = vector.load %arg18[%c0_115, %c0_116, %c0_117] : memref<1x1x64xf32, #tpu.memory_space<vmem>>, vector<1x1x64xf32>
    %306 = vector.shape_cast %305 : vector<1x1x64xf32> to vector<1x64xf32>
    %307 = vector.broadcast %306 : vector<1x64xf32> to vector<8x64xf32>
    %308 = arith.addf %304, %307 : vector<8x64xf32>
    %cst_118 = arith.constant 0.000000e+00 : f32
    %309 = vector.broadcast %cst_118 : f32 to vector<8x64xf32>
    %310 = arith.maximumf %308, %309 : vector<8x64xf32>
    %311 = arith.truncf %310 : vector<8x64xf32> to vector<8x64xbf16>
    %c0_119 = arith.constant 0 : index
    %c0_120 = arith.constant 0 : index
    %c0_121 = arith.constant 0 : index
    %312 = vector.load %arg19[%c0_119, %c0_120, %c0_121] : memref<1x64x32xbf16, #tpu.memory_space<vmem>>, vector<1x64x32xbf16>
    %313 = vector.shape_cast %312 : vector<1x64x32xbf16> to vector<64x32xbf16>
    %cst_122 = arith.constant dense<0.000000e+00> : vector<8x32xf32>
    %314 = tpu.matmul %311, %313, %cst_122 {dimension_numbers = #tpu.dot_dimension_numbers<[1], [0], [0], [1], [0, 0, 1, 1], [], []>} : vector<8x64xbf16>, vector<64x32xbf16>, vector<8x32xf32> -> vector<8x32xf32>
    %c0_123 = arith.constant 0 : index
    %c0_124 = arith.constant 0 : index
    %c0_125 = arith.constant 0 : index
    %315 = vector.load %arg20[%c0_123, %c0_124, %c0_125] : memref<1x1x32xf32, #tpu.memory_space<vmem>>, vector<1x1x32xf32>
    %316 = vector.shape_cast %315 : vector<1x1x32xf32> to vector<1x32xf32>
    %317 = vector.broadcast %316 : vector<1x32xf32> to vector<8x32xf32>
    %318 = arith.addf %314, %317 : vector<8x32xf32>
    %319 = arith.addf %280, %318 : vector<8x32xf32>
    %c0_126 = arith.constant 0 : index
    %c0_127 = arith.constant 0 : index
    %320 = vector.load %arg22[%c0_126, %c0_127] : memref<8x32xf32, #tpu.memory_space<vmem>>, vector<8x32xf32>
    tpu.vector_store %arg22[%c0_126, %c0_127], %319 {strides = array<i32>} : memref<8x32xf32, #tpu.memory_space<vmem>>, vector<8x32xf32>,
    %c1_i32_128 = arith.constant 1 : i32
    %321 = arith.cmpi eq, %arg1, %c1_i32_128 : i32
    %322 = arith.extui %321 : i1 to i32
    %c0_i32_129 = arith.constant 0 : i32
    %323 = arith.cmpi ne, %322, %c0_i32_129 : i32
    scf.if %323 {
      %c12 = arith.constant 12 : index
      %324 = memref.load %arg2[%c12] : memref<14xf32, #tpu.memory_space<smem>>
      %c13 = arith.constant 13 : index
      %325 = memref.load %arg2[%c13] : memref<14xf32, #tpu.memory_space<smem>>
      %cst_130 = arith.constant dense<0.000000e+00> : vector<8xf32>
      %326 = vector.multi_reduction <add>, %319, %cst_130 [1] : vector<8x32xf32> to vector<8xf32>
      %327 = vector.shape_cast %326 : vector<8xf32> to vector<8x1xf32>
      %cst_131 = arith.constant 3.200000e+01 : f32
      %328 = vector.broadcast %cst_131 : f32 to vector<8x1xf32>
      %329 = arith.divf %327, %328 : vector<8x1xf32>
      %330 = vector.broadcast %329 : vector<8x1xf32> to vector<8x32xf32>
      %331 = arith.subf %319, %330 : vector<8x32xf32>
      %332 = arith.mulf %331, %331 : vector<8x32xf32>
      %cst_132 = arith.constant dense<0.000000e+00> : vector<8xf32>
      %333 = vector.multi_reduction <add>, %332, %cst_132 [1] : vector<8x32xf32> to vector<8xf32>
      %334 = vector.shape_cast %333 : vector<8xf32> to vector<8x1xf32>
      %cst_133 = arith.constant 3.100000e+01 : f32
      %335 = vector.broadcast %cst_133 : f32 to vector<8x1xf32>
      %336 = arith.divf %334, %335 : vector<8x1xf32>
      %337 = math.sqrt %336 : vector<8x1xf32>
      %338 = vector.broadcast %324 : f32 to vector<8x32xf32>
      %339 = arith.mulf %338, %331 : vector<8x32xf32>
      %cst_134 = arith.constant 9.99999997E-7 : f32
      %340 = vector.broadcast %cst_134 : f32 to vector<8x1xf32>
      %341 = arith.addf %340, %337 : vector<8x1xf32>
      %342 = vector.broadcast %341 : vector<8x1xf32> to vector<8x32xf32>
      %343 = arith.divf %339, %342 : vector<8x32xf32>
      %344 = vector.broadcast %325 : f32 to vector<8x32xf32>
      %345 = arith.addf %343, %344 : vector<8x32xf32>
      %c0_135 = arith.constant 0 : index
      %c0_136 = arith.constant 0 : index
      %c0_137 = arith.constant 0 : index
      %346 = vector.load %arg21[%c0_135, %c0_136, %c0_137] : memref<1x8x32xf32, #tpu.memory_space<vmem>>, vector<1x8x32xf32>
      %347 = vector.shape_cast %346 : vector<1x8x32xf32> to vector<8x32xf32>
      %348 = vector.shape_cast %345 : vector<8x32xf32> to vector<1x8x32xf32>
      tpu.vector_store %arg21[%c0_135, %c0_136, %c0_137], %348 {strides = array<i32>} : memref<1x8x32xf32, #tpu.memory_space<vmem>>, vector<1x8x32xf32>,
    } else {
    }
    return
  }
  func.func @transform_0(%arg0: i32, %arg1: i32) -> i32 {
    %c0_i32 = arith.constant 0 : i32
    %c0_i32_0 = arith.constant 0 : i32
    return %c0_i32 : i32
  }
  func.func @transform_1(%arg0: i32, %arg1: i32) -> (i32, i32, i32) {
    %c0_i32 = arith.constant 0 : i32
    %c0_i32_0 = arith.constant 0 : i32
    %c0_i32_1 = arith.constant 0 : i32
    return %arg0, %c0_i32, %c0_i32_0 : i32, i32, i32
  }
  func.func @transform_2(%arg0: i32, %arg1: i32) -> (i32, i32, i32) {
    %c0_i32 = arith.constant 0 : i32
    %c0_i32_0 = arith.constant 0 : i32
    %c0_i32_1 = arith.constant 0 : i32
    return %arg0, %c0_i32, %c0_i32_0 : i32, i32, i32
  }
  func.func @transform_3(%arg0: i32, %arg1: i32) -> (i32, i32, i32) {
    %c0_i32 = arith.constant 0 : i32
    %c0_i32_0 = arith.constant 0 : i32
    %c0_i32_1 = arith.constant 0 : i32
    return %arg0, %c0_i32, %c0_i32_0 : i32, i32, i32
  }
  func.func @transform_4(%arg0: i32, %arg1: i32) -> (i32, i32, i32) {
    %c0_i32 = arith.constant 0 : i32
    %c0_i32_0 = arith.constant 0 : i32
    %c0_i32_1 = arith.constant 0 : i32
    return %arg0, %c0_i32, %c0_i32_0 : i32, i32, i32
  }
  func.func @transform_5(%arg0: i32, %arg1: i32) -> (i32, i32, i32) {
    %c0_i32 = arith.constant 0 : i32
    %c0_i32_0 = arith.constant 0 : i32
    %c0_i32_1 = arith.constant 0 : i32
    return %arg1, %c0_i32, %c0_i32_0 : i32, i32, i32
  }
  func.func @transform_6(%arg0: i32, %arg1: i32) -> (i32, i32, i32) {
    %c0_i32 = arith.constant 0 : i32
    %c0_i32_0 = arith.constant 0 : i32
    %c0_i32_1 = arith.constant 0 : i32
    return %arg1, %c0_i32, %c0_i32_0 : i32, i32, i32
  }
  func.func @transform_7(%arg0: i32, %arg1: i32) -> (i32, i32, i32) {
    %c0_i32 = arith.constant 0 : i32
    %c0_i32_0 = arith.constant 0 : i32
    %c0_i32_1 = arith.constant 0 : i32
    return %arg1, %c0_i32, %c0_i32_0 : i32, i32, i32
  }
  func.func @transform_8(%arg0: i32, %arg1: i32) -> (i32, i32, i32) {
    %c0_i32 = arith.constant 0 : i32
    %c0_i32_0 = arith.constant 0 : i32
    %c0_i32_1 = arith.constant 0 : i32
    return %arg1, %c0_i32, %c0_i32_0 : i32, i32, i32
  }
  func.func @transform_9(%arg0: i32, %arg1: i32) -> (i32, i32, i32) {
    %c0_i32 = arith.constant 0 : i32
    %c0_i32_0 = arith.constant 0 : i32
    %c0_i32_1 = arith.constant 0 : i32
    return %arg1, %c0_i32, %c0_i32_0 : i32, i32, i32
  }
  func.func @transform_10(%arg0: i32, %arg1: i32) -> (i32, i32, i32) {
    %c0_i32 = arith.constant 0 : i32
    %c0_i32_0 = arith.constant 0 : i32
    %c0_i32_1 = arith.constant 0 : i32
    return %arg1, %c0_i32, %c0_i32_0 : i32, i32, i32
  }
  func.func @transform_11(%arg0: i32, %arg1: i32) -> (i32, i32, i32) {
    %c0_i32 = arith.constant 0 : i32
    %c0_i32_0 = arith.constant 0 : i32
    %c0_i32_1 = arith.constant 0 : i32
    return %arg1, %c0_i32, %c0_i32_0 : i32, i32, i32
  }
  func.func @transform_12(%arg0: i32, %arg1: i32) -> (i32, i32, i32) {
    %c0_i32 = arith.constant 0 : i32
    %c0_i32_0 = arith.constant 0 : i32
    %c0_i32_1 = arith.constant 0 : i32
    return %arg1, %c0_i32, %c0_i32_0 : i32, i32, i32
  }
  func.func @transform_13(%arg0: i32, %arg1: i32) -> (i32, i32, i32) {
    %c0_i32 = arith.constant 0 : i32
    %c0_i32_0 = arith.constant 0 : i32
    %c0_i32_1 = arith.constant 0 : i32
    return %arg1, %c0_i32, %c0_i32_0 : i32, i32, i32
  }
  func.func @transform_14(%arg0: i32, %arg1: i32) -> (i32, i32, i32) {
    %c0_i32 = arith.constant 0 : i32
    %c0_i32_0 = arith.constant 0 : i32
    %c0_i32_1 = arith.constant 0 : i32
    return %arg1, %c0_i32, %c0_i32_0 : i32, i32, i32
  }
  func.func @transform_15(%arg0: i32, %arg1: i32) -> (i32, i32, i32) {
    %c0_i32 = arith.constant 0 : i32
    %c0_i32_0 = arith.constant 0 : i32
    %c0_i32_1 = arith.constant 0 : i32
    return %arg1, %c0_i32, %c0_i32_0 : i32, i32, i32
  }
  func.func @transform_16(%arg0: i32, %arg1: i32) -> (i32, i32, i32) {
    %c0_i32 = arith.constant 0 : i32
    %c0_i32_0 = arith.constant 0 : i32
    %c0_i32_1 = arith.constant 0 : i32
    return %arg1, %c0_i32, %c0_i32_0 : i32, i32, i32
  }
  func.func @transform_17(%arg0: i32, %arg1: i32) -> (i32, i32, i32) {
    %c0_i32 = arith.constant 0 : i32
    %c0_i32_0 = arith.constant 0 : i32
    %c0_i32_1 = arith.constant 0 : i32
    return %arg1, %c0_i32, %c0_i32_0 : i32, i32, i32
  }
  func.func @transform_18(%arg0: i32, %arg1: i32) -> (i32, i32, i32) {
    %c0_i32 = arith.constant 0 : i32
    %c0_i32_0 = arith.constant 0 : i32
    %c0_i32_1 = arith.constant 0 : i32
    return %arg1, %c0_i32, %c0_i32_0 : i32, i32, i32
  }
  func.func @transform_19(%arg0: i32, %arg1: i32) -> (i32, i32, i32) {
    %c0_i32 = arith.constant 0 : i32
    %c0_i32_0 = arith.constant 0 : i32
    %c0_i32_1 = arith.constant 0 : i32
    return %arg0, %c0_i32, %c0_i32_0 : i32, i32, i32
  }
}

</mosaic_0001>

<llo_original>
// kernel: tpu_custom_call.1
$region0: #{tpu_custom_call.1}
  #allocation0 [shape = 'u32[]', space=smem, size = 0x4, offset = 0x4, fixed_abs, tag = 'smem constant byte address 0x4 - core index']
  #allocation1 [shape = 'u32[144,128]{1,0:T(1,128)}', space=vmem, size = 0x12000, scoped, tag = 'internal scratch']
  #allocation2 [shape = 'f32[8,32]{1,0:T(8,128)}', space=vmem, size = 0x1000, scoped, tag = 'scratch operand']
  %s0 = inlined_call_operand.hbm [shape: f32[14], index: 0, kind: input, shape index: {}]
  %s1 = inlined_call_operand.hbm [shape: f32[2,8,32], index: 1, kind: input, shape index: {}]
  %s2 = inlined_call_operand.vmem [shape: f32[2,16,32], index: 2, kind: input, shape index: {}]
  %s3 = inlined_call_operand.hbm [shape: f32[2,8,8], index: 3, kind: input, shape index: {}]
  %s4 = inlined_call_operand.vmem [shape: f32[2,1,16], index: 4, kind: input, shape index: {}]
  %s5 = inlined_call_operand.vmem [shape: bf16[2,32,96], index: 5, kind: input, shape index: {}]
  %s6 = inlined_call_operand.vmem [shape: f32[2,1,96], index: 6, kind: input, shape index: {}]
  %s7 = inlined_call_operand.vmem [shape: bf16[2,32,32], index: 7, kind: input, shape index: {}]
  %s8 = inlined_call_operand.vmem [shape: f32[2,1,32], index: 8, kind: input, shape index: {}]
  %s9 = inlined_call_operand.hbm [shape: bf16[2,32,32], index: 9, kind: input, shape index: {}]
  %s10 = inlined_call_operand.vmem [shape: f32[2,1,32], index: 10, kind: input, shape index: {}]
  %s11 = inlined_call_operand.hbm [shape: bf16[2,32,64], index: 11, kind: input, shape index: {}]
  %s12 = inlined_call_operand.vmem [shape: f32[2,1,64], index: 12, kind: input, shape index: {}]
  %s13 = inlined_call_operand.hbm [shape: bf16[2,32,32], index: 13, kind: input, shape index: {}]
  %s14 = inlined_call_operand.vmem [shape: f32[2,1,32], index: 14, kind: input, shape index: {}]
  %s15 = inlined_call_operand.hbm [shape: bf16[2,32,64], index: 15, kind: input, shape index: {}]
  %s16 = inlined_call_operand.vmem [shape: f32[2,1,64], index: 16, kind: input, shape index: {}]
  %s17 = inlined_call_operand.vmem [shape: bf16[2,64,32], index: 17, kind: input, shape index: {}]
  %s18 = inlined_call_operand.vmem [shape: f32[2,1,32], index: 18, kind: input, shape index: {}]
  %s19 = inlined_call_operand.hbm [shape: f32[2,8,32], index: 19, kind: output, shape index: {}]
  %s20 = sld [smem:[#allocation0]]
  $region145: #{tpu_custom_call.1} parent=0
    _
  %s22 = ssub.s32 1, %s20
  %s23 = scalar_select 0, %s22, %s20
  $region1: #{tpu_custom_call.1} parent=0
    #allocation3 [shape = 'u8[512]{0}', space=smem, size = 0x200, scoped, tag = 'input window, operand 0, single buffered']
    #allocation4 [shape = 's32[2]{0}', space=sflag, size = 0x8, scoped, tag = 'scoped memory for tpu_custom_call.1']
    #allocation5 [shape = 's32[2]{0}', space=sflag, size = 0x8, scoped, tag = 'scoped memory for tpu_custom_call.1']
    #allocation6 [shape = 's32[2]{0}', space=sflag, size = 0x8, scoped, tag = 'scoped memory for tpu_custom_call.1']
    #allocation7 [shape = 'u8[8192]{0}', space=vmem, size = 0x2000, scoped, tag = 'input window, operand 1']
    #allocation8 [shape = 'u8[8192]{0}', space=vmem, size = 0x2000, scoped, tag = 'input window, operand 3']
    #allocation9 [shape = 's32[2]{0}', space=sflag, size = 0x8, scoped, tag = 'scoped memory for tpu_custom_call.1']
    #allocation10 [shape = 'u8[16384]{0}', space=vmem, size = 0x4000, scoped, tag = 'input window, operand 9']
    #allocation11 [shape = 'u8[16384]{0}', space=vmem, size = 0x4000, scoped, tag = 'input window, operand 11']
    #allocation12 [shape = 's32[2]{0}', space=sflag, size = 0x8, scoped, tag = 'scoped memory for tpu_custom_call.1']
    #allocation13 [shape = 'u8[16384]{0}', space=vmem, size = 0x4000, scoped, tag = 'input window, operand 13']
    #allocation14 [shape = 'u8[16384]{0}', space=vmem, size = 0x4000, scoped, tag = 'input window, operand 15']
    #allocation15 [shape = 's32[2]{0}', space=sflag, size = 0x8, scoped, tag = 'scoped memory for tpu_custom_call.1']
    #allocation16 [shape = 'u8[8192]{0}', space=vmem, size = 0x2000, scoped, tag = 'output window, operand 0']
    %24 = vsyncpa [#allocation6], 0
    %25 = vsyncpa [#allocation4], 0
    %s26 = scalar_lea.sflag [#allocation4], 1
    %27 = vsyncpa %s26, 0
    %28 = vsyncpa [#allocation9], 0
    %s29 = scalar_lea.sflag [#allocation9], 1
    %30 = vsyncpa %s29, 0
    %31 = vsyncpa [#allocation12], 0
    %s32 = scalar_lea.sflag [#allocation12], 1
    %33 = vsyncpa %s32, 0
    %34 = vsyncpa [#allocation15], 0
    %s35 = scalar_lea.sflag [#allocation15], 1
    %36 = vsyncpa %s35, 0
    %37 = vsyncpa [#allocation5], 0
    %s38 = scalar_lea.sflag [#allocation5], 1
    %39 = vsyncpa %s38, 0
    loop: start=0, step=1, limit=6
    $region2: #{tpu_custom_call.1} parent=1 // loop_pre_header
      _
    $region3: #{tpu_custom_call.1} parent=1 // loop_header
      %s41 = sphi 0, %s45
      %p42 = scmp.ge.s32.totalorder %s41, 6
      %s48 = sphi 0, %s60
      %s49 = sphi 0, %s56
      %s50 = sphi 0, %s48
      %s51 = sphi 0, %s49
      %s52 = sphi 0, %s50
      %s53 = sphi 0, %s51
      %s61 = sphi 0, %s61
      %s63 = sphi 0, %s61
      %s64 = sphi 0, %s63
      %s78 = sphi 0, %s64
      %s84 = sphi 0, %s86
      %s87 = sphi 0, %s84
      %s88 = sphi 0, %s87
      %s104 = sphi 0, %s88
      %s110 = sphi 0, %s112
      %s113 = sphi 0, %s110
      %s114 = sphi 0, %s113
      %s130 = sphi 0, %s114
      %s136 = sphi 0, %s138
      %s139 = sphi 0, %s136
      %s140 = sphi 0, %s139
      %s156 = sphi 0, %s140
      %s162 = sphi 0, %s164
      %s165 = sphi 0, %s162
      %s166 = sphi 0, %s165
      %s182 = sphi 0, %s166
      %s188 = sphi 0, %s190
      %s191 = sphi 0, %s188
      %s192 = sphi 0, %s191
      %s208 = sphi 0, %s192
      %s214 = sphi 0, %s216
      %s217 = sphi 0, %s214
      %s218 = sphi 0, %s217
      %s234 = sphi 0, %s218
      %s240 = sphi 0, %s242
      %s243 = sphi 0, %s240
      %s244 = sphi 0, %s243
      %s260 = sphi 0, %s244
      %s266 = sphi 0, %s268
      %s269 = sphi 0, %s266
      %s270 = sphi 0, %s269
      %s286 = sphi 0, %s270
      %s292 = sphi 0, %s294
      %s295 = sphi 0, %s292
      %s296 = sphi 0, %s295
      %s312 = sphi 0, %s296
      %s318 = sphi 0, %s320
      %s321 = sphi 0, %s318
      %s322 = sphi 0, %s321
      %s338 = sphi 0, %s322
      %s344 = sphi 0, %s346
      %s347 = sphi 0, %s344
      %s348 = sphi 0, %s347
      %s364 = sphi 0, %s348
      %s370 = sphi 0, %s372
      %s373 = sphi 0, %s370
      %s374 = sphi 0, %s373
      %s390 = sphi 0, %s374
      %s396 = sphi 0, %s398
      %s399 = sphi 0, %s396
      %s400 = sphi 0, %s399
      %s416 = sphi 0, %s400
      %s422 = sphi 0, %s424
      %s425 = sphi 0, %s422
      %s426 = sphi 0, %s425
      %s442 = sphi 0, %s426
      %s448 = sphi 0, %s450
      %s451 = sphi 0, %s448
      %s452 = sphi 0, %s451
      %s468 = sphi 0, %s452
      %s474 = sphi 0, %s476
      %s477 = sphi 0, %s474
      %s478 = sphi 0, %s477
      %s494 = sphi 0, %s478
      %s500 = sphi 0, %s502
      %s503 = sphi 0, %s500
      %s504 = sphi 0, %s503
      %s520 = sphi 0, %s504
      %s526 = sphi 0, %s528
      %s529 = sphi 0, %s526
      %s530 = sphi 0, %s529
      %s546 = sphi 0, %s530
      %s552 = sphi 0, %s554
      %s555 = sphi 0, %s552
      %s556 = sphi 0, %s555
      %s572 = sphi 0, %s556
    $region4: #{tpu_custom_call.1} parent=1 // loop_header_branch
      %44 = sbr.rel (%p42) target = $region8
    $region5: #{tpu_custom_call.1} parent=1 // loop_body
      %s46 = ssub.s32 %s41, 1
      %s47 = ssub.s32 %s41, 2
      %s54 = sadd.s32 1, %s49
      %p55 = scmp.ge.s32.totalorder %s54, 2
      %s56 = scalar_select %p55, 0, %s54
      %s57 = sadd.s32 1, %s48
      %s58 = scalar_select %p55, %s57, %s48
      %p59 = scmp.ge.s32.totalorder %s58, 2
      %s60 = scalar_select %p59, 0, %s58
      %s62 = sadd.s32 %s61, 1
      %p65 = scmp.eq.s32.totalorder %s41, 3
      %p66 = scmp.ne.s32.totalorder %s61, %s63
      %p67 = scmp.eq.s32.totalorder %s41, 0
      %p68 = por %p66, %p67
      %p69 = scmp.ne.s32.totalorder %s61, %s63
      %p70 = scmp.eq.s32.totalorder %s46, 3
      %p71 = por %p69, %p70
      %p72 = scmp.ne.s32.totalorder %s63, %s64
      %p73 = scmp.eq.s32.totalorder %s46, 0
      %p74 = por %p72, %p73
      %p75 = scmp.ne.s32.totalorder %s63, %s64
      %p76 = scmp.eq.s32.totalorder %s47, 3
      %p77 = por %p75, %p76
      %p79 = scmp.ne.s32.totalorder %s64, %s78
      %p80 = scmp.eq.s32.totalorder %s47, 0
      %p81 = por %p79, %p80
      %s82 = ssub.s32 %s48, %s60
      %p83 = scmp.eq.s32.totalorder %s82, 0
      %s85 = sadd.s32 %s84, 1
      %s86 = scalar_select %p83, %s84, %s85
      %p89 = pneg %p83
      %p90 = scmp.eq.s32.totalorder %s41, 3
      %p91 = por %p89, %p90
      %p92 = scmp.ne.s32.totalorder %s84, %s87
      %p93 = scmp.eq.s32.totalorder %s41, 0
      %p94 = por %p92, %p93
      %p95 = scmp.ne.s32.totalorder %s84, %s87
      %p96 = scmp.eq.s32.totalorder %s46, 3
      %p97 = por %p95, %p96
      %p98 = scmp.ne.s32.totalorder %s87, %s88
      %p99 = scmp.eq.s32.totalorder %s46, 0
      %p100 = por %p98, %p99
      %p101 = scmp.ne.s32.totalorder %s87, %s88
      %p102 = scmp.eq.s32.totalorder %s47, 3
      %p103 = por %p101, %p102
      %p105 = scmp.ne.s32.totalorder %s88, %s104
      %p106 = scmp.eq.s32.totalorder %s47, 0
      %p107 = por %p105, %p106
      %s108 = ssub.s32 %s48, %s60
      %p109 = scmp.eq.s32.totalorder %s108, 0
      %s111 = sadd.s32 %s110, 1
      %s112 = scalar_select %p109, %s110, %s111
      %p115 = pneg %p109
      %p116 = scmp.eq.s32.totalorder %s41, 3
      %p117 = por %p115, %p116
      %p118 = scmp.ne.s32.totalorder %s110, %s113
      %p119 = scmp.eq.s32.totalorder %s41, 0
      %p120 = por %p118, %p119
      %p121 = scmp.ne.s32.totalorder %s110, %s113
      %p122 = scmp.eq.s32.totalorder %s46, 3
      %p123 = por %p121, %p122
      %p124 = scmp.ne.s32.totalorder %s113, %s114
      %p125 = scmp.eq.s32.totalorder %s46, 0
      %p126 = por %p124, %p125
      %p127 = scmp.ne.s32.totalorder %s113, %s114
      %p128 = scmp.eq.s32.totalorder %s47, 3
      %p129 = por %p127, %p128
      %p131 = scmp.ne.s32.totalorder %s114, %s130
      %p132 = scmp.eq.s32.totalorder %s47, 0
      %p133 = por %p131, %p132
      %s134 = ssub.s32 %s48, %s60
      %p135 = scmp.eq.s32.totalorder %s134, 0
      %s137 = sadd.s32 %s136, 1
      %s138 = scalar_select %p135, %s136, %s137
      %p141 = pneg %p135
      %p142 = scmp.eq.s32.totalorder %s41, 3
      %p143 = por %p141, %p142
      %p144 = scmp.ne.s32.totalorder %s136, %s139
      %p145 = scmp.eq.s32.totalorder %s41, 0
      %p146 = por %p144, %p145
      %p147 = scmp.ne.s32.totalorder %s136, %s139
      %p148 = scmp.eq.s32.totalorder %s46, 3
      %p149 = por %p147, %p148
      %p150 = scmp.ne.s32.totalorder %s139, %s140
      %p151 = scmp.eq.s32.totalorder %s46, 0
      %p152 = por %p150, %p151
      %p153 = scmp.ne.s32.totalorder %s139, %s140
      %p154 = scmp.eq.s32.totalorder %s47, 3
      %p155 = por %p153, %p154
      %p157 = scmp.ne.s32.totalorder %s140, %s156
      %p158 = scmp.eq.s32.totalorder %s47, 0
      %p159 = por %p157, %p158
      %s160 = ssub.s32 %s48, %s60
      %p161 = scmp.eq.s32.totalorder %s160, 0
      %s163 = sadd.s32 %s162, 1
      %s164 = scalar_select %p161, %s162, %s163
      %p167 = pneg %p161
      %p168 = scmp.eq.s32.totalorder %s41, 3
      %p169 = por %p167, %p168
      %p170 = scmp.ne.s32.totalorder %s162, %s165
      %p171 = scmp.eq.s32.totalorder %s41, 0
      %p172 = por %p170, %p171
      %p173 = scmp.ne.s32.totalorder %s162, %s165
      %p174 = scmp.eq.s32.totalorder %s46, 3
      %p175 = por %p173, %p174
      %p176 = scmp.ne.s32.totalorder %s165, %s166
      %p177 = scmp.eq.s32.totalorder %s46, 0
      %p178 = por %p176, %p177
      %p179 = scmp.ne.s32.totalorder %s165, %s166
      %p180 = scmp.eq.s32.totalorder %s47, 3
      %p181 = por %p179, %p180
      %p183 = scmp.ne.s32.totalorder %s166, %s182
      %p184 = scmp.eq.s32.totalorder %s47, 0
      %p185 = por %p183, %p184
      %s186 = ssub.s32 %s49, %s56
      %p187 = scmp.eq.s32.totalorder %s186, 0
      %s189 = sadd.s32 %s188, 1
      %s190 = scalar_select %p187, %s188, %s189
      %p193 = pneg %p187
      %p194 = scmp.eq.s32.totalorder %s41, 3
      %p195 = por %p193, %p194
      %p196 = scmp.ne.s32.totalorder %s188, %s191
      %p197 = scmp.eq.s32.totalorder %s41, 0
      %p198 = por %p196, %p197
      %p199 = scmp.ne.s32.totalorder %s188, %s191
      %p200 = scmp.eq.s32.totalorder %s46, 3
      %p201 = por %p199, %p200
      %p202 = scmp.ne.s32.totalorder %s191, %s192
      %p203 = scmp.eq.s32.totalorder %s46, 0
      %p204 = por %p202, %p203
      %p205 = scmp.ne.s32.totalorder %s191, %s192
      %p206 = scmp.eq.s32.totalorder %s47, 3
      %p207 = por %p205, %p206
      %p209 = scmp.ne.s32.totalorder %s192, %s208
      %p210 = scmp.eq.s32.totalorder %s47, 0
      %p211 = por %p209, %p210
      %s212 = ssub.s32 %s49, %s56
      %p213 = scmp.eq.s32.totalorder %s212, 0
      %s215 = sadd.s32 %s214, 1
      %s216 = scalar_select %p213, %s214, %s215
      %p219 = pneg %p213
      %p220 = scmp.eq.s32.totalorder %s41, 3
      %p221 = por %p219, %p220
      %p222 = scmp.ne.s32.totalorder %s214, %s217
      %p223 = scmp.eq.s32.totalorder %s41, 0
      %p224 = por %p222, %p223
      %p225 = scmp.ne.s32.totalorder %s214, %s217
      %p226 = scmp.eq.s32.totalorder %s46, 3
      %p227 = por %p225, %p226
      %p228 = scmp.ne.s32.totalorder %s217, %s218
      %p229 = scmp.eq.s32.totalorder %s46, 0
      %p230 = por %p228, %p229
      %p231 = scmp.ne.s32.totalorder %s217, %s218
      %p232 = scmp.eq.s32.totalorder %s47, 3
      %p233 = por %p231, %p232
      %p235 = scmp.ne.s32.totalorder %s218, %s234
      %p236 = scmp.eq.s32.totalorder %s47, 0
      %p237 = por %p235, %p236
      %s238 = ssub.s32 %s49, %s56
      %p239 = scmp.eq.s32.totalorder %s238, 0
      %s241 = sadd.s32 %s240, 1
      %s242 = scalar_select %p239, %s240, %s241
      %p245 = pneg %p239
      %p246 = scmp.eq.s32.totalorder %s41, 3
      %p247 = por %p245, %p246
      %p248 = scmp.ne.s32.totalorder %s240, %s243
      %p249 = scmp.eq.s32.totalorder %s41, 0
      %p250 = por %p248, %p249
      %p251 = scmp.ne.s32.totalorder %s240, %s243
      %p252 = scmp.eq.s32.totalorder %s46, 3
      %p253 = por %p251, %p252
      %p254 = scmp.ne.s32.totalorder %s243, %s244
      %p255 = scmp.eq.s32.totalorder %s46, 0
      %p256 = por %p254, %p255
      %p257 = scmp.ne.s32.totalorder %s243, %s244
      %p258 = scmp.eq.s32.totalorder %s47, 3
      %p259 = por %p257, %p258
      %p261 = scmp.ne.s32.totalorder %s244, %s260
      %p262 = scmp.eq.s32.totalorder %s47, 0
      %p263 = por %p261, %p262
      %s264 = ssub.s32 %s49, %s56
      %p265 = scmp.eq.s32.totalorder %s264, 0
      %s267 = sadd.s32 %s266, 1
      %s268 = scalar_select %p265, %s266, %s267
      %p271 = pneg %p265
      %p272 = scmp.eq.s32.totalorder %s41, 3
      %p273 = por %p271, %p272
      %p274 = scmp.ne.s32.totalorder %s266, %s269
      %p275 = scmp.eq.s32.totalorder %s41, 0
      %p276 = por %p274, %p275
      %p277 = scmp.ne.s32.totalorder %s266, %s269
      %p278 = scmp.eq.s32.totalorder %s46, 3
      %p279 = por %p277, %p278
      %p280 = scmp.ne.s32.totalorder %s269, %s270
      %p281 = scmp.eq.s32.totalorder %s46, 0
      %p282 = por %p280, %p281
      %p283 = scmp.ne.s32.totalorder %s269, %s270
      %p284 = scmp.eq.s32.totalorder %s47, 3
      %p285 = por %p283, %p284
      %p287 = scmp.ne.s32.totalorder %s270, %s286
      %p288 = scmp.eq.s32.totalorder %s47, 0
      %p289 = por %p287, %p288
      %s290 = ssub.s32 %s49, %s56
      %p291 = scmp.eq.s32.totalorder %s290, 0
      %s293 = sadd.s32 %s292, 1
      %s294 = scalar_select %p291, %s292, %s293
      %p297 = pneg %p291
      %p298 = scmp.eq.s32.totalorder %s41, 3
      %p299 = por %p297, %p298
      %p300 = scmp.ne.s32.totalorder %s292, %s295
      %p301 = scmp.eq.s32.totalorder %s41, 0
      %p302 = por %p300, %p301
      %p303 = scmp.ne.s32.totalorder %s292, %s295
      %p304 = scmp.eq.s32.totalorder %s46, 3
      %p305 = por %p303, %p304
      %p306 = scmp.ne.s32.totalorder %s295, %s296
      %p307 = scmp.eq.s32.totalorder %s46, 0
      %p308 = por %p306, %p307
      %p309 = scmp.ne.s32.totalorder %s295, %s296
      %p310 = scmp.eq.s32.totalorder %s47, 3
      %p311 = por %p309, %p310
      %p313 = scmp.ne.s32.totalorder %s296, %s312
      %p314 = scmp.eq.s32.totalorder %s47, 0
      %p315 = por %p313, %p314
      %s316 = ssub.s32 %s49, %s56
      %p317 = scmp.eq.s32.totalorder %s316, 0
      %s319 = sadd.s32 %s318, 1
      %s320 = scalar_select %p317, %s318, %s319
      %p323 = pneg %p317
      %p324 = scmp.eq.s32.totalorder %s41, 3
      %p325 = por %p323, %p324
      %p326 = scmp.ne.s32.totalorder %s318, %s321
      %p327 = scmp.eq.s32.totalorder %s41, 0
      %p328 = por %p326, %p327
      %p329 = scmp.ne.s32.totalorder %s318, %s321
      %p330 = scmp.eq.s32.totalorder %s46, 3
      %p331 = por %p329, %p330
      %p332 = scmp.ne.s32.totalorder %s321, %s322
      %p333 = scmp.eq.s32.totalorder %s46, 0
      %p334 = por %p332, %p333
      %p335 = scmp.ne.s32.totalorder %s321, %s322
      %p336 = scmp.eq.s32.totalorder %s47, 3
      %p337 = por %p335, %p336
      %p339 = scmp.ne.s32.totalorder %s322, %s338
      %p340 = scmp.eq.s32.totalorder %s47, 0
      %p341 = por %p339, %p340
      %s342 = ssub.s32 %s49, %s56
      %p343 = scmp.eq.s32.totalorder %s342, 0
      %s345 = sadd.s32 %s344, 1
      %s346 = scalar_select %p343, %s344, %s345
      %p349 = pneg %p343
      %p350 = scmp.eq.s32.totalorder %s41, 3
      %p351 = por %p349, %p350
      %p352 = scmp.ne.s32.totalorder %s344, %s347
      %p353 = scmp.eq.s32.totalorder %s41, 0
      %p354 = por %p352, %p353
      %p355 = scmp.ne.s32.totalorder %s344, %s347
      %p356 = scmp.eq.s32.totalorder %s46, 3
      %p357 = por %p355, %p356
      %p358 = scmp.ne.s32.totalorder %s347, %s348
      %p359 = scmp.eq.s32.totalorder %s46, 0
      %p360 = por %p358, %p359
      %p361 = scmp.ne.s32.totalorder %s347, %s348
      %p362 = scmp.eq.s32.totalorder %s47, 3
      %p363 = por %p361, %p362
      %p365 = scmp.ne.s32.totalorder %s348, %s364
      %p366 = scmp.eq.s32.totalorder %s47, 0
      %p367 = por %p365, %p366
      %s368 = ssub.s32 %s49, %s56
      %p369 = scmp.eq.s32.totalorder %s368, 0
      %s371 = sadd.s32 %s370, 1
      %s372 = scalar_select %p369, %s370, %s371
      %p375 = pneg %p369
      %p376 = scmp.eq.s32.totalorder %s41, 3
      %p377 = por %p375, %p376
      %p378 = scmp.ne.s32.totalorder %s370, %s373
      %p379 = scmp.eq.s32.totalorder %s41, 0
      %p380 = por %p378, %p379
      %p381 = scmp.ne.s32.totalorder %s370, %s373
      %p382 = scmp.eq.s32.totalorder %s46, 3
      %p383 = por %p381, %p382
      %p384 = scmp.ne.s32.totalorder %s373, %s374
      %p385 = scmp.eq.s32.totalorder %s46, 0
      %p386 = por %p384, %p385
      %p387 = scmp.ne.s32.totalorder %s373, %s374
      %p388 = scmp.eq.s32.totalorder %s47, 3
      %p389 = por %p387, %p388
      %p391 = scmp.ne.s32.totalorder %s374, %s390
      %p392 = scmp.eq.s32.totalorder %s47, 0
      %p393 = por %p391, %p392
      %s394 = ssub.s32 %s49, %s56
      %p395 = scmp.eq.s32.totalorder %s394, 0
      %s397 = sadd.s32 %s396, 1
      %s398 = scalar_select %p395, %s396, %s397
      %p401 = pneg %p395
      %p402 = scmp.eq.s32.totalorder %s41, 3
      %p403 = por %p401, %p402
      %p404 = scmp.ne.s32.totalorder %s396, %s399
      %p405 = scmp.eq.s32.totalorder %s41, 0
      %p406 = por %p404, %p405
      %p407 = scmp.ne.s32.totalorder %s396, %s399
      %p408 = scmp.eq.s32.totalorder %s46, 3
      %p409 = por %p407, %p408
      %p410 = scmp.ne.s32.totalorder %s399, %s400
      %p411 = scmp.eq.s32.totalorder %s46, 0
      %p412 = por %p410, %p411
      %p413 = scmp.ne.s32.totalorder %s399, %s400
      %p414 = scmp.eq.s32.totalorder %s47, 3
      %p415 = por %p413, %p414
      %p417 = scmp.ne.s32.totalorder %s400, %s416
      %p418 = scmp.eq.s32.totalorder %s47, 0
      %p419 = por %p417, %p418
      %s420 = ssub.s32 %s49, %s56
      %p421 = scmp.eq.s32.totalorder %s420, 0
      %s423 = sadd.s32 %s422, 1
      %s424 = scalar_select %p421, %s422, %s423
      %p427 = pneg %p421
      %p428 = scmp.eq.s32.totalorder %s41, 3
      %p429 = por %p427, %p428
      %p430 = scmp.ne.s32.totalorder %s422, %s425
      %p431 = scmp.eq.s32.totalorder %s41, 0
      %p432 = por %p430, %p431
      %p433 = scmp.ne.s32.totalorder %s422, %s425
      %p434 = scmp.eq.s32.totalorder %s46, 3
      %p435 = por %p433, %p434
      %p436 = scmp.ne.s32.totalorder %s425, %s426
      %p437 = scmp.eq.s32.totalorder %s46, 0
      %p438 = por %p436, %p437
      %p439 = scmp.ne.s32.totalorder %s425, %s426
      %p440 = scmp.eq.s32.totalorder %s47, 3
      %p441 = por %p439, %p440
      %p443 = scmp.ne.s32.totalorder %s426, %s442
      %p444 = scmp.eq.s32.totalorder %s47, 0
      %p445 = por %p443, %p444
      %s446 = ssub.s32 %s49, %s56
      %p447 = scmp.eq.s32.totalorder %s446, 0
      %s449 = sadd.s32 %s448, 1
      %s450 = scalar_select %p447, %s448, %s449
      %p453 = pneg %p447
      %p454 = scmp.eq.s32.totalorder %s41, 3
      %p455 = por %p453, %p454
      %p456 = scmp.ne.s32.totalorder %s448, %s451
      %p457 = scmp.eq.s32.totalorder %s41, 0
      %p458 = por %p456, %p457
      %p459 = scmp.ne.s32.totalorder %s448, %s451
      %p460 = scmp.eq.s32.totalorder %s46, 3
      %p461 = por %p459, %p460
      %p462 = scmp.ne.s32.totalorder %s451, %s452
      %p463 = scmp.eq.s32.totalorder %s46, 0
      %p464 = por %p462, %p463
      %p465 = scmp.ne.s32.totalorder %s451, %s452
      %p466 = scmp.eq.s32.totalorder %s47, 3
      %p467 = por %p465, %p466
      %p469 = scmp.ne.s32.totalorder %s452, %s468
      %p470 = scmp.eq.s32.totalorder %s47, 0
      %p471 = por %p469, %p470
      %s472 = ssub.s32 %s49, %s56
      %p473 = scmp.eq.s32.totalorder %s472, 0
      %s475 = sadd.s32 %s474, 1
      %s476 = scalar_select %p473, %s474, %s475
      %p479 = pneg %p473
      %p480 = scmp.eq.s32.totalorder %s41, 3
      %p481 = por %p479, %p480
      %p482 = scmp.ne.s32.totalorder %s474, %s477
      %p483 = scmp.eq.s32.totalorder %s41, 0
      %p484 = por %p482, %p483
      %p485 = scmp.ne.s32.totalorder %s474, %s477
      %p486 = scmp.eq.s32.totalorder %s46, 3
      %p487 = por %p485, %p486
      %p488 = scmp.ne.s32.totalorder %s477, %s478
      %p489 = scmp.eq.s32.totalorder %s46, 0
      %p490 = por %p488, %p489
      %p491 = scmp.ne.s32.totalorder %s477, %s478
      %p492 = scmp.eq.s32.totalorder %s47, 3
      %p493 = por %p491, %p492
      %p495 = scmp.ne.s32.totalorder %s478, %s494
      %p496 = scmp.eq.s32.totalorder %s47, 0
      %p497 = por %p495, %p496
      %s498 = ssub.s32 %s49, %s56
      %p499 = scmp.eq.s32.totalorder %s498, 0
      %s501 = sadd.s32 %s500, 1
      %s502 = scalar_select %p499, %s500, %s501
      %p505 = pneg %p499
      %p506 = scmp.eq.s32.totalorder %s41, 3
      %p507 = por %p505, %p506
      %p508 = scmp.ne.s32.totalorder %s500, %s503
      %p509 = scmp.eq.s32.totalorder %s41, 0
      %p510 = por %p508, %p509
      %p511 = scmp.ne.s32.totalorder %s500, %s503
      %p512 = scmp.eq.s32.totalorder %s46, 3
      %p513 = por %p511, %p512
      %p514 = scmp.ne.s32.totalorder %s503, %s504
      %p515 = scmp.eq.s32.totalorder %s46, 0
      %p516 = por %p514, %p515
      %p517 = scmp.ne.s32.totalorder %s503, %s504
      %p518 = scmp.eq.s32.totalorder %s47, 3
      %p519 = por %p517, %p518
      %p521 = scmp.ne.s32.totalorder %s504, %s520
      %p522 = scmp.eq.s32.totalorder %s47, 0
      %p523 = por %p521, %p522
      %s524 = ssub.s32 %s49, %s56
      %p525 = scmp.eq.s32.totalorder %s524, 0
      %s527 = sadd.s32 %s526, 1
      %s528 = scalar_select %p525, %s526, %s527
      %p531 = pneg %p525
      %p532 = scmp.eq.s32.totalorder %s41, 3
      %p533 = por %p531, %p532
      %p534 = scmp.ne.s32.totalorder %s526, %s529
      %p535 = scmp.eq.s32.totalorder %s41, 0
      %p536 = por %p534, %p535
      %p537 = scmp.ne.s32.totalorder %s526, %s529
      %p538 = scmp.eq.s32.totalorder %s46, 3
      %p539 = por %p537, %p538
      %p540 = scmp.ne.s32.totalorder %s529, %s530
      %p541 = scmp.eq.s32.totalorder %s46, 0
      %p542 = por %p540, %p541
      %p543 = scmp.ne.s32.totalorder %s529, %s530
      %p544 = scmp.eq.s32.totalorder %s47, 3
      %p545 = por %p543, %p544
      %p547 = scmp.ne.s32.totalorder %s530, %s546
      %p548 = scmp.eq.s32.totalorder %s47, 0
      %p549 = por %p547, %p548
      %s550 = ssub.s32 %s48, %s60
      %p551 = scmp.eq.s32.totalorder %s550, 0
      %s553 = sadd.s32 %s552, 1
      %s554 = scalar_select %p551, %s552, %s553
      %p557 = pneg %p551
      %p558 = scmp.eq.s32.totalorder %s41, 3
      %p559 = por %p557, %p558
      %p560 = scmp.ne.s32.totalorder %s552, %s555
      %p561 = scmp.eq.s32.totalorder %s41, 0
      %p562 = por %p560, %p561
      %p563 = scmp.ne.s32.totalorder %s552, %s555
      %p564 = scmp.eq.s32.totalorder %s46, 3
      %p565 = por %p563, %p564
      %p566 = scmp.ne.s32.totalorder %s555, %s556
      %p567 = scmp.eq.s32.totalorder %s46, 0
      %p568 = por %p566, %p567
      %p569 = scmp.ne.s32.totalorder %s555, %s556
      %p570 = scmp.eq.s32.totalorder %s47, 3
      %p571 = por %p569, %p570
      %p573 = scmp.ne.s32.totalorder %s556, %s572
      %p574 = scmp.eq.s32.totalorder %s47, 0
      %p575 = por %p573, %p574
      %p576 = scmp.le.s32.totalorder 1, %s41
      %p577 = scmp.lt.s32.totalorder %s41, 5
      %p578 = pnand %p576, %p577
      %p579 = pneg %p578
      // Predicated region
      $region9: #{tpu_custom_call.1} parent=5 // pred_check
        _
      $region10: #{tpu_custom_call.1} parent=5 // pred_check_branch
        %581 = sbr.rel (%p578) target = $region12
      $region11: #{tpu_custom_call.1} parent=5 // pred_region
        %s582 = ssub.s32 %s41, 1
        // Predicated region
        $region13: #{tpu_custom_call.1} parent=11 // pred_check
          %p583 = pneg %p74
        $region14: #{tpu_custom_call.1} parent=11 // pred_check_branch
          %585 = sbr.rel (%p583) target = $region16
        $region15: #{tpu_custom_call.1} parent=11 // pred_region
          %s587 = ssub.s32 16, 16
          %588 = vsyncadd [#allocation6], %s587
          %591 = dma.hbm_to_smem %s0, 16, [#allocation3], [#allocation6]
        $region16: #{tpu_custom_call.1} parent=11 // pred_fallthru
          _
      $region12: #{tpu_custom_call.1} parent=5 // pred_fallthru
        _
      %p592 = scmp.lt.s32.totalorder %s41, 4
      // Predicated region
      $region17: #{tpu_custom_call.1} parent=5 // pred_check
        %p593 = pneg %p592
      $region18: #{tpu_custom_call.1} parent=5 // pred_check_branch
        %595 = sbr.rel (%p593) target = $region20
      $region19: #{tpu_custom_call.1} parent=5 // pred_region
        // Predicated region
        $region21: #{tpu_custom_call.1} parent=19 // pred_check
          %p596 = pneg %p94
        $region22: #{tpu_custom_call.1} parent=19 // pred_check_branch
          %598 = sbr.rel (%p596) target = $region24
        $region23: #{tpu_custom_call.1} parent=19 // pred_region
          %s599 = sand.u32 %s84, 1
          %s600 = scalar_lea.sflag [#allocation4], %s599
          %s601 = sand.u32 %s84, 1
          %s602 = smul.addr %s601, 8
          %s603 = scalar_lea.vmem [#allocation7], %s602
          %s605 = ssub.s32 128, 128
          %606 = vsyncadd %s600, %s605
          %s607 = smul.addr %s48, 128
          %s608 = scalar_lea.hbm %s1, %s607
          %s610 = sshll.u32 %s603, 4
          %s611 = int_to_ptr.vmem [resolvable:$true] %s610
          %613 = dma.hbm_to_vmem [thread:$0]  %s608, 128, %s611, %s600
        $region24: #{tpu_custom_call.1} parent=19 // pred_fallthru
          _
        // Predicated region
        $region25: #{tpu_custom_call.1} parent=19 // pred_check
          %p614 = pneg %p120
        $region26: #{tpu_custom_call.1} parent=19 // pred_check_branch
          %616 = sbr.rel (%p614) target = $region28
        $region27: #{tpu_custom_call.1} parent=19 // pred_region
          %p617 = scmp.lt.s32.totalorder %s48, 1
          %s618 = scalar_select %p617, %s48, 1
          %s619 = smul.addr %s618, 2
          %s620 = smul.addr %s619, 8
          %s621 = scalar_lea.vmem %s2, %s620
        $region28: #{tpu_custom_call.1} parent=19 // pred_fallthru
          _
        // Predicated region
        $region29: #{tpu_custom_call.1} parent=19 // pred_check
          %p622 = pneg %p146
        $region30: #{tpu_custom_call.1} parent=19 // pred_check_branch
          %624 = sbr.rel (%p622) target = $region32
        $region31: #{tpu_custom_call.1} parent=19 // pred_region
          %s625 = sand.u32 %s41, 1
          %s626 = scalar_lea.sflag [#allocation9], %s625
          %s627 = sand.u32 %s136, 1
          %s628 = smul.addr %s627, 8
          %s629 = scalar_lea.vmem [#allocation8], %s628
          %s631 = ssub.s32 128, 128
          %632 = vsyncadd %s626, %s631
          %s633 = smul.addr %s48, 128
          %s634 = scalar_lea.hbm %s3, %s633
          %s636 = sshll.u32 %s629, 4
          %s637 = int_to_ptr.vmem [resolvable:$true] %s636
          %639 = dma.hbm_to_vmem [thread:$0]  %s634, 128, %s637, %s626
        $region32: #{tpu_custom_call.1} parent=19 // pred_fallthru
          _
        // Predicated region
        $region33: #{tpu_custom_call.1} parent=19 // pred_check
          %p640 = pneg %p172
        $region34: #{tpu_custom_call.1} parent=19 // pred_check_branch
          %642 = sbr.rel (%p640) target = $region36
        $region35: #{tpu_custom_call.1} parent=19 // pred_region
          %p643 = scmp.lt.s32.totalorder %s48, 1
          %s644 = scalar_select %p643, %s48, 1
          %s645 = scalar_lea.vmem %s4, %s644
        $region36: #{tpu_custom_call.1} parent=19 // pred_fallthru
          _
        // Predicated region
        $region37: #{tpu_custom_call.1} parent=19 // pred_check
          %p646 = pneg %p198
        $region38: #{tpu_custom_call.1} parent=19 // pred_check_branch
          %648 = sbr.rel (%p646) target = $region40
        $region39: #{tpu_custom_call.1} parent=19 // pred_region
          %p649 = scmp.lt.s32.totalorder %s49, 1
          %s650 = scalar_select %p649, %s49, 1
          %s651 = smul.addr %s650, 4
          %s652 = smul.addr %s651, 4
          %s653 = scalar_lea.vmem %s5, %s652
        $region40: #{tpu_custom_call.1} parent=19 // pred_fallthru
          _
        // Predicated region
        $region41: #{tpu_custom_call.1} parent=19 // pred_check
          %p654 = pneg %p224
        $region42: #{tpu_custom_call.1} parent=19 // pred_check_branch
          %656 = sbr.rel (%p654) target = $region44
        $region43: #{tpu_custom_call.1} parent=19 // pred_region
          %p657 = scmp.lt.s32.totalorder %s49, 1
          %s658 = scalar_select %p657, %s49, 1
          %s659 = scalar_lea.vmem %s6, %s658
        $region44: #{tpu_custom_call.1} parent=19 // pred_fallthru
          _
        // Predicated region
        $region45: #{tpu_custom_call.1} parent=19 // pred_check
          %p660 = pneg %p250
        $region46: #{tpu_custom_call.1} parent=19 // pred_check_branch
          %662 = sbr.rel (%p660) target = $region48
        $region47: #{tpu_custom_call.1} parent=19 // pred_region
          %p663 = scmp.lt.s32.totalorder %s49, 1
          %s664 = scalar_select %p663, %s49, 1
          %s665 = smul.addr %s664, 4
          %s666 = smul.addr %s665, 4
          %s667 = scalar_lea.vmem %s7, %s666
        $region48: #{tpu_custom_call.1} parent=19 // pred_fallthru
          _
        // Predicated region
        $region49: #{tpu_custom_call.1} parent=19 // pred_check
          %p668 = pneg %p276
        $region50: #{tpu_custom_call.1} parent=19 // pred_check_branch
          %670 = sbr.rel (%p668) target = $region52
        $region51: #{tpu_custom_call.1} parent=19 // pred_region
          %p671 = scmp.lt.s32.totalorder %s49, 1
          %s672 = scalar_select %p671, %s49, 1
          %s673 = scalar_lea.vmem %s8, %s672
        $region52: #{tpu_custom_call.1} parent=19 // pred_fallthru
          _
        // Predicated region
        $region53: #{tpu_custom_call.1} parent=19 // pred_check
          %p674 = pneg %p302
        $region54: #{tpu_custom_call.1} parent=19 // pred_check_branch
          %676 = sbr.rel (%p674) target = $region56
        $region55: #{tpu_custom_call.1} parent=19 // pred_region
          %s677 = sand.u32 %s41, 1
          %s678 = scalar_lea.sflag [#allocation9], %s677
          %s679 = sand.u32 %s292, 1
          %s680 = smul.addr %s679, 16
          %s681 = scalar_lea.vmem [#allocation10], %s680
          %s683 = ssub.s32 256, 256
          %684 = vsyncadd %s678, %s683
          %s685 = smul.addr %s49, 4
          %s686 = smul.addr %s685, 64
          %s687 = scalar_lea.hbm %s9, %s686
          %s688 = sshll.u32 %s681, 4
          %s689 = int_to_ptr.vmem [resolvable:$true] %s688
          %694 = dma.hbm_to_vmem [thread:$0]  %s687, 256, %s689, %s678, 64, 64, 4
        $region56: #{tpu_custom_call.1} parent=19 // pred_fallthru
          _
        // Predicated region
        $region57: #{tpu_custom_call.1} parent=19 // pred_check
          %p695 = pneg %p328
        $region58: #{tpu_custom_call.1} parent=19 // pred_check_branch
          %697 = sbr.rel (%p695) target = $region60
        $region59: #{tpu_custom_call.1} parent=19 // pred_region
          %p698 = scmp.lt.s32.totalorder %s49, 1
          %s699 = scalar_select %p698, %s49, 1
          %s700 = scalar_lea.vmem %s10, %s699
        $region60: #{tpu_custom_call.1} parent=19 // pred_fallthru
          _
        // Predicated region
        $region61: #{tpu_custom_call.1} parent=19 // pred_check
          %p701 = pneg %p354
        $region62: #{tpu_custom_call.1} parent=19 // pred_check_branch
          %703 = sbr.rel (%p701) target = $region64
        $region63: #{tpu_custom_call.1} parent=19 // pred_region
          %s704 = sand.u32 %s41, 1
          %s705 = scalar_lea.sflag [#allocation12], %s704
          %s706 = sand.u32 %s344, 1
          %s707 = smul.addr %s706, 16
          %s708 = scalar_lea.vmem [#allocation11], %s707
          %s710 = ssub.s32 256, 256
          %711 = vsyncadd %s705, %s710
          %s712 = smul.addr %s49, 4
          %s713 = smul.addr %s712, 64
          %s714 = scalar_lea.hbm %s11, %s713
          %s715 = sshll.u32 %s708, 4
          %s716 = int_to_ptr.vmem [resolvable:$true] %s715
          %721 = dma.hbm_to_vmem [thread:$0]  %s714, 256, %s716, %s705, 64, 64, 4
        $region64: #{tpu_custom_call.1} parent=19 // pred_fallthru
          _
        // Predicated region
        $region65: #{tpu_custom_call.1} parent=19 // pred_check
          %p722 = pneg %p380
        $region66: #{tpu_custom_call.1} parent=19 // pred_check_branch
          %724 = sbr.rel (%p722) target = $region68
        $region67: #{tpu_custom_call.1} parent=19 // pred_region
          %p725 = scmp.lt.s32.totalorder %s49, 1
          %s726 = scalar_select %p725, %s49, 1
          %s727 = scalar_lea.vmem %s12, %s726
        $region68: #{tpu_custom_call.1} parent=19 // pred_fallthru
          _
        // Predicated region
        $region69: #{tpu_custom_call.1} parent=19 // pred_check
          %p728 = pneg %p406
        $region70: #{tpu_custom_call.1} parent=19 // pred_check_branch
          %730 = sbr.rel (%p728) target = $region72
        $region71: #{tpu_custom_call.1} parent=19 // pred_region
          %s731 = sand.u32 %s41, 1
          %s732 = scalar_lea.sflag [#allocation12], %s731
          %s733 = sand.u32 %s396, 1
          %s734 = smul.addr %s733, 16
          %s735 = scalar_lea.vmem [#allocation13], %s734
          %s737 = ssub.s32 256, 256
          %738 = vsyncadd %s732, %s737
          %s739 = smul.addr %s49, 4
          %s740 = smul.addr %s739, 64
          %s741 = scalar_lea.hbm %s13, %s740
          %s742 = sshll.u32 %s735, 4
          %s743 = int_to_ptr.vmem [resolvable:$true] %s742
          %748 = dma.hbm_to_vmem [thread:$0]  %s741, 256, %s743, %s732, 64, 64, 4
        $region72: #{tpu_custom_call.1} parent=19 // pred_fallthru
          _
        // Predicated region
        $region73: #{tpu_custom_call.1} parent=19 // pred_check
          %p749 = pneg %p432
        $region74: #{tpu_custom_call.1} parent=19 // pred_check_branch
          %751 = sbr.rel (%p749) target = $region76
        $region75: #{tpu_custom_call.1} parent=19 // pred_region
          %p752 = scmp.lt.s32.totalorder %s49, 1
          %s753 = scalar_select %p752, %s49, 1
          %s754 = scalar_lea.vmem %s14, %s753
        $region76: #{tpu_custom_call.1} parent=19 // pred_fallthru
          _
        // Predicated region
        $region77: #{tpu_custom_call.1} parent=19 // pred_check
          %p755 = pneg %p458
        $region78: #{tpu_custom_call.1} parent=19 // pred_check_branch
          %757 = sbr.rel (%p755) target = $region80
        $region79: #{tpu_custom_call.1} parent=19 // pred_region
          %s758 = sand.u32 %s448, 1
          %s759 = scalar_lea.sflag [#allocation15], %s758
          %s760 = sand.u32 %s448, 1
          %s761 = smul.addr %s760, 16
          %s762 = scalar_lea.vmem [#allocation14], %s761
          %s764 = ssub.s32 256, 256
          %765 = vsyncadd %s759, %s764
          %s766 = smul.addr %s49, 4
          %s767 = smul.addr %s766, 64
          %s768 = scalar_lea.hbm %s15, %s767
          %s769 = sshll.u32 %s762, 4
          %s770 = int_to_ptr.vmem [resolvable:$true] %s769
          %775 = dma.hbm_to_vmem [thread:$0]  %s768, 256, %s770, %s759, 64, 64, 4
        $region80: #{tpu_custom_call.1} parent=19 // pred_fallthru
          _
        // Predicated region
        $region81: #{tpu_custom_call.1} parent=19 // pred_check
          %p776 = pneg %p484
        $region82: #{tpu_custom_call.1} parent=19 // pred_check_branch
          %778 = sbr.rel (%p776) target = $region84
        $region83: #{tpu_custom_call.1} parent=19 // pred_region
          %p779 = scmp.lt.s32.totalorder %s49, 1
          %s780 = scalar_select %p779, %s49, 1
          %s781 = scalar_lea.vmem %s16, %s780
        $region84: #{tpu_custom_call.1} parent=19 // pred_fallthru
          _
        // Predicated region
        $region85: #{tpu_custom_call.1} parent=19 // pred_check
          %p782 = pneg %p510
        $region86: #{tpu_custom_call.1} parent=19 // pred_check_branch
          %784 = sbr.rel (%p782) target = $region88
        $region87: #{tpu_custom_call.1} parent=19 // pred_region
          %p785 = scmp.lt.s32.totalorder %s49, 1
          %s786 = scalar_select %p785, %s49, 1
          %s787 = smul.addr %s786, 8
          %s788 = smul.addr %s787, 4
          %s789 = scalar_lea.vmem %s17, %s788
        $region88: #{tpu_custom_call.1} parent=19 // pred_fallthru
          _
        // Predicated region
        $region89: #{tpu_custom_call.1} parent=19 // pred_check
          %p790 = pneg %p536
        $region90: #{tpu_custom_call.1} parent=19 // pred_check_branch
          %792 = sbr.rel (%p790) target = $region92
        $region91: #{tpu_custom_call.1} parent=19 // pred_region
          %p793 = scmp.lt.s32.totalorder %s49, 1
          %s794 = scalar_select %p793, %s49, 1
          %s795 = scalar_lea.vmem %s18, %s794
        $region92: #{tpu_custom_call.1} parent=19 // pred_fallthru
          _
      $region20: #{tpu_custom_call.1} parent=5 // pred_fallthru
        _
      %p796 = scmp.le.s32.totalorder 1, %s41
      %p797 = scmp.lt.s32.totalorder %s41, 5
      %p798 = pnand %p796, %p797
      %p799 = pneg %p798
      // Predicated region
      $region93: #{tpu_custom_call.1} parent=5 // pred_check
        _
      $region94: #{tpu_custom_call.1} parent=5 // pred_check_branch
        %801 = sbr.rel (%p798) target = $region96
      $region95: #{tpu_custom_call.1} parent=5 // pred_region
        %s802 = ssub.s32 %s41, 1
        // Predicated region
        $region97: #{tpu_custom_call.1} parent=95 // pred_check
          %p803 = pneg %p74
        $region98: #{tpu_custom_call.1} parent=95 // pred_check_branch
          %805 = sbr.rel (%p803) target = $region100
        $region99: #{tpu_custom_call.1} parent=95 // pred_region
          %806 = dma.done [#allocation6], 16
        $region100: #{tpu_custom_call.1} parent=95 // pred_fallthru
          _
        %s807 = sand.u32 %s87, 1
        %s808 = scalar_lea.sflag [#allocation4], %s807
        %s809 = sand.u32 %s87, 1
        %s810 = smul.addr %s809, 8
        %s811 = scalar_lea.vmem [#allocation7], %s810
        // Predicated region
        $region101: #{tpu_custom_call.1} parent=95 // pred_check
          %p812 = pneg %p100
        $region102: #{tpu_custom_call.1} parent=95 // pred_check_branch
          %814 = sbr.rel (%p812) target = $region104
        $region103: #{tpu_custom_call.1} parent=95 // pred_region
          %815 = dma.done %s808, 128
        $region104: #{tpu_custom_call.1} parent=95 // pred_fallthru
          _
        %s816 = sand.u32 %s46, 1
        %s817 = scalar_lea.sflag [#allocation9], %s816
        %s818 = sand.u32 %s139, 1
        %s819 = smul.addr %s818, 8
        %s820 = scalar_lea.vmem [#allocation8], %s819
        // Predicated region
        $region105: #{tpu_custom_call.1} parent=95 // pred_check
          %p821 = pneg %p152
        $region106: #{tpu_custom_call.1} parent=95 // pred_check_branch
          %823 = sbr.rel (%p821) target = $region108
        $region107: #{tpu_custom_call.1} parent=95 // pred_region
          %824 = dma.done %s817, 128
        $region108: #{tpu_custom_call.1} parent=95 // pred_fallthru
          _
        %s825 = sand.u32 %s46, 1
        %s826 = scalar_lea.sflag [#allocation9], %s825
        %s827 = sand.u32 %s295, 1
        %s828 = smul.addr %s827, 16
        %s829 = scalar_lea.vmem [#allocation10], %s828
        // Predicated region
        $region109: #{tpu_custom_call.1} parent=95 // pred_check
          %p830 = pneg %p308
        $region110: #{tpu_custom_call.1} parent=95 // pred_check_branch
          %832 = sbr.rel (%p830) target = $region112
        $region111: #{tpu_custom_call.1} parent=95 // pred_region
          %833 = dma.done %s826, 256
        $region112: #{tpu_custom_call.1} parent=95 // pred_fallthru
          _
        %s834 = sand.u32 %s46, 1
        %s835 = scalar_lea.sflag [#allocation12], %s834
        %s836 = sand.u32 %s347, 1
        %s837 = smul.addr %s836, 16
        %s838 = scalar_lea.vmem [#allocation11], %s837
        // Predicated region
        $region113: #{tpu_custom_call.1} parent=95 // pred_check
          %p839 = pneg %p360
        $region114: #{tpu_custom_call.1} parent=95 // pred_check_branch
          %841 = sbr.rel (%p839) target = $region116
        $region115: #{tpu_custom_call.1} parent=95 // pred_region
          %842 = dma.done %s835, 256
        $region116: #{tpu_custom_call.1} parent=95 // pred_fallthru
          _
        %s843 = sand.u32 %s46, 1
        %s844 = scalar_lea.sflag [#allocation12], %s843
        %s845 = sand.u32 %s399, 1
        %s846 = smul.addr %s845, 16
        %s847 = scalar_lea.vmem [#allocation13], %s846
        // Predicated region
        $region117: #{tpu_custom_call.1} parent=95 // pred_check
          %p848 = pneg %p412
        $region118: #{tpu_custom_call.1} parent=95 // pred_check_branch
          %850 = sbr.rel (%p848) target = $region120
        $region119: #{tpu_custom_call.1} parent=95 // pred_region
          %851 = dma.done %s844, 256
        $region120: #{tpu_custom_call.1} parent=95 // pred_fallthru
          _
        %s852 = sand.u32 %s451, 1
        %s853 = scalar_lea.sflag [#allocation15], %s852
        %s854 = sand.u32 %s451, 1
        %s855 = smul.addr %s854, 16
        %s856 = scalar_lea.vmem [#allocation14], %s855
        // Predicated region
        $region121: #{tpu_custom_call.1} parent=95 // pred_check
          %p857 = pneg %p464
        $region122: #{tpu_custom_call.1} parent=95 // pred_check_branch
          %859 = sbr.rel (%p857) target = $region124
        $region123: #{tpu_custom_call.1} parent=95 // pred_region
          %860 = dma.done %s853, 256
        $region124: #{tpu_custom_call.1} parent=95 // pred_fallthru
          _
        %861 = sfence
        %p862 = pneg %p74
        %p863 = pneg %p71
        %s864 = sand.u32 %s87, 1
        %s865 = scalar_lea.sflag [#allocation4], %s864
        %s866 = sand.u32 %s87, 1
        %s867 = smul.addr %s866, 8
        %s868 = scalar_lea.vmem [#allocation7], %s867
        %p869 = pneg %p100
        %p870 = pneg %p97
        %p871 = scmp.lt.s32.totalorder %s50, 1
        %s872 = scalar_select %p871, %s50, 1
        %s873 = smul.addr %s872, 2
        %s874 = smul.addr %s873, 8
        %s875 = scalar_lea.vmem %s2, %s874
        %p876 = pneg %p126
        %p877 = pneg %p123
        %s878 = sand.u32 %s46, 1
        %s879 = scalar_lea.sflag [#allocation9], %s878
        %s880 = sand.u32 %s139, 1
        %s881 = smul.addr %s880, 8
        %s882 = scalar_lea.vmem [#allocation8], %s881
        %p883 = pneg %p152
        %p884 = pneg %p149
        %p885 = scmp.lt.s32.totalorder %s50, 1
        %s886 = scalar_select %p885, %s50, 1
        %s887 = scalar_lea.vmem %s4, %s886
        %p888 = pneg %p178
        %p889 = pneg %p175
        %p890 = scmp.lt.s32.totalorder %s51, 1
        %s891 = scalar_select %p890, %s51, 1
        %s892 = smul.addr %s891, 4
        %s893 = smul.addr %s892, 4
        %s894 = scalar_lea.vmem %s5, %s893
        %p895 = pneg %p204
        %p896 = pneg %p201
        %p897 = scmp.lt.s32.totalorder %s51, 1
        %s898 = scalar_select %p897, %s51, 1
        %s899 = scalar_lea.vmem %s6, %s898
        %p900 = pneg %p230
        %p901 = pneg %p227
        %p902 = scmp.lt.s32.totalorder %s51, 1
        %s903 = scalar_select %p902, %s51, 1
        %s904 = smul.addr %s903, 4
        %s905 = smul.addr %s904, 4
        %s906 = scalar_lea.vmem %s7, %s905
        %p907 = pneg %p256
        %p908 = pneg %p253
        %p909 = scmp.lt.s32.totalorder %s51, 1
        %s910 = scalar_select %p909, %s51, 1
        %s911 = scalar_lea.vmem %s8, %s910
        %p912 = pneg %p282
        %p913 = pneg %p279
        %s914 = sand.u32 %s46, 1
        %s915 = scalar_lea.sflag [#allocation9], %s914
        %s916 = sand.u32 %s295, 1
        %s917 = smul.addr %s916, 16
        %s918 = scalar_lea.vmem [#allocation10], %s917
        %p919 = pneg %p308
        %p920 = pneg %p305
        %p921 = scmp.lt.s32.totalorder %s51, 1
        %s922 = scalar_select %p921, %s51, 1
        %s923 = scalar_lea.vmem %s10, %s922
        %p924 = pneg %p334
        %p925 = pneg %p331
        %s926 = sand.u32 %s46, 1
        %s927 = scalar_lea.sflag [#allocation12], %s926
        %s928 = sand.u32 %s347, 1
        %s929 = smul.addr %s928, 16
        %s930 = scalar_lea.vmem [#allocation11], %s929
        %p931 = pneg %p360
        %p932 = pneg %p357
        %p933 = scmp.lt.s32.totalorder %s51, 1
        %s934 = scalar_select %p933, %s51, 1
        %s935 = scalar_lea.vmem %s12, %s934
        %p936 = pneg %p386
        %p937 = pneg %p383
        %s938 = sand.u32 %s46, 1
        %s939 = scalar_lea.sflag [#allocation12], %s938
        %s940 = sand.u32 %s399, 1
        %s941 = smul.addr %s940, 16
        %s942 = scalar_lea.vmem [#allocation13], %s941
        %p943 = pneg %p412
        %p944 = pneg %p409
        %p945 = scmp.lt.s32.totalorder %s51, 1
        %s946 = scalar_select %p945, %s51, 1
        %s947 = scalar_lea.vmem %s14, %s946
        %p948 = pneg %p438
        %p949 = pneg %p435
        %s950 = sand.u32 %s451, 1
        %s951 = scalar_lea.sflag [#allocation15], %s950
        %s952 = sand.u32 %s451, 1
        %s953 = smul.addr %s952, 16
        %s954 = scalar_lea.vmem [#allocation14], %s953
        %p955 = pneg %p464
        %p956 = pneg %p461
        %p957 = scmp.lt.s32.totalorder %s51, 1
        %s958 = scalar_select %p957, %s51, 1
        %s959 = scalar_lea.vmem %s16, %s958
        %p960 = pneg %p490
        %p961 = pneg %p487
        %p962 = scmp.lt.s32.totalorder %s51, 1
        %s963 = scalar_select %p962, %s51, 1
        %s964 = smul.addr %s963, 8
        %s965 = smul.addr %s964, 4
        %s966 = scalar_lea.vmem %s17, %s965
        %p967 = pneg %p516
        %p968 = pneg %p513
        %p969 = scmp.lt.s32.totalorder %s51, 1
        %s970 = scalar_select %p969, %s51, 1
        %s971 = scalar_lea.vmem %s18, %s970
        %p972 = pneg %p542
        %p973 = pneg %p539
        %p974 = pneg %p568
        %p975 = pneg %p565
        %s976 = sand.u32 %s555, 1
        %s977 = scalar_lea.sflag [#allocation5], %s976
        %s978 = sand.u32 %s555, 1
        %s979 = smul.addr %s978, 8
        %s980 = scalar_lea.vmem [#allocation16], %s979
        %p981 = scmp.lt.s32.totalorder %s50, 1
        %s982 = scalar_select %p981, %s50, 1
        %s983 = smul.addr %s982, 2
        %s984 = smul.addr %s983, 8
        %s985 = scalar_lea.vmem %s2, %s984
        %p986 = scmp.lt.s32.totalorder %s50, 1
        %s987 = scalar_select %p986, %s50, 1
        %s988 = scalar_lea.vmem %s4, %s987
        %p989 = scmp.lt.s32.totalorder %s51, 1
        %s990 = scalar_select %p989, %s51, 1
        %s991 = smul.addr %s990, 4
        %s992 = smul.addr %s991, 4
        %s993 = scalar_lea.vmem %s5, %s992
        %p994 = scmp.lt.s32.totalorder %s51, 1
        %s995 = scalar_select %p994, %s51, 1
        %s996 = scalar_lea.vmem %s6, %s995
        %p997 = scmp.lt.s32.totalorder %s51, 1
        %s998 = scalar_select %p997, %s51, 1
        %s999 = smul.addr %s998, 4
        %s1000 = smul.addr %s999, 4
        %s1001 = scalar_lea.vmem %s7, %s1000
        %p1002 = scmp.lt.s32.totalorder %s51, 1
        %s1003 = scalar_select %p1002, %s51, 1
        %s1004 = scalar_lea.vmem %s8, %s1003
        %p1005 = scmp.lt.s32.totalorder %s51, 1
        %s1006 = scalar_select %p1005, %s51, 1
        %s1007 = scalar_lea.vmem %s10, %s1006
        %p1008 = scmp.lt.s32.totalorder %s51, 1
        %s1009 = scalar_select %p1008, %s51, 1
        %s1010 = scalar_lea.vmem %s12, %s1009
        %p1011 = scmp.lt.s32.totalorder %s51, 1
        %s1012 = scalar_select %p1011, %s51, 1
        %s1013 = scalar_lea.vmem %s14, %s1012
        %p1014 = scmp.lt.s32.totalorder %s51, 1
        %s1015 = scalar_select %p1014, %s51, 1
        %s1016 = scalar_lea.vmem %s16, %s1015
        %p1017 = scmp.lt.s32.totalorder %s51, 1
        %s1018 = scalar_select %p1017, %s51, 1
        %s1019 = smul.addr %s1018, 8
        %s1020 = smul.addr %s1019, 4
        %s1021 = scalar_lea.vmem %s17, %s1020
        %p1022 = scmp.lt.s32.totalorder %s51, 1
        %s1023 = scalar_select %p1022, %s51, 1
        %s1024 = scalar_lea.vmem %s18, %s1023
        %p1026 = scmp.eq.s32.totalorder %s51, 0
        // Predicated region
        $region125: #{tpu_custom_call.1} parent=95 // pred_check
          %p1027 = pneg %p1026
        $region126: #{tpu_custom_call.1} parent=95 // pred_check_branch
          %1029 = sbr.rel (%p1027) target = $region128
        $region127: #{tpu_custom_call.1} parent=95 // pred_region
          %v1030 = vld [vmem:[%s811] sm:$0xff]
          %vm1031 = vcmask 261120
          %1032 = vst.msk [vmem:[#allocation2] sm:$0xff] %vm1031, %v1030
        $region128: #{tpu_custom_call.1} parent=95 // pred_fallthru
          _
        %v1033 = vld [vmem:[#allocation2] sm:$0xff]
        %v1034 = vld [vmem:[%s985] sm:$0xff]
        %v1035 = vld [vmem:[%s985 + $0x8] sm:$0xff]
        %v1036 = vpack.c.bf16 %v1035, %v1034
        %v1037 = vld [vmem:[%s820] sm:$0xff]
        %vm1038 = vcmp.eq.f32.partialorder %v1037, 0.0
        %v1039 = vld [vmem:[%s988] sm:$0x1]
        %vm1040 = vcmp.eq.f32.partialorder %v1039, 0.0
        %s1041 = smul.u32 %s51, 6
        %s1042 = sld [smem:[#allocation3 + %s1041]]
        %s1043 = sadd.s32 %s1041, 1
        %s1044 = sld [smem:[#allocation3 + %s1043]]
        %s1045 = sadd.s32 %s1041, 4
        %s1046 = sld [smem:[#allocation3 + %s1045]]
        %s1047 = sadd.s32 %s1041, 5
        %s1048 = sld [smem:[#allocation3 + %s1047]]
        %vm1049 = vcmask 261120
        %v1050 = vsel %vm1049, %v1033, 0.0
        %1051 = vadd.xlane.f32.xlu0 %v1050
        %v1052 = vpop.xlane.xlu0 %1051
        %v1053 = vrcp.pop 32.0
        %v1054 = vmul.f32 %v1052, %v1053
        %v1055 = vsub.f32 %v1033, %v1054
        %v1056 = vmul.f32 %v1055, %v1055
        %v1057 = vsel %vm1049, %v1056, 0.0
        %1058 = vadd.xlane.f32.xlu0 %v1057
        %v1059 = vpop.xlane.xlu0 %1058
        %v1060 = vrcp.pop 31.0
        %v1061 = vmul.f32 %v1059, %v1060
        %v1062 = vrsqrt.pop %v1061
        %v1063 = vmul.f32 %v1061, %v1062
        %vm1064 = vcmp.eq.f32.partialorder %v1061, inf
        %v1065 = vsel %vm1064, %v1061, %v1063
        %vm1066 = vcmp.eq.f32.partialorder %v1061, 0.0
        %v1067 = vand.u32 %v1061, 2147483648
        %v1068 = vsel %vm1066, %v1067, %v1065
        %v1069 = vstv %s1042
        %v1070 = vmul.f32 %v1069, %v1055
        %v1071 = vadd.f32 %v1068, 1e-06
        %v1072 = vrcp.pop %v1071
        %v1073 = vmul.f32 %v1070, %v1072
        %v1074 = vstv %s1044
        %v1075 = vadd.f32 %v1073, %v1074
        %v1076 = vpack.c.bf16 %v1075, %v1075
        %v1077 = vld [vmem:[%s993] sm:$0xf]
        %v1078 = vld [vmem:[%s993 + $0x4] sm:$0xf]
        %v1079 = vld [vmem:[%s993 + $0x8] sm:$0xf]
        %v1080 = vld [vmem:[%s993 + $0xc] sm:$0xf]
        %v1081 = vld [vmem:[%s996] sm:$0x1]
        %v1083 = vlaneseq
        %v1084 = vshrl.u32 %v1083, 7
        %v1085 = vsub.s32 0, %v1084
        %v1086 = vrot.slane %v1081, %v1085
        %v1092 = vunpack.c.l.b16 %v1077
        %v1093 = vunpack.c.l.b16 %v1078
        %v1094 = vunpack.c.l.b16 %v1079
        %v1095 = vunpack.c.l.b16 %v1080
        %v1096 = vpack.c.b16 %v1093, %v1092
        %v1097 = vpack.c.b16 %v1095, %v1094
        %v1101 = vsel %vm1049, %v1076, 0
        %1103 = vmatprep.subr.bf16.mxu0 0
        %1104 = vmatpush1.bf16.msra.mxu0 0
        %1105 = vmatprep.subr.bf16.mxu0 0
        %1106 = vmatpush1.bf16.msra.mxu0 0
        %1107 = vmatprep.subr.bf16.mxu0 0
        %1108 = vmatpush1.bf16.msra.mxu0 0
        %1109 = vmatprep.subr.bf16.mxu0 0
        %1110 = vmatpush1.bf16.msra.mxu0 0
        %1111 = vmatprep.subr.bf16.mxu0 0
        %1112 = vmatpush1.bf16.msra.mxu0 0
        %1113 = vmatprep.subr.bf16.mxu0 0
        %1114 = vmatpush1.bf16.msra.mxu0 0
        %1115 = vmatprep.subr.bf16.mxu0 0
        %1116 = vmatpush1.bf16.msra.mxu0 %v1097
        %1117 = vmatprep.subr.bf16.mxu0 0
        %1118 = vmatpush1.bf16.msra.mxu0 %v1096
        %1119 = vmatprep.subr.bf16.mxu0 0
        %1120 = vmatpush2.bf16.msra.mxu0 0
        %1121 = vmatprep.subr.bf16.mxu0 0
        %1122 = vmatpush2.bf16.msra.mxu0 0
        %1123 = vmatprep.subr.bf16.mxu0 0
        %1124 = vmatpush2.bf16.msra.mxu0 0
        %1125 = vmatprep.subr.bf16.mxu0 0
        %1126 = vmatpush2.bf16.msra.mxu0 0
        %1127 = vmatprep.subr.bf16.mxu0 0
        %1128 = vmatpush2.bf16.msra.mxu0 0
        %1129 = vmatprep.subr.bf16.mxu0 0
        %1130 = vmatpush2.bf16.msra.mxu0 0
        %1131 = vmatprep.subr.bf16.mxu0 0
        %1132 = vmatpush2.bf16.msra.mxu0 0
        %1133 = vmatprep.subr.bf16.mxu0 0
        %1134 = vmatpush2.bf16.msra.mxu0 0
        %1135 = vmatprep.mubr.bf16.mxu0 0
        %1136 = vmatmul.mubr.bf16.gmra.mxu0 %v1101
        %v1137 = vpop.f32.mrf.mxu0
        %v1138 = vadd.f32 %v1086, %v1137
        %v1139 = vpop.f32.mrf.mxu0
        %v1140 = vpop.f32.mrf.mxu0
        %v1141 = vpop.f32.mrf.mxu0
        %1142 = vdwg.mxu0
        %v1143 = vmul.f32 %v1138, 0.35355338
        %v1144 = vld [vmem:[%s1001] sm:$0xf]
        %v1145 = vld [vmem:[%s1001 + $0x4] sm:$0xf]
        %v1146 = vld [vmem:[%s1001 + $0x8] sm:$0xf]
        %v1147 = vld [vmem:[%s1001 + $0xc] sm:$0xf]
        %v1148 = vld [vmem:[%s1004] sm:$0x1]
        %v1149 = vpack.c.bf16 %v1143, %v1143
        %v1150 = vpack.c.bf16 %v1138, %v1138
        %1152 = vrot.lane.b32.xlu0 %v1150, 96
        %v1153 = vpop.permute.xlu0 %1152
        %vm1154 = vcmask 64512
        %v1156 = vsel %vm1154, %v1149, 0
        %v1159 = vsel %vm1154, %v1153, 0
        %1161 = vmatprep.subr.bf16.mxu0 0
        %1162 = vmatpush1.bf16.xpose.msra.mxu0 0
        %1163 = vmatprep.subr.bf16.mxu0 0
        %1164 = vmatpush1.bf16.xpose.msra.mxu0 0
        %1165 = vmatprep.subr.bf16.mxu0 0
        %1166 = vmatpush1.bf16.xpose.msra.mxu0 0
        %1167 = vmatprep.subr.bf16.mxu0 0
        %1168 = vmatpush1.bf16.xpose.msra.mxu0 0
        %1169 = vmatprep.subr.bf16.mxu0 0
        %1170 = vmatpush1.bf16.xpose.msra.mxu0 0
        %1171 = vmatprep.subr.bf16.mxu0 0
        %1172 = vmatpush1.bf16.xpose.msra.mxu0 0
        %1173 = vmatprep.subr.bf16.mxu0 0
        %1174 = vmatpush1.bf16.xpose.msra.mxu0 0
        %1175 = vmatprep.subr.bf16.mxu0 0
        %1176 = vmatpush1.bf16.xpose.msra.mxu0 %v1159
        %1177 = vmatprep.subr.bf16.mxu0 0
        %1178 = vmatpush2.bf16.xpose.msra.mxu0 0
        %1179 = vmatprep.subr.bf16.mxu0 0
        %1180 = vmatpush2.bf16.xpose.msra.mxu0 0
        %1181 = vmatprep.subr.bf16.mxu0 0
        %1182 = vmatpush2.bf16.xpose.msra.mxu0 0
        %1183 = vmatprep.subr.bf16.mxu0 0
        %1184 = vmatpush2.bf16.xpose.msra.mxu0 0
        %1185 = vmatprep.subr.bf16.mxu0 0
        %1186 = vmatpush2.bf16.xpose.msra.mxu0 0
        %1187 = vmatprep.subr.bf16.mxu0 0
        %1188 = vmatpush2.bf16.xpose.msra.mxu0 0
        %1189 = vmatprep.subr.bf16.mxu0 0
        %1190 = vmatpush2.bf16.xpose.msra.mxu0 0
        %1191 = vmatprep.subr.bf16.mxu0 0
        %1192 = vmatpush2.bf16.xpose.msra.mxu0 0
        %1193 = vmatprep.mubr.bf16.mxu0 0
        %1194 = vmatmul.mubr.bf16.gmra.mxu0 %v1156
        %v1195 = vpop.f32.mrf.mxu0
        %v1196 = vadd.f32 0.0, %v1195
        %v1197 = vpop.f32.mrf.mxu0
        %v1198 = vpop.f32.mrf.mxu0
        %v1199 = vpop.f32.mrf.mxu0
        %1200 = vdwg.mxu0
        %v1201 = vsel %vm1038, -10000.0, %v1196
        %v1202 = vsel %vm1154, %v1201, -inf
        %1203 = vmax.xlane.f32.xlu0 %v1202
        %v1204 = vpop.xlane.xlu0 %1203
        %v1205 = vsub.f32 %v1201, %v1204
        %v1206 = vmul.f32 %v1205, 1.442695
        %v1207 = vpow.pop %v1206
        %v1208 = vsel %vm1154, %v1207, 0.0
        %1209 = vadd.xlane.f32.xlu0 %v1208
        %v1210 = vpop.xlane.xlu0 %1209
        %v1211 = vrcp.pop %v1210
        %v1212 = vmul.f32 %v1207, %v1211
        %1213 = vrot.lane.b32.xlu0 %v1150, 64
        %v1214 = vpop.permute.xlu0 %1213
        %v1216 = vsel %vm1154, %v1214, 0
        %vm1218 = vcmask 1043456
        %v1220 = vsel %vm1218, %v1144, 0
        %1222 = vmatprep.subr.bf16.mxu0 0
        %1223 = vmatpush1.bf16.msra.mxu0 0
        %1224 = vmatprep.subr.bf16.mxu0 0
        %1225 = vmatpush1.bf16.msra.mxu0 0
        %1226 = vmatprep.subr.bf16.mxu0 0
        %1227 = vmatpush1.bf16.msra.mxu0 0
        %1228 = vmatprep.subr.bf16.mxu0 0
        %1229 = vmatpush1.bf16.msra.mxu0 0
        %1230 = vmatprep.subr.bf16.mxu0 0
        %1231 = vmatpush1.bf16.msra.mxu0 0
        %1232 = vmatprep.subr.bf16.mxu0 0
        %1233 = vmatpush1.bf16.msra.mxu0 0
        %1234 = vmatprep.subr.bf16.mxu0 0
        %1235 = vmatpush1.bf16.msra.mxu0 0
        %1236 = vmatprep.subr.bf16.mxu0 0
        %1237 = vmatpush1.bf16.msra.mxu0 %v1220
        %1238 = vmatprep.subr.bf16.mxu0 0
        %1239 = vmatpush2.bf16.msra.mxu0 0
        %1240 = vmatprep.subr.bf16.mxu0 0
        %1241 = vmatpush2.bf16.msra.mxu0 0
        %1242 = vmatprep.subr.bf16.mxu0 0
        %1243 = vmatpush2.bf16.msra.mxu0 0
        %1244 = vmatprep.subr.bf16.mxu0 0
        %1245 = vmatpush2.bf16.msra.mxu0 0
        %1246 = vmatprep.subr.bf16.mxu0 0
        %1247 = vmatpush2.bf16.msra.mxu0 0
        %1248 = vmatprep.subr.bf16.mxu0 0
        %1249 = vmatpush2.bf16.msra.mxu0 0
        %1250 = vmatprep.subr.bf16.mxu0 0
        %1251 = vmatpush2.bf16.msra.mxu0 0
        %1252 = vmatprep.subr.bf16.mxu0 0
        %1253 = vmatpush2.bf16.msra.mxu0 0
        %1254 = vmatprep.mubr.bf16.mxu0 0
        %1255 = vmatmul.mubr.bf16.gmra.mxu0 %v1216
        %v1256 = vpop.f32.mrf.mxu0
        %v1257 = vadd.f32 0.0, %v1256
        %v1258 = vpop.f32.mrf.mxu0
        %v1259 = vpop.f32.mrf.mxu0
        %v1260 = vpop.f32.mrf.mxu0
        %1261 = vdwg.mxu0
        %v1262 = vpack.c.bf16 %v1212, %v1212
        %v1263 = vpack.c.bf16 %v1257, %v1257
        %1265 = vrot.lane.b32.xlu0 %v1149, 120
        %v1266 = vpop.permute.xlu0 %1265
        %1267 = vrot.lane.b32.xlu0 %v1150, 88
        %v1268 = vpop.permute.xlu0 %1267
        %v1270 = vsel %vm1154, %v1266, 0
        %v1273 = vsel %vm1154, %v1268, 0
        %1275 = vmatprep.subr.bf16.mxu0 0
        %1276 = vmatpush1.bf16.xpose.msra.mxu0 0
        %1277 = vmatprep.subr.bf16.mxu0 0
        %1278 = vmatpush1.bf16.xpose.msra.mxu0 0
        %1279 = vmatprep.subr.bf16.mxu0 0
        %1280 = vmatpush1.bf16.xpose.msra.mxu0 0
        %1281 = vmatprep.subr.bf16.mxu0 0
        %1282 = vmatpush1.bf16.xpose.msra.mxu0 0
        %1283 = vmatprep.subr.bf16.mxu0 0
        %1284 = vmatpush1.bf16.xpose.msra.mxu0 0
        %1285 = vmatprep.subr.bf16.mxu0 0
        %1286 = vmatpush1.bf16.xpose.msra.mxu0 0
        %1287 = vmatprep.subr.bf16.mxu0 0
        %1288 = vmatpush1.bf16.xpose.msra.mxu0 0
        %1289 = vmatprep.subr.bf16.mxu0 0
        %1290 = vmatpush1.bf16.xpose.msra.mxu0 %v1273
        %1291 = vmatprep.subr.bf16.mxu0 0
        %1292 = vmatpush2.bf16.xpose.msra.mxu0 0
        %1293 = vmatprep.subr.bf16.mxu0 0
        %1294 = vmatpush2.bf16.xpose.msra.mxu0 0
        %1295 = vmatprep.subr.bf16.mxu0 0
        %1296 = vmatpush2.bf16.xpose.msra.mxu0 0
        %1297 = vmatprep.subr.bf16.mxu0 0
        %1298 = vmatpush2.bf16.xpose.msra.mxu0 0
        %1299 = vmatprep.subr.bf16.mxu0 0
        %1300 = vmatpush2.bf16.xpose.msra.mxu0 0
        %1301 = vmatprep.subr.bf16.mxu0 0
        %1302 = vmatpush2.bf16.xpose.msra.mxu0 0
        %1303 = vmatprep.subr.bf16.mxu0 0
        %1304 = vmatpush2.bf16.xpose.msra.mxu0 0
        %1305 = vmatprep.subr.bf16.mxu0 0
        %1306 = vmatpush2.bf16.xpose.msra.mxu0 0
        %1307 = vmatprep.mubr.bf16.mxu0 0
        %1308 = vmatmul.mubr.bf16.gmra.mxu0 %v1270
        %v1309 = vpop.f32.mrf.mxu0
        %v1310 = vadd.f32 0.0, %v1309
        %v1311 = vpop.f32.mrf.mxu0
        %v1312 = vpop.f32.mrf.mxu0
        %v1313 = vpop.f32.mrf.mxu0
        %1314 = vdwg.mxu0
        %v1315 = vsel %vm1038, -10000.0, %v1310
        %v1316 = vsel %vm1154, %v1315, -inf
        %1317 = vmax.xlane.f32.xlu0 %v1316
        %v1318 = vpop.xlane.xlu0 %1317
        %v1319 = vsub.f32 %v1315, %v1318
        %v1320 = vmul.f32 %v1319, 1.442695
        %v1321 = vpow.pop %v1320
        %v1322 = vsel %vm1154, %v1321, 0.0
        %1323 = vadd.xlane.f32.xlu0 %v1322
        %v1324 = vpop.xlane.xlu0 %1323
        %v1325 = vrcp.pop %v1324
        %v1326 = vmul.f32 %v1321, %v1325
        %1327 = vrot.lane.b32.xlu0 %v1150, 56
        %v1328 = vpop.permute.xlu0 %1327
        %v1330 = vsel %vm1154, %v1328, 0
        %v1333 = vsel %vm1218, %v1145, 0
        %1335 = vmatprep.subr.bf16.mxu0 0
        %1336 = vmatpush1.bf16.msra.mxu0 0
        %1337 = vmatprep.subr.bf16.mxu0 0
        %1338 = vmatpush1.bf16.msra.mxu0 0
        %1339 = vmatprep.subr.bf16.mxu0 0
        %1340 = vmatpush1.bf16.msra.mxu0 0
        %1341 = vmatprep.subr.bf16.mxu0 0
        %1342 = vmatpush1.bf16.msra.mxu0 0
        %1343 = vmatprep.subr.bf16.mxu0 0
        %1344 = vmatpush1.bf16.msra.mxu0 0
        %1345 = vmatprep.subr.bf16.mxu0 0
        %1346 = vmatpush1.bf16.msra.mxu0 0
        %1347 = vmatprep.subr.bf16.mxu0 0
        %1348 = vmatpush1.bf16.msra.mxu0 0
        %1349 = vmatprep.subr.bf16.mxu0 0
        %1350 = vmatpush1.bf16.msra.mxu0 %v1333
        %1351 = vmatprep.subr.bf16.mxu0 0
        %1352 = vmatpush2.bf16.msra.mxu0 0
        %1353 = vmatprep.subr.bf16.mxu0 0
        %1354 = vmatpush2.bf16.msra.mxu0 0
        %1355 = vmatprep.subr.bf16.mxu0 0
        %1356 = vmatpush2.bf16.msra.mxu0 0
        %1357 = vmatprep.subr.bf16.mxu0 0
        %1358 = vmatpush2.bf16.msra.mxu0 0
        %1359 = vmatprep.subr.bf16.mxu0 0
        %1360 = vmatpush2.bf16.msra.mxu0 0
        %1361 = vmatprep.subr.bf16.mxu0 0
        %1362 = vmatpush2.bf16.msra.mxu0 0
        %1363 = vmatprep.subr.bf16.mxu0 0
        %1364 = vmatpush2.bf16.msra.mxu0 0
        %1365 = vmatprep.subr.bf16.mxu0 0
        %1366 = vmatpush2.bf16.msra.mxu0 0
        %1367 = vmatprep.mubr.bf16.mxu0 0
        %1368 = vmatmul.mubr.bf16.gmra.mxu0 %v1330
        %v1369 = vpop.f32.mrf.mxu0
        %v1370 = vadd.f32 0.0, %v1369
        %v1371 = vpop.f32.mrf.mxu0
        %v1372 = vpop.f32.mrf.mxu0
        %v1373 = vpop.f32.mrf.mxu0
        %1374 = vdwg.mxu0
        %v1375 = vpack.c.bf16 %v1326, %v1326
        %v1376 = vpack.c.bf16 %v1370, %v1370
        %v1378 = vsel %vm1154, %v1375, 0
        %v1381 = vsel %vm1218, %v1376, 0
        %1383 = vmatprep.subr.bf16.mxu0 0
        %1384 = vmatpush1.bf16.msra.mxu0 0
        %1385 = vmatprep.subr.bf16.mxu0 0
        %1386 = vmatpush1.bf16.msra.mxu0 0
        %1387 = vmatprep.subr.bf16.mxu0 0
        %1388 = vmatpush1.bf16.msra.mxu0 0
        %1389 = vmatprep.subr.bf16.mxu0 0
        %1390 = vmatpush1.bf16.msra.mxu0 0
        %1391 = vmatprep.subr.bf16.mxu0 0
        %1392 = vmatpush1.bf16.msra.mxu0 0
        %1393 = vmatprep.subr.bf16.mxu0 0
        %1394 = vmatpush1.bf16.msra.mxu0 0
        %1395 = vmatprep.subr.bf16.mxu0 0
        %1396 = vmatpush1.bf16.msra.mxu0 0
        %1397 = vmatprep.subr.bf16.mxu0 0
        %1398 = vmatpush1.bf16.msra.mxu0 %v1381
        %1399 = vmatprep.subr.bf16.mxu0 0
        %1400 = vmatpush2.bf16.msra.mxu0 0
        %1401 = vmatprep.subr.bf16.mxu0 0
        %1402 = vmatpush2.bf16.msra.mxu0 0
        %1403 = vmatprep.subr.bf16.mxu0 0
        %1404 = vmatpush2.bf16.msra.mxu0 0
        %1405 = vmatprep.subr.bf16.mxu0 0
        %1406 = vmatpush2.bf16.msra.mxu0 0
        %1407 = vmatprep.subr.bf16.mxu0 0
        %1408 = vmatpush2.bf16.msra.mxu0 0
        %1409 = vmatprep.subr.bf16.mxu0 0
        %1410 = vmatpush2.bf16.msra.mxu0 0
        %1411 = vmatprep.subr.bf16.mxu0 0
        %1412 = vmatpush2.bf16.msra.mxu0 0
        %1413 = vmatprep.subr.bf16.mxu0 0
        %1414 = vmatpush2.bf16.msra.mxu0 0
        %1415 = vmatprep.mubr.bf16.mxu0 0
        %1416 = vmatmul.mubr.bf16.gmra.mxu0 %v1378
        %v1417 = vpop.f32.mrf.mxu0
        %v1418 = vadd.f32 0.0, %v1417
        %v1419 = vpop.f32.mrf.mxu0
        %v1420 = vpop.f32.mrf.mxu0
        %v1421 = vpop.f32.mrf.mxu0
        %1422 = vdwg.mxu0
        %v1424 = vsel %vm1154, %v1262, 0
        %v1427 = vsel %vm1218, %v1263, 0
        %1429 = vmatprep.subr.bf16.mxu0 0
        %1430 = vmatpush1.bf16.msra.mxu0 0
        %1431 = vmatprep.subr.bf16.mxu0 0
        %1432 = vmatpush1.bf16.msra.mxu0 0
        %1433 = vmatprep.subr.bf16.mxu0 0
        %1434 = vmatpush1.bf16.msra.mxu0 0
        %1435 = vmatprep.subr.bf16.mxu0 0
        %1436 = vmatpush1.bf16.msra.mxu0 0
        %1437 = vmatprep.subr.bf16.mxu0 0
        %1438 = vmatpush1.bf16.msra.mxu0 0
        %1439 = vmatprep.subr.bf16.mxu0 0
        %1440 = vmatpush1.bf16.msra.mxu0 0
        %1441 = vmatprep.subr.bf16.mxu0 0
        %1442 = vmatpush1.bf16.msra.mxu0 0
        %1443 = vmatprep.subr.bf16.mxu0 0
        %1444 = vmatpush1.bf16.msra.mxu0 %v1427
        %1445 = vmatprep.subr.bf16.mxu0 0
        %1446 = vmatpush2.bf16.msra.mxu0 0
        %1447 = vmatprep.subr.bf16.mxu0 0
        %1448 = vmatpush2.bf16.msra.mxu0 0
        %1449 = vmatprep.subr.bf16.mxu0 0
        %1450 = vmatpush2.bf16.msra.mxu0 0
        %1451 = vmatprep.subr.bf16.mxu0 0
        %1452 = vmatpush2.bf16.msra.mxu0 0
        %1453 = vmatprep.subr.bf16.mxu0 0
        %1454 = vmatpush2.bf16.msra.mxu0 0
        %1455 = vmatprep.subr.bf16.mxu0 0
        %1456 = vmatpush2.bf16.msra.mxu0 0
        %1457 = vmatprep.subr.bf16.mxu0 0
        %1458 = vmatpush2.bf16.msra.mxu0 0
        %1459 = vmatprep.subr.bf16.mxu0 0
        %1460 = vmatpush2.bf16.msra.mxu0 0
        %1461 = vmatprep.mubr.bf16.mxu0 0
        %1462 = vmatmul.mubr.bf16.gmra.mxu0 %v1424
        %v1463 = vpop.f32.mrf.mxu0
        %v1464 = vadd.f32 %v1418, %v1463
        %v1465 = vpop.f32.mrf.mxu0
        %v1466 = vpop.f32.mrf.mxu0
        %v1467 = vpop.f32.mrf.mxu0
        %1468 = vdwg.mxu0
        %1469 = vrot.lane.b32.xlu0 %v1149, 112
        %v1470 = vpop.permute.xlu0 %1469
        %1471 = vrot.lane.b32.xlu0 %v1150, 80
        %v1472 = vpop.permute.xlu0 %1471
        %v1474 = vsel %vm1154, %v1470, 0
        %v1477 = vsel %vm1154, %v1472, 0
        %1479 = vmatprep.subr.bf16.mxu0 0
        %1480 = vmatpush1.bf16.xpose.msra.mxu0 0
        %1481 = vmatprep.subr.bf16.mxu0 0
        %1482 = vmatpush1.bf16.xpose.msra.mxu0 0
        %1483 = vmatprep.subr.bf16.mxu0 0
        %1484 = vmatpush1.bf16.xpose.msra.mxu0 0
        %1485 = vmatprep.subr.bf16.mxu0 0
        %1486 = vmatpush1.bf16.xpose.msra.mxu0 0
        %1487 = vmatprep.subr.bf16.mxu0 0
        %1488 = vmatpush1.bf16.xpose.msra.mxu0 0
        %1489 = vmatprep.subr.bf16.mxu0 0
        %1490 = vmatpush1.bf16.xpose.msra.mxu0 0
        %1491 = vmatprep.subr.bf16.mxu0 0
        %1492 = vmatpush1.bf16.xpose.msra.mxu0 0
        %1493 = vmatprep.subr.bf16.mxu0 0
        %1494 = vmatpush1.bf16.xpose.msra.mxu0 %v1477
        %1495 = vmatprep.subr.bf16.mxu0 0
        %1496 = vmatpush2.bf16.xpose.msra.mxu0 0
        %1497 = vmatprep.subr.bf16.mxu0 0
        %1498 = vmatpush2.bf16.xpose.msra.mxu0 0
        %1499 = vmatprep.subr.bf16.mxu0 0
        %1500 = vmatpush2.bf16.xpose.msra.mxu0 0
        %1501 = vmatprep.subr.bf16.mxu0 0
        %1502 = vmatpush2.bf16.xpose.msra.mxu0 0
        %1503 = vmatprep.subr.bf16.mxu0 0
        %1504 = vmatpush2.bf16.xpose.msra.mxu0 0
        %1505 = vmatprep.subr.bf16.mxu0 0
        %1506 = vmatpush2.bf16.xpose.msra.mxu0 0
        %1507 = vmatprep.subr.bf16.mxu0 0
        %1508 = vmatpush2.bf16.xpose.msra.mxu0 0
        %1509 = vmatprep.subr.bf16.mxu0 0
        %1510 = vmatpush2.bf16.xpose.msra.mxu0 0
        %1511 = vmatprep.mubr.bf16.mxu0 0
        %1512 = vmatmul.mubr.bf16.gmra.mxu0 %v1474
        %v1513 = vpop.f32.mrf.mxu0
        %v1514 = vadd.f32 0.0, %v1513
        %v1515 = vpop.f32.mrf.mxu0
        %v1516 = vpop.f32.mrf.mxu0
        %v1517 = vpop.f32.mrf.mxu0
        %1518 = vdwg.mxu0
        %v1519 = vsel %vm1038, -10000.0, %v1514
        %v1520 = vsel %vm1154, %v1519, -inf
        %1521 = vmax.xlane.f32.xlu0 %v1520
        %v1522 = vpop.xlane.xlu0 %1521
        %v1523 = vsub.f32 %v1519, %v1522
        %v1524 = vmul.f32 %v1523, 1.442695
        %v1525 = vpow.pop %v1524
        %v1526 = vsel %vm1154, %v1525, 0.0
        %1527 = vadd.xlane.f32.xlu0 %v1526
        %v1528 = vpop.xlane.xlu0 %1527
        %v1529 = vrcp.pop %v1528
        %v1530 = vmul.f32 %v1525, %v1529
        %1531 = vrot.lane.b32.xlu0 %v1150, 48
        %v1532 = vpop.permute.xlu0 %1531
        %v1534 = vsel %vm1154, %v1532, 0
        %v1537 = vsel %vm1218, %v1146, 0
        %1539 = vmatprep.subr.bf16.mxu0 0
        %1540 = vmatpush1.bf16.msra.mxu0 0
        %1541 = vmatprep.subr.bf16.mxu0 0
        %1542 = vmatpush1.bf16.msra.mxu0 0
        %1543 = vmatprep.subr.bf16.mxu0 0
        %1544 = vmatpush1.bf16.msra.mxu0 0
        %1545 = vmatprep.subr.bf16.mxu0 0
        %1546 = vmatpush1.bf16.msra.mxu0 0
        %1547 = vmatprep.subr.bf16.mxu0 0
        %1548 = vmatpush1.bf16.msra.mxu0 0
        %1549 = vmatprep.subr.bf16.mxu0 0
        %1550 = vmatpush1.bf16.msra.mxu0 0
        %1551 = vmatprep.subr.bf16.mxu0 0
        %1552 = vmatpush1.bf16.msra.mxu0 0
        %1553 = vmatprep.subr.bf16.mxu0 0
        %1554 = vmatpush1.bf16.msra.mxu0 %v1537
        %1555 = vmatprep.subr.bf16.mxu0 0
        %1556 = vmatpush2.bf16.msra.mxu0 0
        %1557 = vmatprep.subr.bf16.mxu0 0
        %1558 = vmatpush2.bf16.msra.mxu0 0
        %1559 = vmatprep.subr.bf16.mxu0 0
        %1560 = vmatpush2.bf16.msra.mxu0 0
        %1561 = vmatprep.subr.bf16.mxu0 0
        %1562 = vmatpush2.bf16.msra.mxu0 0
        %1563 = vmatprep.subr.bf16.mxu0 0
        %1564 = vmatpush2.bf16.msra.mxu0 0
        %1565 = vmatprep.subr.bf16.mxu0 0
        %1566 = vmatpush2.bf16.msra.mxu0 0
        %1567 = vmatprep.subr.bf16.mxu0 0
        %1568 = vmatpush2.bf16.msra.mxu0 0
        %1569 = vmatprep.subr.bf16.mxu0 0
        %1570 = vmatpush2.bf16.msra.mxu0 0
        %1571 = vmatprep.mubr.bf16.mxu0 0
        %1572 = vmatmul.mubr.bf16.gmra.mxu0 %v1534
        %v1573 = vpop.f32.mrf.mxu0
        %v1574 = vadd.f32 0.0, %v1573
        %v1575 = vpop.f32.mrf.mxu0
        %v1576 = vpop.f32.mrf.mxu0
        %v1577 = vpop.f32.mrf.mxu0
        %1578 = vdwg.mxu0
        %v1579 = vpack.c.bf16 %v1530, %v1530
        %v1580 = vpack.c.bf16 %v1574, %v1574
        %v1582 = vsel %vm1154, %v1579, 0
        %v1585 = vsel %vm1218, %v1580, 0
        %1587 = vmatprep.subr.bf16.mxu0 0
        %1588 = vmatpush1.bf16.msra.mxu0 0
        %1589 = vmatprep.subr.bf16.mxu0 0
        %1590 = vmatpush1.bf16.msra.mxu0 0
        %1591 = vmatprep.subr.bf16.mxu0 0
        %1592 = vmatpush1.bf16.msra.mxu0 0
        %1593 = vmatprep.subr.bf16.mxu0 0
        %1594 = vmatpush1.bf16.msra.mxu0 0
        %1595 = vmatprep.subr.bf16.mxu0 0
        %1596 = vmatpush1.bf16.msra.mxu0 0
        %1597 = vmatprep.subr.bf16.mxu0 0
        %1598 = vmatpush1.bf16.msra.mxu0 0
        %1599 = vmatprep.subr.bf16.mxu0 0
        %1600 = vmatpush1.bf16.msra.mxu0 0
        %1601 = vmatprep.subr.bf16.mxu0 0
        %1602 = vmatpush1.bf16.msra.mxu0 %v1585
        %1603 = vmatprep.subr.bf16.mxu0 0
        %1604 = vmatpush2.bf16.msra.mxu0 0
        %1605 = vmatprep.subr.bf16.mxu0 0
        %1606 = vmatpush2.bf16.msra.mxu0 0
        %1607 = vmatprep.subr.bf16.mxu0 0
        %1608 = vmatpush2.bf16.msra.mxu0 0
        %1609 = vmatprep.subr.bf16.mxu0 0
        %1610 = vmatpush2.bf16.msra.mxu0 0
        %1611 = vmatprep.subr.bf16.mxu0 0
        %1612 = vmatpush2.bf16.msra.mxu0 0
        %1613 = vmatprep.subr.bf16.mxu0 0
        %1614 = vmatpush2.bf16.msra.mxu0 0
        %1615 = vmatprep.subr.bf16.mxu0 0
        %1616 = vmatpush2.bf16.msra.mxu0 0
        %1617 = vmatprep.subr.bf16.mxu0 0
        %1618 = vmatpush2.bf16.msra.mxu0 0
        %1619 = vmatprep.mubr.bf16.mxu0 0
        %1620 = vmatmul.mubr.bf16.gmra.mxu0 %v1582
        %v1621 = vpop.f32.mrf.mxu0
        %v1622 = vadd.f32 0.0, %v1621
        %v1623 = vpop.f32.mrf.mxu0
        %v1624 = vpop.f32.mrf.mxu0
        %v1625 = vpop.f32.mrf.mxu0
        %1626 = vdwg.mxu0
        %v1627 = vadd.f32 %v1464, %v1622
        %1628 = vrot.lane.b32.xlu0 %v1149, 104
        %v1629 = vpop.permute.xlu0 %1628
        %1630 = vrot.lane.b32.xlu0 %v1150, 72
        %v1631 = vpop.permute.xlu0 %1630
        %v1633 = vsel %vm1154, %v1629, 0
        %v1636 = vsel %vm1154, %v1631, 0
        %1638 = vmatprep.subr.bf16.mxu0 0
        %1639 = vmatpush1.bf16.xpose.msra.mxu0 0
        %1640 = vmatprep.subr.bf16.mxu0 0
        %1641 = vmatpush1.bf16.xpose.msra.mxu0 0
        %1642 = vmatprep.subr.bf16.mxu0 0
        %1643 = vmatpush1.bf16.xpose.msra.mxu0 0
        %1644 = vmatprep.subr.bf16.mxu0 0
        %1645 = vmatpush1.bf16.xpose.msra.mxu0 0
        %1646 = vmatprep.subr.bf16.mxu0 0
        %1647 = vmatpush1.bf16.xpose.msra.mxu0 0
        %1648 = vmatprep.subr.bf16.mxu0 0
        %1649 = vmatpush1.bf16.xpose.msra.mxu0 0
        %1650 = vmatprep.subr.bf16.mxu0 0
        %1651 = vmatpush1.bf16.xpose.msra.mxu0 0
        %1652 = vmatprep.subr.bf16.mxu0 0
        %1653 = vmatpush1.bf16.xpose.msra.mxu0 %v1636
        %1654 = vmatprep.subr.bf16.mxu0 0
        %1655 = vmatpush2.bf16.xpose.msra.mxu0 0
        %1656 = vmatprep.subr.bf16.mxu0 0
        %1657 = vmatpush2.bf16.xpose.msra.mxu0 0
        %1658 = vmatprep.subr.bf16.mxu0 0
        %1659 = vmatpush2.bf16.xpose.msra.mxu0 0
        %1660 = vmatprep.subr.bf16.mxu0 0
        %1661 = vmatpush2.bf16.xpose.msra.mxu0 0
        %1662 = vmatprep.subr.bf16.mxu0 0
        %1663 = vmatpush2.bf16.xpose.msra.mxu0 0
        %1664 = vmatprep.subr.bf16.mxu0 0
        %1665 = vmatpush2.bf16.xpose.msra.mxu0 0
        %1666 = vmatprep.subr.bf16.mxu0 0
        %1667 = vmatpush2.bf16.xpose.msra.mxu0 0
        %1668 = vmatprep.subr.bf16.mxu0 0
        %1669 = vmatpush2.bf16.xpose.msra.mxu0 0
        %1670 = vmatprep.mubr.bf16.mxu0 0
        %1671 = vmatmul.mubr.bf16.gmra.mxu0 %v1633
        %v1672 = vpop.f32.mrf.mxu0
        %v1673 = vadd.f32 0.0, %v1672
        %v1674 = vpop.f32.mrf.mxu0
        %v1675 = vpop.f32.mrf.mxu0
        %v1676 = vpop.f32.mrf.mxu0
        %1677 = vdwg.mxu0
        %v1678 = vsel %vm1038, -10000.0, %v1673
        %v1679 = vsel %vm1154, %v1678, -inf
        %1680 = vmax.xlane.f32.xlu0 %v1679
        %v1681 = vpop.xlane.xlu0 %1680
        %v1682 = vsub.f32 %v1678, %v1681
        %v1683 = vmul.f32 %v1682, 1.442695
        %v1684 = vpow.pop %v1683
        %v1685 = vsel %vm1154, %v1684, 0.0
        %1686 = vadd.xlane.f32.xlu0 %v1685
        %v1687 = vpop.xlane.xlu0 %1686
        %v1688 = vrcp.pop %v1687
        %v1689 = vmul.f32 %v1684, %v1688
        %1690 = vrot.lane.b32.xlu0 %v1150, 40
        %v1691 = vpop.permute.xlu0 %1690
        %v1693 = vsel %vm1154, %v1691, 0
        %v1696 = vsel %vm1218, %v1147, 0
        %1698 = vmatprep.subr.bf16.mxu0 0
        %1699 = vmatpush1.bf16.msra.mxu0 0
        %1700 = vmatprep.subr.bf16.mxu0 0
        %1701 = vmatpush1.bf16.msra.mxu0 0
        %1702 = vmatprep.subr.bf16.mxu0 0
        %1703 = vmatpush1.bf16.msra.mxu0 0
        %1704 = vmatprep.subr.bf16.mxu0 0
        %1705 = vmatpush1.bf16.msra.mxu0 0
        %1706 = vmatprep.subr.bf16.mxu0 0
        %1707 = vmatpush1.bf16.msra.mxu0 0
        %1708 = vmatprep.subr.bf16.mxu0 0
        %1709 = vmatpush1.bf16.msra.mxu0 0
        %1710 = vmatprep.subr.bf16.mxu0 0
        %1711 = vmatpush1.bf16.msra.mxu0 0
        %1712 = vmatprep.subr.bf16.mxu0 0
        %1713 = vmatpush1.bf16.msra.mxu0 %v1696
        %1714 = vmatprep.subr.bf16.mxu0 0
        %1715 = vmatpush2.bf16.msra.mxu0 0
        %1716 = vmatprep.subr.bf16.mxu0 0
        %1717 = vmatpush2.bf16.msra.mxu0 0
        %1718 = vmatprep.subr.bf16.mxu0 0
        %1719 = vmatpush2.bf16.msra.mxu0 0
        %1720 = vmatprep.subr.bf16.mxu0 0
        %1721 = vmatpush2.bf16.msra.mxu0 0
        %1722 = vmatprep.subr.bf16.mxu0 0
        %1723 = vmatpush2.bf16.msra.mxu0 0
        %1724 = vmatprep.subr.bf16.mxu0 0
        %1725 = vmatpush2.bf16.msra.mxu0 0
        %1726 = vmatprep.subr.bf16.mxu0 0
        %1727 = vmatpush2.bf16.msra.mxu0 0
        %1728 = vmatprep.subr.bf16.mxu0 0
        %1729 = vmatpush2.bf16.msra.mxu0 0
        %1730 = vmatprep.mubr.bf16.mxu0 0
        %1731 = vmatmul.mubr.bf16.gmra.mxu0 %v1693
        %v1732 = vpop.f32.mrf.mxu0
        %v1733 = vadd.f32 0.0, %v1732
        %v1734 = vpop.f32.mrf.mxu0
        %v1735 = vpop.f32.mrf.mxu0
        %v1736 = vpop.f32.mrf.mxu0
        %1737 = vdwg.mxu0
        %v1738 = vpack.c.bf16 %v1689, %v1689
        %v1739 = vpack.c.bf16 %v1733, %v1733
        %v1741 = vsel %vm1154, %v1738, 0
        %v1744 = vsel %vm1218, %v1739, 0
        %1746 = vmatprep.subr.bf16.mxu0 0
        %1747 = vmatpush1.bf16.msra.mxu0 0
        %1748 = vmatprep.subr.bf16.mxu0 0
        %1749 = vmatpush1.bf16.msra.mxu0 0
        %1750 = vmatprep.subr.bf16.mxu0 0
        %1751 = vmatpush1.bf16.msra.mxu0 0
        %1752 = vmatprep.subr.bf16.mxu0 0
        %1753 = vmatpush1.bf16.msra.mxu0 0
        %1754 = vmatprep.subr.bf16.mxu0 0
        %1755 = vmatpush1.bf16.msra.mxu0 0
        %1756 = vmatprep.subr.bf16.mxu0 0
        %1757 = vmatpush1.bf16.msra.mxu0 0
        %1758 = vmatprep.subr.bf16.mxu0 0
        %1759 = vmatpush1.bf16.msra.mxu0 0
        %1760 = vmatprep.subr.bf16.mxu0 0
        %1761 = vmatpush1.bf16.msra.mxu0 %v1744
        %1762 = vmatprep.subr.bf16.mxu0 0
        %1763 = vmatpush2.bf16.msra.mxu0 0
        %1764 = vmatprep.subr.bf16.mxu0 0
        %1765 = vmatpush2.bf16.msra.mxu0 0
        %1766 = vmatprep.subr.bf16.mxu0 0
        %1767 = vmatpush2.bf16.msra.mxu0 0
        %1768 = vmatprep.subr.bf16.mxu0 0
        %1769 = vmatpush2.bf16.msra.mxu0 0
        %1770 = vmatprep.subr.bf16.mxu0 0
        %1771 = vmatpush2.bf16.msra.mxu0 0
        %1772 = vmatprep.subr.bf16.mxu0 0
        %1773 = vmatpush2.bf16.msra.mxu0 0
        %1774 = vmatprep.subr.bf16.mxu0 0
        %1775 = vmatpush2.bf16.msra.mxu0 0
        %1776 = vmatprep.subr.bf16.mxu0 0
        %1777 = vmatpush2.bf16.msra.mxu0 0
        %1778 = vmatprep.mubr.bf16.mxu0 0
        %1779 = vmatmul.mubr.bf16.gmra.mxu0 %v1741
        %v1780 = vpop.f32.mrf.mxu0
        %v1781 = vadd.f32 0.0, %v1780
        %v1782 = vpop.f32.mrf.mxu0
        %v1783 = vpop.f32.mrf.mxu0
        %v1784 = vpop.f32.mrf.mxu0
        %1785 = vdwg.mxu0
        %v1786 = vadd.f32 %v1627, %v1781
        %v1788 = vlaneseq
        %v1789 = vshrl.u32 %v1788, 7
        %v1790 = vsub.s32 0, %v1789
        %v1791 = vrot.slane %v1148, %v1790
        %v1793 = vadd.f32 %v1786, %v1791
        %v1794 = vadd.f32 %v1033, %v1793
        %v1795 = vpack.c.bf16 %v1794, %v1794
        %v1796 = vld [vmem:[%s829] sm:$0xf]
        %v1797 = vld [vmem:[%s829 + $0x4] sm:$0xf]
        %v1798 = vld [vmem:[%s829 + $0x8] sm:$0xf]
        %v1799 = vld [vmem:[%s829 + $0xc] sm:$0xf]
        %v1800 = vld [vmem:[%s1007] sm:$0x1]
        %v1802 = vlaneseq
        %v1803 = vshrl.u32 %v1802, 7
        %v1804 = vsub.s32 0, %v1803
        %v1805 = vrot.slane %v1800, %v1804
        %v1811 = vunpack.c.l.b16 %v1796
        %v1812 = vunpack.c.l.b16 %v1797
        %v1813 = vunpack.c.l.b16 %v1798
        %v1814 = vunpack.c.l.b16 %v1799
        %v1815 = vpack.c.b16 %v1812, %v1811
        %v1816 = vpack.c.b16 %v1814, %v1813
        %v1820 = vsel %vm1049, %v1795, 0
        %1822 = vmatprep.subr.bf16.mxu0 0
        %1823 = vmatpush1.bf16.msra.mxu0 0
        %1824 = vmatprep.subr.bf16.mxu0 0
        %1825 = vmatpush1.bf16.msra.mxu0 0
        %1826 = vmatprep.subr.bf16.mxu0 0
        %1827 = vmatpush1.bf16.msra.mxu0 0
        %1828 = vmatprep.subr.bf16.mxu0 0
        %1829 = vmatpush1.bf16.msra.mxu0 0
        %1830 = vmatprep.subr.bf16.mxu0 0
        %1831 = vmatpush1.bf16.msra.mxu0 0
        %1832 = vmatprep.subr.bf16.mxu0 0
        %1833 = vmatpush1.bf16.msra.mxu0 0
        %1834 = vmatprep.subr.bf16.mxu0 0
        %1835 = vmatpush1.bf16.msra.mxu0 %v1816
        %1836 = vmatprep.subr.bf16.mxu0 0
        %1837 = vmatpush1.bf16.msra.mxu0 %v1815
        %1838 = vmatprep.subr.bf16.mxu0 0
        %1839 = vmatpush2.bf16.msra.mxu0 0
        %1840 = vmatprep.subr.bf16.mxu0 0
        %1841 = vmatpush2.bf16.msra.mxu0 0
        %1842 = vmatprep.subr.bf16.mxu0 0
        %1843 = vmatpush2.bf16.msra.mxu0 0
        %1844 = vmatprep.subr.bf16.mxu0 0
        %1845 = vmatpush2.bf16.msra.mxu0 0
        %1846 = vmatprep.subr.bf16.mxu0 0
        %1847 = vmatpush2.bf16.msra.mxu0 0
        %1848 = vmatprep.subr.bf16.mxu0 0
        %1849 = vmatpush2.bf16.msra.mxu0 0
        %1850 = vmatprep.subr.bf16.mxu0 0
        %1851 = vmatpush2.bf16.msra.mxu0 0
        %1852 = vmatprep.subr.bf16.mxu0 0
        %1853 = vmatpush2.bf16.msra.mxu0 0
        %1854 = vmatprep.mubr.bf16.mxu0 0
        %1855 = vmatmul.mubr.bf16.gmra.mxu0 %v1820
        %v1856 = vpop.f32.mrf.mxu0
        %v1857 = vadd.f32 %v1805, %v1856
        %v1858 = vpop.f32.mrf.mxu0
        %v1859 = vpop.f32.mrf.mxu0
        %v1860 = vpop.f32.mrf.mxu0
        %1861 = vdwg.mxu0
        %v1862 = vmul.f32 %v1857, 0.35355338
        %v1863 = vld [vmem:[%s838] sm:$0xf]
        %v1864 = vld [vmem:[%s838 + $0x4] sm:$0xf]
        %v1865 = vld [vmem:[%s838 + $0x8] sm:$0xf]
        %v1866 = vld [vmem:[%s838 + $0xc] sm:$0xf]
        %v1867 = vld [vmem:[%s1010] sm:$0x1]
        %v1869 = vlaneseq
        %v1870 = vshrl.u32 %v1869, 7
        %v1871 = vsub.s32 0, %v1870
        %v1872 = vrot.slane %v1867, %v1871
        %v1878 = vunpack.c.l.b16 %v1863
        %v1879 = vunpack.c.l.b16 %v1864
        %v1880 = vunpack.c.l.b16 %v1865
        %v1881 = vunpack.c.l.b16 %v1866
        %v1882 = vpack.c.b16 %v1879, %v1878
        %v1883 = vpack.c.b16 %v1881, %v1880
        %v1887 = vsel %vm1049, %v1036, 0
        %1889 = vmatprep.subr.bf16.mxu0 0
        %1890 = vmatpush1.bf16.msra.mxu0 0
        %1891 = vmatprep.subr.bf16.mxu0 0
        %1892 = vmatpush1.bf16.msra.mxu0 0
        %1893 = vmatprep.subr.bf16.mxu0 0
        %1894 = vmatpush1.bf16.msra.mxu0 0
        %1895 = vmatprep.subr.bf16.mxu0 0
        %1896 = vmatpush1.bf16.msra.mxu0 0
        %1897 = vmatprep.subr.bf16.mxu0 0
        %1898 = vmatpush1.bf16.msra.mxu0 0
        %1899 = vmatprep.subr.bf16.mxu0 0
        %1900 = vmatpush1.bf16.msra.mxu0 0
        %1901 = vmatprep.subr.bf16.mxu0 0
        %1902 = vmatpush1.bf16.msra.mxu0 %v1883
        %1903 = vmatprep.subr.bf16.mxu0 0
        %1904 = vmatpush1.bf16.msra.mxu0 %v1882
        %1905 = vmatprep.subr.bf16.mxu0 0
        %1906 = vmatpush2.bf16.msra.mxu0 0
        %1907 = vmatprep.subr.bf16.mxu0 0
        %1908 = vmatpush2.bf16.msra.mxu0 0
        %1909 = vmatprep.subr.bf16.mxu0 0
        %1910 = vmatpush2.bf16.msra.mxu0 0
        %1911 = vmatprep.subr.bf16.mxu0 0
        %1912 = vmatpush2.bf16.msra.mxu0 0
        %1913 = vmatprep.subr.bf16.mxu0 0
        %1914 = vmatpush2.bf16.msra.mxu0 0
        %1915 = vmatprep.subr.bf16.mxu0 0
        %1916 = vmatpush2.bf16.msra.mxu0 0
        %1917 = vmatprep.subr.bf16.mxu0 0
        %1918 = vmatpush2.bf16.msra.mxu0 0
        %1919 = vmatprep.subr.bf16.mxu0 0
        %1920 = vmatpush2.bf16.msra.mxu0 0
        %1921 = vmatprep.mubr.bf16.mxu0 0
        %1922 = vmatmul.mubr.bf16.gmra.mxu0 %v1887
        %v1923 = vpop.f32.mrf.mxu0
        %v1924 = vadd.f32 %v1872, %v1923
        %v1925 = vpop.f32.mrf.mxu0
        %v1926 = vpop.f32.mrf.mxu0
        %v1927 = vadd.f32 %v1872, %v1926
        %v1928 = vpop.f32.mrf.mxu0
        %1929 = vdwg.mxu0
        %v1930 = vld [vmem:[%s847] sm:$0xf]
        %v1931 = vld [vmem:[%s847 + $0x4] sm:$0xf]
        %v1932 = vld [vmem:[%s847 + $0x8] sm:$0xf]
        %v1933 = vld [vmem:[%s847 + $0xc] sm:$0xf]
        %v1934 = vld [vmem:[%s1013] sm:$0x1]
        %v1935 = vpack.c.bf16 %v1862, %v1862
        %v1936 = vpack.c.bf16 %v1927, %v1924
        %v1938 = vsel %vm1154, %v1935, 0
        %v1941 = vsel %vm1154, %v1936, 0
        %1943 = vmatprep.subr.bf16.mxu0 0
        %1944 = vmatpush1.bf16.xpose.msra.mxu0 0
        %1945 = vmatprep.subr.bf16.mxu0 0
        %1946 = vmatpush1.bf16.xpose.msra.mxu0 0
        %1947 = vmatprep.subr.bf16.mxu0 0
        %1948 = vmatpush1.bf16.xpose.msra.mxu0 0
        %1949 = vmatprep.subr.bf16.mxu0 0
        %1950 = vmatpush1.bf16.xpose.msra.mxu0 0
        %1951 = vmatprep.subr.bf16.mxu0 0
        %1952 = vmatpush1.bf16.xpose.msra.mxu0 0
        %1953 = vmatprep.subr.bf16.mxu0 0
        %1954 = vmatpush1.bf16.xpose.msra.mxu0 0
        %1955 = vmatprep.subr.bf16.mxu0 0
        %1956 = vmatpush1.bf16.xpose.msra.mxu0 0
        %1957 = vmatprep.subr.bf16.mxu0 0
        %1958 = vmatpush1.bf16.xpose.msra.mxu0 %v1941
        %1959 = vmatprep.subr.bf16.mxu0 0
        %1960 = vmatpush2.bf16.xpose.msra.mxu0 0
        %1961 = vmatprep.subr.bf16.mxu0 0
        %1962 = vmatpush2.bf16.xpose.msra.mxu0 0
        %1963 = vmatprep.subr.bf16.mxu0 0
        %1964 = vmatpush2.bf16.xpose.msra.mxu0 0
        %1965 = vmatprep.subr.bf16.mxu0 0
        %1966 = vmatpush2.bf16.xpose.msra.mxu0 0
        %1967 = vmatprep.subr.bf16.mxu0 0
        %1968 = vmatpush2.bf16.xpose.msra.mxu0 0
        %1969 = vmatprep.subr.bf16.mxu0 0
        %1970 = vmatpush2.bf16.xpose.msra.mxu0 0
        %1971 = vmatprep.subr.bf16.mxu0 0
        %1972 = vmatpush2.bf16.xpose.msra.mxu0 0
        %1973 = vmatprep.subr.bf16.mxu0 0
        %1974 = vmatpush2.bf16.xpose.msra.mxu0 0
        %1975 = vmatprep.mubr.bf16.mxu0 0
        %1976 = vmatmul.mubr.bf16.gmra.mxu0 %v1938
        %v1977 = vpop.f32.mrf.mxu0
        %v1978 = vadd.f32 0.0, %v1977
        %v1979 = vpop.f32.mrf.mxu0
        %v1980 = vpop.f32.mrf.mxu0
        %v1981 = vpop.f32.mrf.mxu0
        %1982 = vdwg.mxu0
        %v1983 = vsel %vm1040, 1, 0
        %v1984 = vlaneseq
        %v1985 = vshrl.u32 %v1984, 7
        %v1986 = vsub.s32 0, %v1985
        %v1987 = vrot.slane %v1983, %v1986
        %vm1988 = vcmp.eq.s32.totalorder %v1987, 1
        %v1989 = vsel %vm1988, -10000.0, %v1978
        %vm1990 = vcmask 130048
        %v1991 = vsel %vm1990, %v1989, -inf
        %1992 = vmax.xlane.f32.xlu0 %v1991
        %v1993 = vpop.xlane.xlu0 %1992
        %v1994 = vsub.f32 %v1989, %v1993
        %v1995 = vmul.f32 %v1994, 1.442695
        %v1996 = vpow.pop %v1995
        %v1997 = vsel %vm1990, %v1996, 0.0
        %1998 = vadd.xlane.f32.xlu0 %v1997
        %v1999 = vpop.xlane.xlu0 %1998
        %v2000 = vrcp.pop %v1999
        %v2001 = vmul.f32 %v1996, %v2000
        %2003 = vrot.lane.b32.xlu0 %v1936, 96
        %v2004 = vpop.permute.xlu0 %2003
        %v2006 = vsel %vm1154, %v2004, 0
        %v2009 = vsel %vm1218, %v1930, 0
        %2011 = vmatprep.subr.bf16.mxu0 0
        %2012 = vmatpush1.bf16.msra.mxu0 0
        %2013 = vmatprep.subr.bf16.mxu0 0
        %2014 = vmatpush1.bf16.msra.mxu0 0
        %2015 = vmatprep.subr.bf16.mxu0 0
        %2016 = vmatpush1.bf16.msra.mxu0 0
        %2017 = vmatprep.subr.bf16.mxu0 0
        %2018 = vmatpush1.bf16.msra.mxu0 0
        %2019 = vmatprep.subr.bf16.mxu0 0
        %2020 = vmatpush1.bf16.msra.mxu0 0
        %2021 = vmatprep.subr.bf16.mxu0 0
        %2022 = vmatpush1.bf16.msra.mxu0 0
        %2023 = vmatprep.subr.bf16.mxu0 0
        %2024 = vmatpush1.bf16.msra.mxu0 0
        %2025 = vmatprep.subr.bf16.mxu0 0
        %2026 = vmatpush1.bf16.msra.mxu0 %v2009
        %2027 = vmatprep.subr.bf16.mxu0 0
        %2028 = vmatpush2.bf16.msra.mxu0 0
        %2029 = vmatprep.subr.bf16.mxu0 0
        %2030 = vmatpush2.bf16.msra.mxu0 0
        %2031 = vmatprep.subr.bf16.mxu0 0
        %2032 = vmatpush2.bf16.msra.mxu0 0
        %2033 = vmatprep.subr.bf16.mxu0 0
        %2034 = vmatpush2.bf16.msra.mxu0 0
        %2035 = vmatprep.subr.bf16.mxu0 0
        %2036 = vmatpush2.bf16.msra.mxu0 0
        %2037 = vmatprep.subr.bf16.mxu0 0
        %2038 = vmatpush2.bf16.msra.mxu0 0
        %2039 = vmatprep.subr.bf16.mxu0 0
        %2040 = vmatpush2.bf16.msra.mxu0 0
        %2041 = vmatprep.subr.bf16.mxu0 0
        %2042 = vmatpush2.bf16.msra.mxu0 0
        %2043 = vmatprep.mubr.bf16.mxu0 0
        %2044 = vmatmul.mubr.bf16.gmra.mxu0 %v2006
        %v2045 = vpop.f32.mrf.mxu0
        %v2046 = vadd.f32 0.0, %v2045
        %v2047 = vpop.f32.mrf.mxu0
        %v2048 = vpop.f32.mrf.mxu0
        %v2049 = vadd.f32 0.0, %v2048
        %v2050 = vpop.f32.mrf.mxu0
        %2051 = vdwg.mxu0
        %v2052 = vpack.c.bf16 %v2001, %v2001
        %v2053 = vpack.c.bf16 %v2049, %v2046
        %2055 = vrot.lane.b32.xlu0 %v1935, 120
        %v2056 = vpop.permute.xlu0 %2055
        %2057 = vrot.lane.b32.xlu0 %v1936, 120
        %v2058 = vpop.permute.xlu0 %2057
        %v2060 = vsel %vm1154, %v2056, 0
        %v2063 = vsel %vm1154, %v2058, 0
        %2065 = vmatprep.subr.bf16.mxu0 0
        %2066 = vmatpush1.bf16.xpose.msra.mxu0 0
        %2067 = vmatprep.subr.bf16.mxu0 0
        %2068 = vmatpush1.bf16.xpose.msra.mxu0 0
        %2069 = vmatprep.subr.bf16.mxu0 0
        %2070 = vmatpush1.bf16.xpose.msra.mxu0 0
        %2071 = vmatprep.subr.bf16.mxu0 0
        %2072 = vmatpush1.bf16.xpose.msra.mxu0 0
        %2073 = vmatprep.subr.bf16.mxu0 0
        %2074 = vmatpush1.bf16.xpose.msra.mxu0 0
        %2075 = vmatprep.subr.bf16.mxu0 0
        %2076 = vmatpush1.bf16.xpose.msra.mxu0 0
        %2077 = vmatprep.subr.bf16.mxu0 0
        %2078 = vmatpush1.bf16.xpose.msra.mxu0 0
        %2079 = vmatprep.subr.bf16.mxu0 0
        %2080 = vmatpush1.bf16.xpose.msra.mxu0 %v2063
        %2081 = vmatprep.subr.bf16.mxu0 0
        %2082 = vmatpush2.bf16.xpose.msra.mxu0 0
        %2083 = vmatprep.subr.bf16.mxu0 0
        %2084 = vmatpush2.bf16.xpose.msra.mxu0 0
        %2085 = vmatprep.subr.bf16.mxu0 0
        %2086 = vmatpush2.bf16.xpose.msra.mxu0 0
        %2087 = vmatprep.subr.bf16.mxu0 0
        %2088 = vmatpush2.bf16.xpose.msra.mxu0 0
        %2089 = vmatprep.subr.bf16.mxu0 0
        %2090 = vmatpush2.bf16.xpose.msra.mxu0 0
        %2091 = vmatprep.subr.bf16.mxu0 0
        %2092 = vmatpush2.bf16.xpose.msra.mxu0 0
        %2093 = vmatprep.subr.bf16.mxu0 0
        %2094 = vmatpush2.bf16.xpose.msra.mxu0 0
        %2095 = vmatprep.subr.bf16.mxu0 0
        %2096 = vmatpush2.bf16.xpose.msra.mxu0 0
        %2097 = vmatprep.mubr.bf16.mxu0 0
        %2098 = vmatmul.mubr.bf16.gmra.mxu0 %v2060
        %v2099 = vpop.f32.mrf.mxu0
        %v2100 = vadd.f32 0.0, %v2099
        %v2101 = vpop.f32.mrf.mxu0
        %v2102 = vpop.f32.mrf.mxu0
        %v2103 = vpop.f32.mrf.mxu0
        %2104 = vdwg.mxu0
        %v2105 = vsel %vm1988, -10000.0, %v2100
        %v2106 = vsel %vm1990, %v2105, -inf
        %2107 = vmax.xlane.f32.xlu0 %v2106
        %v2108 = vpop.xlane.xlu0 %2107
        %v2109 = vsub.f32 %v2105, %v2108
        %v2110 = vmul.f32 %v2109, 1.442695
        %v2111 = vpow.pop %v2110
        %v2112 = vsel %vm1990, %v2111, 0.0
        %2113 = vadd.xlane.f32.xlu0 %v2112
        %v2114 = vpop.xlane.xlu0 %2113
        %v2115 = vrcp.pop %v2114
        %v2116 = vmul.f32 %v2111, %v2115
        %2117 = vrot.lane.b32.xlu0 %v1936, 88
        %v2118 = vpop.permute.xlu0 %2117
        %v2120 = vsel %vm1154, %v2118, 0
        %v2123 = vsel %vm1218, %v1931, 0
        %2125 = vmatprep.subr.bf16.mxu0 0
        %2126 = vmatpush1.bf16.msra.mxu0 0
        %2127 = vmatprep.subr.bf16.mxu0 0
        %2128 = vmatpush1.bf16.msra.mxu0 0
        %2129 = vmatprep.subr.bf16.mxu0 0
        %2130 = vmatpush1.bf16.msra.mxu0 0
        %2131 = vmatprep.subr.bf16.mxu0 0
        %2132 = vmatpush1.bf16.msra.mxu0 0
        %2133 = vmatprep.subr.bf16.mxu0 0
        %2134 = vmatpush1.bf16.msra.mxu0 0
        %2135 = vmatprep.subr.bf16.mxu0 0
        %2136 = vmatpush1.bf16.msra.mxu0 0
        %2137 = vmatprep.subr.bf16.mxu0 0
        %2138 = vmatpush1.bf16.msra.mxu0 0
        %2139 = vmatprep.subr.bf16.mxu0 0
        %2140 = vmatpush1.bf16.msra.mxu0 %v2123
        %2141 = vmatprep.subr.bf16.mxu0 0
        %2142 = vmatpush2.bf16.msra.mxu0 0
        %2143 = vmatprep.subr.bf16.mxu0 0
        %2144 = vmatpush2.bf16.msra.mxu0 0
        %2145 = vmatprep.subr.bf16.mxu0 0
        %2146 = vmatpush2.bf16.msra.mxu0 0
        %2147 = vmatprep.subr.bf16.mxu0 0
        %2148 = vmatpush2.bf16.msra.mxu0 0
        %2149 = vmatprep.subr.bf16.mxu0 0
        %2150 = vmatpush2.bf16.msra.mxu0 0
        %2151 = vmatprep.subr.bf16.mxu0 0
        %2152 = vmatpush2.bf16.msra.mxu0 0
        %2153 = vmatprep.subr.bf16.mxu0 0
        %2154 = vmatpush2.bf16.msra.mxu0 0
        %2155 = vmatprep.subr.bf16.mxu0 0
        %2156 = vmatpush2.bf16.msra.mxu0 0
        %2157 = vmatprep.mubr.bf16.mxu0 0
        %2158 = vmatmul.mubr.bf16.gmra.mxu0 %v2120
        %v2159 = vpop.f32.mrf.mxu0
        %v2160 = vadd.f32 0.0, %v2159
        %v2161 = vpop.f32.mrf.mxu0
        %v2162 = vpop.f32.mrf.mxu0
        %v2163 = vadd.f32 0.0, %v2162
        %v2164 = vpop.f32.mrf.mxu0
        %2165 = vdwg.mxu0
        %v2166 = vpack.c.bf16 %v2116, %v2116
        %v2167 = vpack.c.bf16 %v2163, %v2160
        %v2169 = vsel %vm1990, %v2166, 0
        %2171 = vmatprep.subr.bf16.mxu0 0
        %2172 = vmatpush1.bf16.msra.mxu0 0
        %2173 = vmatprep.subr.bf16.mxu0 0
        %2174 = vmatpush1.bf16.msra.mxu0 0
        %2175 = vmatprep.subr.bf16.mxu0 0
        %2176 = vmatpush1.bf16.msra.mxu0 0
        %2177 = vmatprep.subr.bf16.mxu0 0
        %2178 = vmatpush1.bf16.msra.mxu0 0
        %2179 = vmatprep.subr.bf16.mxu0 0
        %2180 = vmatpush1.bf16.msra.mxu0 0
        %2181 = vmatprep.subr.bf16.mxu0 0
        %2182 = vmatpush1.bf16.msra.mxu0 0
        %2183 = vmatprep.subr.bf16.mxu0 0
        %2184 = vmatpush1.bf16.msra.mxu0 0
        %2185 = vmatprep.subr.bf16.mxu0 0
        %2186 = vmatpush1.bf16.msra.mxu0 %v2167
        %2187 = vmatprep.subr.bf16.mxu0 0
        %2188 = vmatpush2.bf16.msra.mxu0 0
        %2189 = vmatprep.subr.bf16.mxu0 0
        %2190 = vmatpush2.bf16.msra.mxu0 0
        %2191 = vmatprep.subr.bf16.mxu0 0
        %2192 = vmatpush2.bf16.msra.mxu0 0
        %2193 = vmatprep.subr.bf16.mxu0 0
        %2194 = vmatpush2.bf16.msra.mxu0 0
        %2195 = vmatprep.subr.bf16.mxu0 0
        %2196 = vmatpush2.bf16.msra.mxu0 0
        %2197 = vmatprep.subr.bf16.mxu0 0
        %2198 = vmatpush2.bf16.msra.mxu0 0
        %2199 = vmatprep.subr.bf16.mxu0 0
        %2200 = vmatpush2.bf16.msra.mxu0 0
        %2201 = vmatprep.subr.bf16.mxu0 0
        %2202 = vmatpush2.bf16.msra.mxu0 0
        %2203 = vmatprep.mubr.bf16.mxu0 0
        %2204 = vmatmul.mubr.bf16.gmra.mxu0 %v2169
        %v2205 = vpop.f32.mrf.mxu0
        %v2206 = vadd.f32 0.0, %v2205
        %v2207 = vpop.f32.mrf.mxu0
        %v2208 = vpop.f32.mrf.mxu0
        %v2209 = vpop.f32.mrf.mxu0
        %2210 = vdwg.mxu0
        %v2212 = vsel %vm1990, %v2052, 0
        %2214 = vmatprep.subr.bf16.mxu0 0
        %2215 = vmatpush1.bf16.msra.mxu0 0
        %2216 = vmatprep.subr.bf16.mxu0 0
        %2217 = vmatpush1.bf16.msra.mxu0 0
        %2218 = vmatprep.subr.bf16.mxu0 0
        %2219 = vmatpush1.bf16.msra.mxu0 0
        %2220 = vmatprep.subr.bf16.mxu0 0
        %2221 = vmatpush1.bf16.msra.mxu0 0
        %2222 = vmatprep.subr.bf16.mxu0 0
        %2223 = vmatpush1.bf16.msra.mxu0 0
        %2224 = vmatprep.subr.bf16.mxu0 0
        %2225 = vmatpush1.bf16.msra.mxu0 0
        %2226 = vmatprep.subr.bf16.mxu0 0
        %2227 = vmatpush1.bf16.msra.mxu0 0
        %2228 = vmatprep.subr.bf16.mxu0 0
        %2229 = vmatpush1.bf16.msra.mxu0 %v2053
        %2230 = vmatprep.subr.bf16.mxu0 0
        %2231 = vmatpush2.bf16.msra.mxu0 0
        %2232 = vmatprep.subr.bf16.mxu0 0
        %2233 = vmatpush2.bf16.msra.mxu0 0
        %2234 = vmatprep.subr.bf16.mxu0 0
        %2235 = vmatpush2.bf16.msra.mxu0 0
        %2236 = vmatprep.subr.bf16.mxu0 0
        %2237 = vmatpush2.bf16.msra.mxu0 0
        %2238 = vmatprep.subr.bf16.mxu0 0
        %2239 = vmatpush2.bf16.msra.mxu0 0
        %2240 = vmatprep.subr.bf16.mxu0 0
        %2241 = vmatpush2.bf16.msra.mxu0 0
        %2242 = vmatprep.subr.bf16.mxu0 0
        %2243 = vmatpush2.bf16.msra.mxu0 0
        %2244 = vmatprep.subr.bf16.mxu0 0
        %2245 = vmatpush2.bf16.msra.mxu0 0
        %2246 = vmatprep.mubr.bf16.mxu0 0
        %2247 = vmatmul.mubr.bf16.gmra.mxu0 %v2212
        %v2248 = vpop.f32.mrf.mxu0
        %v2249 = vadd.f32 %v2206, %v2248
        %v2250 = vpop.f32.mrf.mxu0
        %v2251 = vpop.f32.mrf.mxu0
        %v2252 = vpop.f32.mrf.mxu0
        %2253 = vdwg.mxu0
        %2254 = vrot.lane.b32.xlu0 %v1935, 112
        %v2255 = vpop.permute.xlu0 %2254
        %2256 = vrot.lane.b32.xlu0 %v1936, 112
        %v2257 = vpop.permute.xlu0 %2256
        %v2259 = vsel %vm1154, %v2255, 0
        %v2262 = vsel %vm1154, %v2257, 0
        %2264 = vmatprep.subr.bf16.mxu0 0
        %2265 = vmatpush1.bf16.xpose.msra.mxu0 0
        %2266 = vmatprep.subr.bf16.mxu0 0
        %2267 = vmatpush1.bf16.xpose.msra.mxu0 0
        %2268 = vmatprep.subr.bf16.mxu0 0
        %2269 = vmatpush1.bf16.xpose.msra.mxu0 0
        %2270 = vmatprep.subr.bf16.mxu0 0
        %2271 = vmatpush1.bf16.xpose.msra.mxu0 0
        %2272 = vmatprep.subr.bf16.mxu0 0
        %2273 = vmatpush1.bf16.xpose.msra.mxu0 0
        %2274 = vmatprep.subr.bf16.mxu0 0
        %2275 = vmatpush1.bf16.xpose.msra.mxu0 0
        %2276 = vmatprep.subr.bf16.mxu0 0
        %2277 = vmatpush1.bf16.xpose.msra.mxu0 0
        %2278 = vmatprep.subr.bf16.mxu0 0
        %2279 = vmatpush1.bf16.xpose.msra.mxu0 %v2262
        %2280 = vmatprep.subr.bf16.mxu0 0
        %2281 = vmatpush2.bf16.xpose.msra.mxu0 0
        %2282 = vmatprep.subr.bf16.mxu0 0
        %2283 = vmatpush2.bf16.xpose.msra.mxu0 0
        %2284 = vmatprep.subr.bf16.mxu0 0
        %2285 = vmatpush2.bf16.xpose.msra.mxu0 0
        %2286 = vmatprep.subr.bf16.mxu0 0
        %2287 = vmatpush2.bf16.xpose.msra.mxu0 0
        %2288 = vmatprep.subr.bf16.mxu0 0
        %2289 = vmatpush2.bf16.xpose.msra.mxu0 0
        %2290 = vmatprep.subr.bf16.mxu0 0
        %2291 = vmatpush2.bf16.xpose.msra.mxu0 0
        %2292 = vmatprep.subr.bf16.mxu0 0
        %2293 = vmatpush2.bf16.xpose.msra.mxu0 0
        %2294 = vmatprep.subr.bf16.mxu0 0
        %2295 = vmatpush2.bf16.xpose.msra.mxu0 0
        %2296 = vmatprep.mubr.bf16.mxu0 0
        %2297 = vmatmul.mubr.bf16.gmra.mxu0 %v2259
        %v2298 = vpop.f32.mrf.mxu0
        %v2299 = vadd.f32 0.0, %v2298
        %v2300 = vpop.f32.mrf.mxu0
        %v2301 = vpop.f32.mrf.mxu0
        %v2302 = vpop.f32.mrf.mxu0
        %2303 = vdwg.mxu0
        %v2304 = vsel %vm1988, -10000.0, %v2299
        %v2305 = vsel %vm1990, %v2304, -inf
        %2306 = vmax.xlane.f32.xlu0 %v2305
        %v2307 = vpop.xlane.xlu0 %2306
        %v2308 = vsub.f32 %v2304, %v2307
        %v2309 = vmul.f32 %v2308, 1.442695
        %v2310 = vpow.pop %v2309
        %v2311 = vsel %vm1990, %v2310, 0.0
        %2312 = vadd.xlane.f32.xlu0 %v2311
        %v2313 = vpop.xlane.xlu0 %2312
        %v2314 = vrcp.pop %v2313
        %v2315 = vmul.f32 %v2310, %v2314
        %2316 = vrot.lane.b32.xlu0 %v1936, 80
        %v2317 = vpop.permute.xlu0 %2316
        %v2319 = vsel %vm1154, %v2317, 0
        %v2322 = vsel %vm1218, %v1932, 0
        %2324 = vmatprep.subr.bf16.mxu0 0
        %2325 = vmatpush1.bf16.msra.mxu0 0
        %2326 = vmatprep.subr.bf16.mxu0 0
        %2327 = vmatpush1.bf16.msra.mxu0 0
        %2328 = vmatprep.subr.bf16.mxu0 0
        %2329 = vmatpush1.bf16.msra.mxu0 0
        %2330 = vmatprep.subr.bf16.mxu0 0
        %2331 = vmatpush1.bf16.msra.mxu0 0
        %2332 = vmatprep.subr.bf16.mxu0 0
        %2333 = vmatpush1.bf16.msra.mxu0 0
        %2334 = vmatprep.subr.bf16.mxu0 0
        %2335 = vmatpush1.bf16.msra.mxu0 0
        %2336 = vmatprep.subr.bf16.mxu0 0
        %2337 = vmatpush1.bf16.msra.mxu0 0
        %2338 = vmatprep.subr.bf16.mxu0 0
        %2339 = vmatpush1.bf16.msra.mxu0 %v2322
        %2340 = vmatprep.subr.bf16.mxu0 0
        %2341 = vmatpush2.bf16.msra.mxu0 0
        %2342 = vmatprep.subr.bf16.mxu0 0
        %2343 = vmatpush2.bf16.msra.mxu0 0
        %2344 = vmatprep.subr.bf16.mxu0 0
        %2345 = vmatpush2.bf16.msra.mxu0 0
        %2346 = vmatprep.subr.bf16.mxu0 0
        %2347 = vmatpush2.bf16.msra.mxu0 0
        %2348 = vmatprep.subr.bf16.mxu0 0
        %2349 = vmatpush2.bf16.msra.mxu0 0
        %2350 = vmatprep.subr.bf16.mxu0 0
        %2351 = vmatpush2.bf16.msra.mxu0 0
        %2352 = vmatprep.subr.bf16.mxu0 0
        %2353 = vmatpush2.bf16.msra.mxu0 0
        %2354 = vmatprep.subr.bf16.mxu0 0
        %2355 = vmatpush2.bf16.msra.mxu0 0
        %2356 = vmatprep.mubr.bf16.mxu0 0
        %2357 = vmatmul.mubr.bf16.gmra.mxu0 %v2319
        %v2358 = vpop.f32.mrf.mxu0
        %v2359 = vadd.f32 0.0, %v2358
        %v2360 = vpop.f32.mrf.mxu0
        %v2361 = vpop.f32.mrf.mxu0
        %v2362 = vadd.f32 0.0, %v2361
        %v2363 = vpop.f32.mrf.mxu0
        %2364 = vdwg.mxu0
        %v2365 = vpack.c.bf16 %v2315, %v2315
        %v2366 = vpack.c.bf16 %v2362, %v2359
        %v2368 = vsel %vm1990, %v2365, 0
        %2370 = vmatprep.subr.bf16.mxu0 0
        %2371 = vmatpush1.bf16.msra.mxu0 0
        %2372 = vmatprep.subr.bf16.mxu0 0
        %2373 = vmatpush1.bf16.msra.mxu0 0
        %2374 = vmatprep.subr.bf16.mxu0 0
        %2375 = vmatpush1.bf16.msra.mxu0 0
        %2376 = vmatprep.subr.bf16.mxu0 0
        %2377 = vmatpush1.bf16.msra.mxu0 0
        %2378 = vmatprep.subr.bf16.mxu0 0
        %2379 = vmatpush1.bf16.msra.mxu0 0
        %2380 = vmatprep.subr.bf16.mxu0 0
        %2381 = vmatpush1.bf16.msra.mxu0 0
        %2382 = vmatprep.subr.bf16.mxu0 0
        %2383 = vmatpush1.bf16.msra.mxu0 0
        %2384 = vmatprep.subr.bf16.mxu0 0
        %2385 = vmatpush1.bf16.msra.mxu0 %v2366
        %2386 = vmatprep.subr.bf16.mxu0 0
        %2387 = vmatpush2.bf16.msra.mxu0 0
        %2388 = vmatprep.subr.bf16.mxu0 0
        %2389 = vmatpush2.bf16.msra.mxu0 0
        %2390 = vmatprep.subr.bf16.mxu0 0
        %2391 = vmatpush2.bf16.msra.mxu0 0
        %2392 = vmatprep.subr.bf16.mxu0 0
        %2393 = vmatpush2.bf16.msra.mxu0 0
        %2394 = vmatprep.subr.bf16.mxu0 0
        %2395 = vmatpush2.bf16.msra.mxu0 0
        %2396 = vmatprep.subr.bf16.mxu0 0
        %2397 = vmatpush2.bf16.msra.mxu0 0
        %2398 = vmatprep.subr.bf16.mxu0 0
        %2399 = vmatpush2.bf16.msra.mxu0 0
        %2400 = vmatprep.subr.bf16.mxu0 0
        %2401 = vmatpush2.bf16.msra.mxu0 0
        %2402 = vmatprep.mubr.bf16.mxu0 0
        %2403 = vmatmul.mubr.bf16.gmra.mxu0 %v2368
        %v2404 = vpop.f32.mrf.mxu0
        %v2405 = vadd.f32 0.0, %v2404
        %v2406 = vpop.f32.mrf.mxu0
        %v2407 = vpop.f32.mrf.mxu0
        %v2408 = vpop.f32.mrf.mxu0
        %2409 = vdwg.mxu0
        %v2410 = vadd.f32 %v2249, %v2405
        %2411 = vrot.lane.b32.xlu0 %v1935, 104
        %v2412 = vpop.permute.xlu0 %2411
        %2413 = vrot.lane.b32.xlu0 %v1936, 104
        %v2414 = vpop.permute.xlu0 %2413
        %v2416 = vsel %vm1154, %v2412, 0
        %v2419 = vsel %vm1154, %v2414, 0
        %2421 = vmatprep.subr.bf16.mxu0 0
        %2422 = vmatpush1.bf16.xpose.msra.mxu0 0
        %2423 = vmatprep.subr.bf16.mxu0 0
        %2424 = vmatpush1.bf16.xpose.msra.mxu0 0
        %2425 = vmatprep.subr.bf16.mxu0 0
        %2426 = vmatpush1.bf16.xpose.msra.mxu0 0
        %2427 = vmatprep.subr.bf16.mxu0 0
        %2428 = vmatpush1.bf16.xpose.msra.mxu0 0
        %2429 = vmatprep.subr.bf16.mxu0 0
        %2430 = vmatpush1.bf16.xpose.msra.mxu0 0
        %2431 = vmatprep.subr.bf16.mxu0 0
        %2432 = vmatpush1.bf16.xpose.msra.mxu0 0
        %2433 = vmatprep.subr.bf16.mxu0 0
        %2434 = vmatpush1.bf16.xpose.msra.mxu0 0
        %2435 = vmatprep.subr.bf16.mxu0 0
        %2436 = vmatpush1.bf16.xpose.msra.mxu0 %v2419
        %2437 = vmatprep.subr.bf16.mxu0 0
        %2438 = vmatpush2.bf16.xpose.msra.mxu0 0
        %2439 = vmatprep.subr.bf16.mxu0 0
        %2440 = vmatpush2.bf16.xpose.msra.mxu0 0
        %2441 = vmatprep.subr.bf16.mxu0 0
        %2442 = vmatpush2.bf16.xpose.msra.mxu0 0
        %2443 = vmatprep.subr.bf16.mxu0 0
        %2444 = vmatpush2.bf16.xpose.msra.mxu0 0
        %2445 = vmatprep.subr.bf16.mxu0 0
        %2446 = vmatpush2.bf16.xpose.msra.mxu0 0
        %2447 = vmatprep.subr.bf16.mxu0 0
        %2448 = vmatpush2.bf16.xpose.msra.mxu0 0
        %2449 = vmatprep.subr.bf16.mxu0 0
        %2450 = vmatpush2.bf16.xpose.msra.mxu0 0
        %2451 = vmatprep.subr.bf16.mxu0 0
        %2452 = vmatpush2.bf16.xpose.msra.mxu0 0
        %2453 = vmatprep.mubr.bf16.mxu0 0
        %2454 = vmatmul.mubr.bf16.gmra.mxu0 %v2416
        %v2455 = vpop.f32.mrf.mxu0
        %v2456 = vadd.f32 0.0, %v2455
        %v2457 = vpop.f32.mrf.mxu0
        %v2458 = vpop.f32.mrf.mxu0
        %v2459 = vpop.f32.mrf.mxu0
        %2460 = vdwg.mxu0
        %v2461 = vsel %vm1988, -10000.0, %v2456
        %v2462 = vsel %vm1990, %v2461, -inf
        %2463 = vmax.xlane.f32.xlu0 %v2462
        %v2464 = vpop.xlane.xlu0 %2463
        %v2465 = vsub.f32 %v2461, %v2464
        %v2466 = vmul.f32 %v2465, 1.442695
        %v2467 = vpow.pop %v2466
        %v2468 = vsel %vm1990, %v2467, 0.0
        %2469 = vadd.xlane.f32.xlu0 %v2468
        %v2470 = vpop.xlane.xlu0 %2469
        %v2471 = vrcp.pop %v2470
        %v2472 = vmul.f32 %v2467, %v2471
        %2473 = vrot.lane.b32.xlu0 %v1936, 72
        %v2474 = vpop.permute.xlu0 %2473
        %v2476 = vsel %vm1154, %v2474, 0
        %v2479 = vsel %vm1218, %v1933, 0
        %2481 = vmatprep.subr.bf16.mxu0 0
        %2482 = vmatpush1.bf16.msra.mxu0 0
        %2483 = vmatprep.subr.bf16.mxu0 0
        %2484 = vmatpush1.bf16.msra.mxu0 0
        %2485 = vmatprep.subr.bf16.mxu0 0
        %2486 = vmatpush1.bf16.msra.mxu0 0
        %2487 = vmatprep.subr.bf16.mxu0 0
        %2488 = vmatpush1.bf16.msra.mxu0 0
        %2489 = vmatprep.subr.bf16.mxu0 0
        %2490 = vmatpush1.bf16.msra.mxu0 0
        %2491 = vmatprep.subr.bf16.mxu0 0
        %2492 = vmatpush1.bf16.msra.mxu0 0
        %2493 = vmatprep.subr.bf16.mxu0 0
        %2494 = vmatpush1.bf16.msra.mxu0 0
        %2495 = vmatprep.subr.bf16.mxu0 0
        %2496 = vmatpush1.bf16.msra.mxu0 %v2479
        %2497 = vmatprep.subr.bf16.mxu0 0
        %2498 = vmatpush2.bf16.msra.mxu0 0
        %2499 = vmatprep.subr.bf16.mxu0 0
        %2500 = vmatpush2.bf16.msra.mxu0 0
        %2501 = vmatprep.subr.bf16.mxu0 0
        %2502 = vmatpush2.bf16.msra.mxu0 0
        %2503 = vmatprep.subr.bf16.mxu0 0
        %2504 = vmatpush2.bf16.msra.mxu0 0
        %2505 = vmatprep.subr.bf16.mxu0 0
        %2506 = vmatpush2.bf16.msra.mxu0 0
        %2507 = vmatprep.subr.bf16.mxu0 0
        %2508 = vmatpush2.bf16.msra.mxu0 0
        %2509 = vmatprep.subr.bf16.mxu0 0
        %2510 = vmatpush2.bf16.msra.mxu0 0
        %2511 = vmatprep.subr.bf16.mxu0 0
        %2512 = vmatpush2.bf16.msra.mxu0 0
        %2513 = vmatprep.mubr.bf16.mxu0 0
        %2514 = vmatmul.mubr.bf16.gmra.mxu0 %v2476
        %v2515 = vpop.f32.mrf.mxu0
        %v2516 = vadd.f32 0.0, %v2515
        %v2517 = vpop.f32.mrf.mxu0
        %v2518 = vpop.f32.mrf.mxu0
        %v2519 = vadd.f32 0.0, %v2518
        %v2520 = vpop.f32.mrf.mxu0
        %2521 = vdwg.mxu0
        %v2522 = vpack.c.bf16 %v2472, %v2472
        %v2523 = vpack.c.bf16 %v2519, %v2516
        %v2525 = vsel %vm1990, %v2522, 0
        %2527 = vmatprep.subr.bf16.mxu0 0
        %2528 = vmatpush1.bf16.msra.mxu0 0
        %2529 = vmatprep.subr.bf16.mxu0 0
        %2530 = vmatpush1.bf16.msra.mxu0 0
        %2531 = vmatprep.subr.bf16.mxu0 0
        %2532 = vmatpush1.bf16.msra.mxu0 0
        %2533 = vmatprep.subr.bf16.mxu0 0
        %2534 = vmatpush1.bf16.msra.mxu0 0
        %2535 = vmatprep.subr.bf16.mxu0 0
        %2536 = vmatpush1.bf16.msra.mxu0 0
        %2537 = vmatprep.subr.bf16.mxu0 0
        %2538 = vmatpush1.bf16.msra.mxu0 0
        %2539 = vmatprep.subr.bf16.mxu0 0
        %2540 = vmatpush1.bf16.msra.mxu0 0
        %2541 = vmatprep.subr.bf16.mxu0 0
        %2542 = vmatpush1.bf16.msra.mxu0 %v2523
        %2543 = vmatprep.subr.bf16.mxu0 0
        %2544 = vmatpush2.bf16.msra.mxu0 0
        %2545 = vmatprep.subr.bf16.mxu0 0
        %2546 = vmatpush2.bf16.msra.mxu0 0
        %2547 = vmatprep.subr.bf16.mxu0 0
        %2548 = vmatpush2.bf16.msra.mxu0 0
        %2549 = vmatprep.subr.bf16.mxu0 0
        %2550 = vmatpush2.bf16.msra.mxu0 0
        %2551 = vmatprep.subr.bf16.mxu0 0
        %2552 = vmatpush2.bf16.msra.mxu0 0
        %2553 = vmatprep.subr.bf16.mxu0 0
        %2554 = vmatpush2.bf16.msra.mxu0 0
        %2555 = vmatprep.subr.bf16.mxu0 0
        %2556 = vmatpush2.bf16.msra.mxu0 0
        %2557 = vmatprep.subr.bf16.mxu0 0
        %2558 = vmatpush2.bf16.msra.mxu0 0
        %2559 = vmatprep.mubr.bf16.mxu0 0
        %2560 = vmatmul.mubr.bf16.gmra.mxu0 %v2525
        %v2561 = vpop.f32.mrf.mxu0
        %v2562 = vadd.f32 0.0, %v2561
        %v2563 = vpop.f32.mrf.mxu0
        %v2564 = vpop.f32.mrf.mxu0
        %v2565 = vpop.f32.mrf.mxu0
        %2566 = vdwg.mxu0
        %v2567 = vadd.f32 %v2410, %v2562
        %v2569 = vlaneseq
        %v2570 = vshrl.u32 %v2569, 7
        %v2571 = vsub.s32 0, %v2570
        %v2572 = vrot.slane %v1934, %v2571
        %v2574 = vadd.f32 %v2567, %v2572
        %v2575 = vadd.f32 %v1794, %v2574
        %v2576 = vsel %vm1049, %v2575, 0.0
        %2577 = vadd.xlane.f32.xlu0 %v2576
        %v2578 = vpop.xlane.xlu0 %2577
        %v2579 = vmul.f32 %v2578, %v1053
        %v2580 = vsub.f32 %v2575, %v2579
        %v2581 = vmul.f32 %v2580, %v2580
        %v2582 = vsel %vm1049, %v2581, 0.0
        %2583 = vadd.xlane.f32.xlu0 %v2582
        %v2584 = vpop.xlane.xlu0 %2583
        %v2585 = vmul.f32 %v2584, %v1060
        %v2586 = vrsqrt.pop %v2585
        %v2587 = vmul.f32 %v2585, %v2586
        %vm2588 = vcmp.eq.f32.partialorder %v2585, inf
        %v2589 = vsel %vm2588, %v2585, %v2587
        %vm2590 = vcmp.eq.f32.partialorder %v2585, 0.0
        %v2591 = vand.u32 %v2585, 2147483648
        %v2592 = vsel %vm2590, %v2591, %v2589
        %v2593 = vstv %s1046
        %v2594 = vmul.f32 %v2593, %v2580
        %v2595 = vadd.f32 %v2592, 1e-06
        %v2596 = vrcp.pop %v2595
        %v2597 = vmul.f32 %v2594, %v2596
        %v2598 = vstv %s1048
        %v2599 = vadd.f32 %v2597, %v2598
        %v2600 = vpack.c.bf16 %v2599, %v2599
        %v2601 = vld [vmem:[%s856] sm:$0xf]
        %v2602 = vld [vmem:[%s856 + $0x4] sm:$0xf]
        %v2603 = vld [vmem:[%s856 + $0x8] sm:$0xf]
        %v2604 = vld [vmem:[%s856 + $0xc] sm:$0xf]
        %v2605 = vld [vmem:[%s1016] sm:$0x1]
        %v2607 = vlaneseq
        %v2608 = vshrl.u32 %v2607, 7
        %v2609 = vsub.s32 0, %v2608
        %v2610 = vrot.slane %v2605, %v2609
        %v2616 = vunpack.c.l.b16 %v2601
        %v2617 = vunpack.c.l.b16 %v2602
        %v2618 = vunpack.c.l.b16 %v2603
        %v2619 = vunpack.c.l.b16 %v2604
        %v2620 = vpack.c.b16 %v2617, %v2616
        %v2621 = vpack.c.b16 %v2619, %v2618
        %v2625 = vsel %vm1049, %v2600, 0
        %2627 = vmatprep.subr.bf16.mxu0 0
        %2628 = vmatpush1.bf16.msra.mxu0 0
        %2629 = vmatprep.subr.bf16.mxu0 0
        %2630 = vmatpush1.bf16.msra.mxu0 0
        %2631 = vmatprep.subr.bf16.mxu0 0
        %2632 = vmatpush1.bf16.msra.mxu0 0
        %2633 = vmatprep.subr.bf16.mxu0 0
        %2634 = vmatpush1.bf16.msra.mxu0 0
        %2635 = vmatprep.subr.bf16.mxu0 0
        %2636 = vmatpush1.bf16.msra.mxu0 0
        %2637 = vmatprep.subr.bf16.mxu0 0
        %2638 = vmatpush1.bf16.msra.mxu0 0
        %2639 = vmatprep.subr.bf16.mxu0 0
        %2640 = vmatpush1.bf16.msra.mxu0 %v2621
        %2641 = vmatprep.subr.bf16.mxu0 0
        %2642 = vmatpush1.bf16.msra.mxu0 %v2620
        %2643 = vmatprep.subr.bf16.mxu0 0
        %2644 = vmatpush2.bf16.msra.mxu0 0
        %2645 = vmatprep.subr.bf16.mxu0 0
        %2646 = vmatpush2.bf16.msra.mxu0 0
        %2647 = vmatprep.subr.bf16.mxu0 0
        %2648 = vmatpush2.bf16.msra.mxu0 0
        %2649 = vmatprep.subr.bf16.mxu0 0
        %2650 = vmatpush2.bf16.msra.mxu0 0
        %2651 = vmatprep.subr.bf16.mxu0 0
        %2652 = vmatpush2.bf16.msra.mxu0 0
        %2653 = vmatprep.subr.bf16.mxu0 0
        %2654 = vmatpush2.bf16.msra.mxu0 0
        %2655 = vmatprep.subr.bf16.mxu0 0
        %2656 = vmatpush2.bf16.msra.mxu0 0
        %2657 = vmatprep.subr.bf16.mxu0 0
        %2658 = vmatpush2.bf16.msra.mxu0 0
        %2659 = vmatprep.mubr.bf16.mxu0 0
        %2660 = vmatmul.mubr.bf16.gmra.mxu0 %v2625
        %v2661 = vpop.f32.mrf.mxu0
        %v2662 = vadd.f32 %v2610, %v2661
        %v2663 = vpop.f32.mrf.mxu0
        %v2664 = vpop.f32.mrf.mxu0
        %v2665 = vpop.f32.mrf.mxu0
        %2666 = vdwg.mxu0
        %v2667 = vmax.f32 %v2662, 0.0
        %v2668 = vpack.c.bf16 %v2667, %v2667
        %v2669 = vld [vmem:[%s1021] sm:$0xf]
        %v2670 = vld [vmem:[%s1021 + $0x4] sm:$0xf]
        %v2671 = vld [vmem:[%s1021 + $0x8] sm:$0xf]
        %v2672 = vld [vmem:[%s1021 + $0xc] sm:$0xf]
        %v2673 = vld [vmem:[%s1021 + $0x10] sm:$0xf]
        %v2674 = vld [vmem:[%s1021 + $0x14] sm:$0xf]
        %v2675 = vld [vmem:[%s1021 + $0x18] sm:$0xf]
        %v2676 = vld [vmem:[%s1021 + $0x1c] sm:$0xf]
        %v2677 = vld [vmem:[%s1024] sm:$0x1]
        %v2679 = vlaneseq
        %v2680 = vshrl.u32 %v2679, 7
        %v2681 = vsub.s32 0, %v2680
        %v2682 = vrot.slane %v2677, %v2681
        %v2692 = vunpack.c.l.b16 %v2669
        %v2693 = vunpack.c.l.b16 %v2670
        %v2694 = vunpack.c.l.b16 %v2671
        %v2695 = vunpack.c.l.b16 %v2672
        %v2696 = vunpack.c.l.b16 %v2673
        %v2697 = vunpack.c.l.b16 %v2674
        %v2698 = vunpack.c.l.b16 %v2675
        %v2699 = vunpack.c.l.b16 %v2676
        %v2700 = vpack.c.b16 %v2693, %v2692
        %v2701 = vpack.c.b16 %v2695, %v2694
        %v2702 = vpack.c.b16 %v2697, %v2696
        %v2703 = vpack.c.b16 %v2699, %v2698
        %vm2708 = vcmask 523264
        %v2710 = vsel %vm2708, %v2668, 0
        %2712 = vmatprep.subr.bf16.mxu0 0
        %2713 = vmatpush1.bf16.msra.mxu0 0
        %2714 = vmatprep.subr.bf16.mxu0 0
        %2715 = vmatpush1.bf16.msra.mxu0 0
        %2716 = vmatprep.subr.bf16.mxu0 0
        %2717 = vmatpush1.bf16.msra.mxu0 0
        %2718 = vmatprep.subr.bf16.mxu0 0
        %2719 = vmatpush1.bf16.msra.mxu0 0
        %2720 = vmatprep.subr.bf16.mxu0 0
        %2721 = vmatpush1.bf16.msra.mxu0 %v2703
        %2722 = vmatprep.subr.bf16.mxu0 0
        %2723 = vmatpush1.bf16.msra.mxu0 %v2702
        %2724 = vmatprep.subr.bf16.mxu0 0
        %2725 = vmatpush1.bf16.msra.mxu0 %v2701
        %2726 = vmatprep.subr.bf16.mxu0 0
        %2727 = vmatpush1.bf16.msra.mxu0 %v2700
        %2728 = vmatprep.subr.bf16.mxu0 0
        %2729 = vmatpush2.bf16.msra.mxu0 0
        %2730 = vmatprep.subr.bf16.mxu0 0
        %2731 = vmatpush2.bf16.msra.mxu0 0
        %2732 = vmatprep.subr.bf16.mxu0 0
        %2733 = vmatpush2.bf16.msra.mxu0 0
        %2734 = vmatprep.subr.bf16.mxu0 0
        %2735 = vmatpush2.bf16.msra.mxu0 0
        %2736 = vmatprep.subr.bf16.mxu0 0
        %2737 = vmatpush2.bf16.msra.mxu0 0
        %2738 = vmatprep.subr.bf16.mxu0 0
        %2739 = vmatpush2.bf16.msra.mxu0 0
        %2740 = vmatprep.subr.bf16.mxu0 0
        %2741 = vmatpush2.bf16.msra.mxu0 0
        %2742 = vmatprep.subr.bf16.mxu0 0
        %2743 = vmatpush2.bf16.msra.mxu0 0
        %2744 = vmatprep.mubr.bf16.mxu0 0
        %2745 = vmatmul.mubr.bf16.gmra.mxu0 %v2710
        %v2746 = vpop.f32.mrf.mxu0
        %v2747 = vadd.f32 %v2682, %v2746
        %v2748 = vpop.f32.mrf.mxu0
        %v2749 = vpop.f32.mrf.mxu0
        %v2750 = vpop.f32.mrf.mxu0
        %2751 = vdwg.mxu0
        %v2752 = vadd.f32 %v2575, %v2747
        %2753 = vst.msk [vmem:[#allocation2] sm:$0xff] %vm1049, %v2752
        %p2754 = scmp.eq.s32.totalorder %s51, 1
        // Predicated region
        $region129: #{tpu_custom_call.1} parent=95 // pred_check
          %p2755 = pneg %p2754
        $region130: #{tpu_custom_call.1} parent=95 // pred_check_branch
          %2757 = sbr.rel (%p2755) target = $region132
        $region131: #{tpu_custom_call.1} parent=95 // pred_region
          %s2758 = sld [smem:[#allocation3 + $0xc]]
          %s2759 = sld [smem:[#allocation3 + $0xd]]
          %v2760 = vsel %vm1049, %v2752, 0.0
          %2761 = vadd.xlane.f32.xlu0 %v2760
          %v2762 = vpop.xlane.xlu0 %2761
          %v2763 = vmul.f32 %v2762, %v1053
          %v2764 = vsub.f32 %v2752, %v2763
          %v2765 = vmul.f32 %v2764, %v2764
          %v2766 = vsel %vm1049, %v2765, 0.0
          %2767 = vadd.xlane.f32.xlu0 %v2766
          %v2768 = vpop.xlane.xlu0 %2767
          %v2769 = vmul.f32 %v2768, %v1060
          %v2770 = vrsqrt.pop %v2769
          %v2771 = vmul.f32 %v2769, %v2770
          %vm2772 = vcmp.eq.f32.partialorder %v2769, inf
          %v2773 = vsel %vm2772, %v2769, %v2771
          %vm2774 = vcmp.eq.f32.partialorder %v2769, 0.0
          %v2775 = vand.u32 %v2769, 2147483648
          %v2776 = vsel %vm2774, %v2775, %v2773
          %v2777 = vstv %s2758
          %v2778 = vmul.f32 %v2777, %v2764
          %v2779 = vadd.f32 %v2776, 1e-06
          %v2780 = vrcp.pop %v2779
          %v2781 = vmul.f32 %v2778, %v2780
          %v2782 = vstv %s2759
          %v2783 = vadd.f32 %v2781, %v2782
          %2784 = vst.msk [vmem:[%s980] sm:$0xff] %vm1049, %v2783
        $region132: #{tpu_custom_call.1} parent=95 // pred_fallthru
          _
        %s2785 = sand.u32 %s555, 1
        %s2786 = scalar_lea.sflag [#allocation5], %s2785
        %s2787 = sand.u32 %s555, 1
        %s2788 = smul.addr %s2787, 8
        %s2789 = scalar_lea.vmem [#allocation16], %s2788
        // Predicated region
        $region133: #{tpu_custom_call.1} parent=95 // pred_check
          %p2790 = pneg %p565
        $region134: #{tpu_custom_call.1} parent=95 // pred_check_branch
          %2792 = sbr.rel (%p2790) target = $region136
        $region135: #{tpu_custom_call.1} parent=95 // pred_region
          %s2794 = ssub.s32 128, 128
          %2795 = vsyncadd %s2786, %s2794
          %s2796 = smul.addr %s50, 128
          %s2797 = scalar_lea.hbm %s19, %s2796
          %s2799 = sshll.u32 %s2789, 4
          %s2800 = int_to_ptr.vmem [resolvable:$true] %s2799
          %2802 = dma.vmem_to_hbm [thread:$0]  %s2800, 128, %s2797, %s2786
        $region136: #{tpu_custom_call.1} parent=95 // pred_fallthru
          _
      $region96: #{tpu_custom_call.1} parent=5 // pred_fallthru
        _
      %p2803 = scmp.le.s32.totalorder 2, %s41
      // Predicated region
      $region137: #{tpu_custom_call.1} parent=5 // pred_check
        %p2804 = pneg %p2803
      $region138: #{tpu_custom_call.1} parent=5 // pred_check_branch
        %2806 = sbr.rel (%p2804) target = $region140
      $region139: #{tpu_custom_call.1} parent=5 // pred_region
        %s2807 = ssub.s32 %s41, 2
        // Predicated region
        $region141: #{tpu_custom_call.1} parent=139 // pred_check
          %p2808 = pneg %p571
        $region142: #{tpu_custom_call.1} parent=139 // pred_check_branch
          %2810 = sbr.rel (%p2808) target = $region144
        $region143: #{tpu_custom_call.1} parent=139 // pred_region
          %s2811 = sand.u32 %s556, 1
          %s2812 = scalar_lea.sflag [#allocation5], %s2811
          %s2813 = sand.u32 %s556, 1
          %s2814 = smul.addr %s2813, 8
          %s2815 = scalar_lea.vmem [#allocation16], %s2814
          %2816 = dma.done %s2812, 128
        $region144: #{tpu_custom_call.1} parent=139 // pred_fallthru
          _
      $region140: #{tpu_custom_call.1} parent=5 // pred_fallthru
        _
    $region6: #{tpu_custom_call.1} parent=1 // loop_footer
      %s45 = sadd.s32 1, %s41
    $region7: #{tpu_custom_call.1} parent=1 // loop_footer_branch
      %40 = sbr.rel target = $region3
    $region8: #{tpu_custom_call.1} parent=1 // loop_exit
      _
    %2817 = vsyncpa [#allocation4], 1
    %s2818 = scalar_lea.sflag [#allocation4], 1
    %2819 = vsyncpa %s2818, 1
    %2820 = vsyncpa [#allocation9], 1
    %s2821 = scalar_lea.sflag [#allocation9], 1
    %2822 = vsyncpa %s2821, 1
    %2823 = vsyncpa [#allocation12], 1
    %s2824 = scalar_lea.sflag [#allocation12], 1
    %2825 = vsyncpa %s2824, 1
    %2826 = vsyncpa [#allocation15], 1
    %s2827 = scalar_lea.sflag [#allocation15], 1
    %2828 = vsyncpa %s2827, 1
    %2829 = vsyncpa [#allocation5], 1
    %s2830 = scalar_lea.sflag [#allocation5], 1
    %2831 = vsyncpa %s2830, 1
    %2832 = vsyncpa [#allocation6], 1
    %s2833 = scalar_lea.sflag [#allocation6], 1
    %2834 = vsyncpa %s2833, 1

</llo_original>
